<compile_context>
chip_gen: v6e
topology: v6e:2x2x1
jax: 0.10.0
libtpu: 0.0.40
codegen_flags: <defaults>
</compile_context>

<pallas_src>
import functools
import numpy as np
import jax
import jax.numpy as jnp
from jax import lax
from jax.experimental import pallas as pl
from jax.experimental.pallas import tpu as pltpu

MAX_DIST = 100000.0 * 2.0 ** 0.5  # default max_dist in compute_relative_distances

# MXU operand dtype. bf16 is MXU-native on every generation (v5e 197 TF/s,
# v6e/v7x ~918/996 TF/s); accumulation stays f32 via preferred_element_type.
# Set to jnp.float32 for tighter numerics (the self-test tolerance adapts).
MXU_DTYPE = jnp.bfloat16


def _damha_kernel(xq_ref, xk_ref, xv_ref,
                  wq_ref, wk_ref, wv_ref,
                  bq_ref, bk_ref, bv_ref,
                  pos_c_ref, pos_r_ref, emb_ref, o_ref, *, num_heads):
    # One grid step == a block of Bt batch elements; all heads are computed here.
    Bt, S, E = xq_ref.shape
    kdim = wq_ref.shape[1]
    vdim = wv_ref.shape[1]
    dk = kdim // num_heads
    dv = vdim // num_heads
    N = emb_ref.shape[1]
    inv_sqrt_dk = 1.0 / float(dk) ** 0.5

    # --- head-fused q/k/v projections over all Bt*S rows (nn.Linear: x @ W.T + b) ---
    xq = xq_ref[...].reshape(Bt * S, E).astype(MXU_DTYPE)
    xk = xk_ref[...].reshape(Bt * S, E).astype(MXU_DTYPE)
    xv = xv_ref[...].reshape(Bt * S, E).astype(MXU_DTYPE)
    wq_t = wq_ref[...].astype(MXU_DTYPE)      # [E, kdim] (pre-transposed in wrapper)
    wk_t = wk_ref[...].astype(MXU_DTYPE)      # [E, kdim]
    wv_t = wv_ref[...].astype(MXU_DTYPE)      # [E, vdim]

    # 1/sqrt(dk) folded into q once: both logits and the relative-key term are
    # inner products with q, so this is exactly equivalent to scaling the logits.
    q_all = (jnp.dot(xq, wq_t, preferred_element_type=jnp.float32)
             + bq_ref[...]) * inv_sqrt_dk                              # [Bt*S, kdim]
    k_all = jnp.dot(xk, wk_t, preferred_element_type=jnp.float32) + bk_ref[...]
    v_all = jnp.dot(xv, wv_t, preferred_element_type=jnp.float32) + bv_ref[...]

    emb_t = emb_ref[...].astype(MXU_DTYPE)                             # [dk, N]

    for b in range(Bt):                                                # static unroll
        # --- pairwise distances -> discrete bucket index (lane-dense [S,S]) ---
        # Computed once per batch element; shared by every head.
        pos_c = pos_c_ref[b]                                           # [S, 2]
        pos_r = pos_r_ref[b]                                           # [2, S]
        dx = pos_c[:, 0:1] - pos_r[0:1, :]                             # [S, S]
        dy = pos_c[:, 1:2] - pos_r[1:2, :]                             # [S, S]
        dist = jnp.sqrt(dx * dx + dy * dy) / MAX_DIST
        idx = jnp.clip(jnp.round(dist * (N - 1)), 0.0, float(N - 1)).astype(jnp.int32)
        # Head-independent masks, hoisted out of the head loop (was H*N compares).
        masks = [idx == n for n in range(N)]

        q_b = q_all[b * S:(b + 1) * S, :]                              # [S, kdim]
        k_b = k_all[b * S:(b + 1) * S, :]
        v_b = v_all[b * S:(b + 1) * S, :]

        for h in range(num_heads):                                     # static unroll
            q_h = q_b[:, h * dk:(h + 1) * dk].astype(MXU_DTYPE)        # [S, dk]
            k_h = k_b[:, h * dk:(h + 1) * dk].astype(MXU_DTYPE)        # [S, dk]
            v_h = v_b[:, h * dv:(h + 1) * dv].astype(MXU_DTYPE)        # [S, dv]

            # q @ k^T without an in-kernel transpose (contract last dims of both).
            logits = lax.dot_general(
                q_h, k_h,
                dimension_numbers=(((1,), (1,)), ((), ())),
                preferred_element_type=jnp.float32)                    # [S, S]

            # embed_keys: rel[i,j] = <q_h[i], emb[idx[i,j]]> = (q_h @ emb^T)[i, idx[i,j]]
            qe = jnp.dot(q_h, emb_t, preferred_element_type=jnp.float32)  # [S, N]
            rel = jnp.where(masks[0], qe[:, 0:1], 0.0)
            for n in range(1, N):                                      # N-way lane-dense select
                rel = rel + jnp.where(masks[n], qe[:, n:n + 1], 0.0)

            logits = logits + rel                                      # already /sqrt(dk)

            # --- softmax over keys (exact denominator, f32 on every generation) ---
            m = jnp.max(logits, axis=-1, keepdims=True)
            p = jnp.exp(logits - m)
            attn = p / jnp.sum(p, axis=-1, keepdims=True)

            out_h = jnp.dot(attn.astype(MXU_DTYPE), v_h,
                            preferred_element_type=jnp.float32)        # [S, dv]
            # Direct per-head store into the lane-dense [Bt, S, H*dv] output slab
            # (matches permute(0,2,1,3).reshape in the module); no concat/relayout.
            o_ref[b, :, h * dv:(h + 1) * dv] = out_h.astype(o_ref.dtype)


def _pick_block_b(batch, seq, target_rows=256):
    """Largest divisor of `batch` with block_b * seq <= ~target_rows (at least 1)."""
    bt = max(1, min(batch, target_rows // max(seq, 1)))
    while batch % bt:
        bt -= 1
    return max(bt, 1)


def distance_aware_mha(query, key, value, tile_positions, params, num_heads,
                       block_b=None):
    """Pallas implementation of DistanceAwareMultiheadAttention.forward."""
    wq, bq, wk, bk, wv, bv, emb = params
    B, S, E = query.shape
    kdim = wq.shape[0]
    vdim = wv.shape[0]
    dk = kdim // num_heads
    dv = vdim // num_heads
    N = emb.shape[0]

    bt = block_b if block_b is not None else _pick_block_b(B, S)
    assert B % bt == 0, "block_b must divide the batch size"

    # One-time XLA-side layout prep so the kernel never relayouts:
    wq_t = jnp.transpose(wq)                           # [E, kdim]
    wk_t = jnp.transpose(wk)                           # [E, kdim]
    wv_t = jnp.transpose(wv)                           # [E, vdim]
    bq2 = bq.reshape(1, kdim)
    bk2 = bk.reshape(1, kdim)
    bv2 = bv.reshape(1, vdim)
    emb_t = jnp.transpose(emb)                         # [dk, N]
    pos_c = tile_positions                             # [B, S, 2]  (column layout)
    pos_r = jnp.transpose(tile_positions, (0, 2, 1))   # [B, 2, S]  (row layout)

    kernel = functools.partial(_damha_kernel, num_heads=num_heads)

    out = pl.pallas_call(
        kernel,
        out_shape=jax.ShapeDtypeStruct((B, S, num_heads * dv), jnp.float32),
        grid=(B // bt,),
        in_specs=[
            pl.BlockSpec((bt, S, E), lambda i: (i, 0, 0)),       # query block
            pl.BlockSpec((bt, S, E), lambda i: (i, 0, 0)),       # key block
            pl.BlockSpec((bt, S, E), lambda i: (i, 0, 0)),       # value block
            pl.BlockSpec((E, kdim), lambda i: (0, 0)),           # Wq^T (constant)
            pl.BlockSpec((E, kdim), lambda i: (0, 0)),           # Wk^T (constant)
            pl.BlockSpec((E, vdim), lambda i: (0, 0)),           # Wv^T (constant)
            pl.BlockSpec((1, kdim), lambda i: (0, 0)),           # bq
            pl.BlockSpec((1, kdim), lambda i: (0, 0)),           # bk
            pl.BlockSpec((1, vdim), lambda i: (0, 0)),           # bv
            pl.BlockSpec((bt, S, 2), lambda i: (i, 0, 0)),       # positions (col layout)
            pl.BlockSpec((bt, 2, S), lambda i: (i, 0, 0)),       # positions (row layout)
            pl.BlockSpec((dk, N), lambda i: (0, 0)),             # emb^T (constant)
        ],
        out_specs=pl.BlockSpec((bt, S, num_heads * dv), lambda i: (i, 0, 0)),
        compiler_params=pltpu.CompilerParams(
            dimension_semantics=("parallel",)),   # batch-block axis is independent
    )(query, key, value, wq_t, wk_t, wv_t, bq2, bk2, bv2, pos_c, pos_r, emb_t)

    return out   # already [B, S, H*dv]; no wrapper transpose needed


def reference_mha(query, key, value, tile_positions, params, num_heads):
    """Pure-JAX reference mirroring the PyTorch forward (HIGHEST matmul precision)."""
    wq, bq, wk, bk, wv, bv, emb = params
    B, S, E = query.shape
    kdim = wq.shape[0]
    vdim = wv.shape[0]
    dk = kdim // num_heads
    dv = vdim // num_heads
    N = emb.shape[0]
    hp = jax.lax.Precision.HIGHEST

    q = jnp.einsum('bse,ke->bsk', query, wq, precision=hp) + bq
    k = jnp.einsum('bse,ke->bsk', key, wk, precision=hp) + bk
    v = jnp.einsum('bse,ve->bsv', value, wv, precision=hp) + bv
    q = q.reshape(B, S, num_heads, dk).transpose(0, 2, 1, 3)
    k = k.reshape(B, S, num_heads, dk).transpose(0, 2, 1, 3)
    v = v.reshape(B, S, num_heads, dv).transpose(0, 2, 1, 3)

    logits = jnp.einsum('bhqd,bhkd->bhqk', q, k, precision=hp)

    diff = tile_positions[:, :, None, :] - tile_positions[:, None, :, :]
    dist = jnp.sqrt(jnp.sum(diff * diff, axis=-1)) / MAX_DIST
    idx = jnp.clip(jnp.round(dist * (N - 1)), 0, N - 1).astype(jnp.int32)
    rk = emb[idx]                                        # [B, S, S, dk]
    logits = logits + jnp.einsum('bhqd,bqrd->bhqr', q, rk, precision=hp)

    logits = logits / (dk ** 0.5)
    attn = jax.nn.softmax(logits, axis=-1)
    out = jnp.einsum('bhqk,bhkd->bhqd', attn, v, precision=hp)
    return out.transpose(0, 2, 1, 3).reshape(B, S, num_heads * dv)


def init_params(key, embed_dim, kdim, vdim, num_embeddings, num_heads):
    """Deterministic parameter init matching the module's _reset_parameters."""
    ks = jax.random.split(key, 4)

    def xavier_uniform(k, out_dim, in_dim):
        bound = (6.0 / (in_dim + out_dim)) ** 0.5
        return jax.random.uniform(k, (out_dim, in_dim), jnp.float32, -bound, bound)

    wq = xavier_uniform(ks[0], kdim, embed_dim)
    wk = xavier_uniform(ks[1], kdim, embed_dim)
    wv = xavier_uniform(ks[2], vdim, embed_dim)
    bq = jnp.zeros((kdim,), jnp.float32)
    bk = jnp.zeros((kdim,), jnp.float32)
    bv = jnp.zeros((vdim,), jnp.float32)
    # nn.Embedding default init: N(0, 1)
    emb = jax.random.normal(ks[3], (num_embeddings, kdim // num_heads), jnp.float32)
    return (wq, bq, wk, bk, wv, bv, emb)


if __name__ == "__main__":
    B, S, E = 2, 8, 32
    num_heads = 4
    kdim = vdim = E
    num_embeddings = 10

    root = jax.random.PRNGKey(0)
    k_par, k_q, k_k, k_v, k_pos = jax.random.split(root, 5)

    params = init_params(k_par, E, kdim, vdim, num_embeddings, num_heads)

    query = jax.random.normal(k_q, (B, S, E), jnp.float32)
    key = jax.random.normal(k_k, (B, S, E), jnp.float32)
    value = jax.random.normal(k_v, (B, S, E), jnp.float32)
    # positions in [0, 100000)^2, as assumed by max_dist = 100000 * sqrt(2)
    tile_positions = jax.random.uniform(k_pos, (B, S, 2), jnp.float32,
                                        minval=0.0, maxval=100000.0)

    out = distance_aware_mha(query, key, value, tile_positions, params, num_heads)
    out = jax.block_until_ready(out)

    ref = reference_mha(query, key, value, tile_positions, params, num_heads)
    # bf16 MXU operands (f32 accumulation) bound the error to ~1e-2; with f32
    # operands the kernel matches the HIGHEST-precision reference to ~1e-3.
    tol = 1e-3 if MXU_DTYPE == jnp.float32 else 2e-2
    np.testing.assert_allclose(np.asarray(out), np.asarray(ref),
                               rtol=tol, atol=tol)

    print("KERNEL_OK")
</pallas_src>

<mosaic_0001>
module attributes {stable_mosaic.version = 11 : i64} {
  func.func @_damha_kernel(%arg0: i32, %arg1: memref<2x8x32xf32, #tpu.memory_space<vmem>>, %arg2: memref<2x8x32xf32, #tpu.memory_space<vmem>>, %arg3: memref<2x8x32xf32, #tpu.memory_space<vmem>>, %arg4: memref<32x32xf32, #tpu.memory_space<vmem>>, %arg5: memref<32x32xf32, #tpu.memory_space<vmem>>, %arg6: memref<32x32xf32, #tpu.memory_space<vmem>>, %arg7: memref<1x32xf32, #tpu.memory_space<vmem>>, %arg8: memref<1x32xf32, #tpu.memory_space<vmem>>, %arg9: memref<1x32xf32, #tpu.memory_space<vmem>>, %arg10: memref<2x8x2xf32, #tpu.memory_space<vmem>>, %arg11: memref<2x2x8xf32, #tpu.memory_space<vmem>>, %arg12: memref<8x10xf32, #tpu.memory_space<vmem>>, %arg13: memref<2x8x32xf32, #tpu.memory_space<vmem>>) attributes {dimension_semantics = [#tpu.dimension_semantics<parallel>], iteration_bounds = array<i64: 1>, scalar_prefetch = 0 : i64, scratch_operands = 0 : i64, tpu.core_type = #tpu.core_type<tc>, window_params = [{transform_indices = @transform_0, window_bounds = array<i64: 2, 8, 32>}, {transform_indices = @transform_1, window_bounds = array<i64: 2, 8, 32>}, {transform_indices = @transform_2, window_bounds = array<i64: 2, 8, 32>}, {pipeline_mode = #tpu.pipeline_mode<synchronous>, transform_indices = @transform_3, window_bounds = array<i64: 32, 32>}, {pipeline_mode = #tpu.pipeline_mode<synchronous>, transform_indices = @transform_4, window_bounds = array<i64: 32, 32>}, {pipeline_mode = #tpu.pipeline_mode<synchronous>, transform_indices = @transform_5, window_bounds = array<i64: 32, 32>}, {pipeline_mode = #tpu.pipeline_mode<synchronous>, transform_indices = @transform_6, window_bounds = array<i64: 1, 32>}, {pipeline_mode = #tpu.pipeline_mode<synchronous>, transform_indices = @transform_7, window_bounds = array<i64: 1, 32>}, {pipeline_mode = #tpu.pipeline_mode<synchronous>, transform_indices = @transform_8, window_bounds = array<i64: 1, 32>}, {transform_indices = @transform_9, window_bounds = array<i64: 2, 8, 2>}, {transform_indices = @transform_10, window_bounds = array<i64: 2, 2, 8>}, {pipeline_mode = #tpu.pipeline_mode<synchronous>, transform_indices = @transform_11, window_bounds = array<i64: 8, 10>}, {transform_indices = @transform_12, window_bounds = array<i64: 2, 8, 32>}]} {
    %c0 = arith.constant 0 : index
    %c0_0 = arith.constant 0 : index
    %c0_1 = arith.constant 0 : index
    %0 = vector.load %arg1[%c0, %c0_0, %c0_1] : memref<2x8x32xf32, #tpu.memory_space<vmem>>, vector<2x8x32xf32>
    %1 = vector.shape_cast %0 : vector<2x8x32xf32> to vector<16x32xf32>
    %2 = arith.truncf %1 : vector<16x32xf32> to vector<16x32xbf16>
    %c0_2 = arith.constant 0 : index
    %c0_3 = arith.constant 0 : index
    %c0_4 = arith.constant 0 : index
    %3 = vector.load %arg2[%c0_2, %c0_3, %c0_4] : memref<2x8x32xf32, #tpu.memory_space<vmem>>, vector<2x8x32xf32>
    %4 = vector.shape_cast %3 : vector<2x8x32xf32> to vector<16x32xf32>
    %5 = arith.truncf %4 : vector<16x32xf32> to vector<16x32xbf16>
    %c0_5 = arith.constant 0 : index
    %c0_6 = arith.constant 0 : index
    %c0_7 = arith.constant 0 : index
    %6 = vector.load %arg3[%c0_5, %c0_6, %c0_7] : memref<2x8x32xf32, #tpu.memory_space<vmem>>, vector<2x8x32xf32>
    %7 = vector.shape_cast %6 : vector<2x8x32xf32> to vector<16x32xf32>
    %8 = arith.truncf %7 : vector<16x32xf32> to vector<16x32xbf16>
    %c0_8 = arith.constant 0 : index
    %c0_9 = arith.constant 0 : index
    %9 = vector.load %arg4[%c0_8, %c0_9] : memref<32x32xf32, #tpu.memory_space<vmem>>, vector<32x32xf32>
    %10 = arith.truncf %9 : vector<32x32xf32> to vector<32x32xbf16>
    %c0_10 = arith.constant 0 : index
    %c0_11 = arith.constant 0 : index
    %11 = vector.load %arg5[%c0_10, %c0_11] : memref<32x32xf32, #tpu.memory_space<vmem>>, vector<32x32xf32>
    %12 = arith.truncf %11 : vector<32x32xf32> to vector<32x32xbf16>
    %c0_12 = arith.constant 0 : index
    %c0_13 = arith.constant 0 : index
    %13 = vector.load %arg6[%c0_12, %c0_13] : memref<32x32xf32, #tpu.memory_space<vmem>>, vector<32x32xf32>
    %14 = arith.truncf %13 : vector<32x32xf32> to vector<32x32xbf16>
    %cst = arith.constant dense<0.000000e+00> : vector<16x32xf32>
    %15 = tpu.matmul %2, %10, %cst {dimension_numbers = #tpu.dot_dimension_numbers<[1], [0], [0], [1], [0, 0, 1, 1], [], []>} : vector<16x32xbf16>, vector<32x32xbf16>, vector<16x32xf32> -> vector<16x32xf32>
    %c0_14 = arith.constant 0 : index
    %c0_15 = arith.constant 0 : index
    %16 = vector.load %arg7[%c0_14, %c0_15] : memref<1x32xf32, #tpu.memory_space<vmem>>, vector<1x32xf32>
    %17 = vector.broadcast %16 : vector<1x32xf32> to vector<16x32xf32>
    %18 = arith.addf %15, %17 : vector<16x32xf32>
    %cst_16 = arith.constant 0.353553385 : f32
    %19 = vector.broadcast %cst_16 : f32 to vector<16x32xf32>
    %20 = arith.mulf %18, %19 : vector<16x32xf32>
    %cst_17 = arith.constant dense<0.000000e+00> : vector<16x32xf32>
    %21 = tpu.matmul %5, %12, %cst_17 {dimension_numbers = #tpu.dot_dimension_numbers<[1], [0], [0], [1], [0, 0, 1, 1], [], []>} : vector<16x32xbf16>, vector<32x32xbf16>, vector<16x32xf32> -> vector<16x32xf32>
    %c0_18 = arith.constant 0 : index
    %c0_19 = arith.constant 0 : index
    %22 = vector.load %arg8[%c0_18, %c0_19] : memref<1x32xf32, #tpu.memory_space<vmem>>, vector<1x32xf32>
    %23 = vector.broadcast %22 : vector<1x32xf32> to vector<16x32xf32>
    %24 = arith.addf %21, %23 : vector<16x32xf32>
    %cst_20 = arith.constant dense<0.000000e+00> : vector<16x32xf32>
    %25 = tpu.matmul %8, %14, %cst_20 {dimension_numbers = #tpu.dot_dimension_numbers<[1], [0], [0], [1], [0, 0, 1, 1], [], []>} : vector<16x32xbf16>, vector<32x32xbf16>, vector<16x32xf32> -> vector<16x32xf32>
    %c0_21 = arith.constant 0 : index
    %c0_22 = arith.constant 0 : index
    %26 = vector.load %arg9[%c0_21, %c0_22] : memref<1x32xf32, #tpu.memory_space<vmem>>, vector<1x32xf32>
    %27 = vector.broadcast %26 : vector<1x32xf32> to vector<16x32xf32>
    %28 = arith.addf %25, %27 : vector<16x32xf32>
    %c0_23 = arith.constant 0 : index
    %c0_24 = arith.constant 0 : index
    %29 = vector.load %arg12[%c0_23, %c0_24] : memref<8x10xf32, #tpu.memory_space<vmem>>, vector<8x10xf32>
    %30 = arith.truncf %29 : vector<8x10xf32> to vector<8x10xbf16>
    %c0_25 = arith.constant 0 : index
    %c0_26 = arith.constant 0 : index
    %c0_27 = arith.constant 0 : index
    %31 = vector.load %arg10[%c0_25, %c0_26, %c0_27] : memref<2x8x2xf32, #tpu.memory_space<vmem>>, vector<1x8x2xf32>
    %32 = vector.shape_cast %31 : vector<1x8x2xf32> to vector<8x2xf32>
    %c0_28 = arith.constant 0 : index
    %c0_29 = arith.constant 0 : index
    %c0_30 = arith.constant 0 : index
    %33 = vector.load %arg11[%c0_28, %c0_29, %c0_30] : memref<2x2x8xf32, #tpu.memory_space<vmem>>, vector<1x2x8xf32>
    %34 = vector.shape_cast %33 : vector<1x2x8xf32> to vector<2x8xf32>
    %35 = vector.extract_strided_slice %32 {offsets = [0, 0], sizes = [8, 1], strides = [1, 1]} : vector<8x2xf32> to vector<8x1xf32>
    %36 = vector.extract_strided_slice %34 {offsets = [0, 0], sizes = [1, 8], strides = [1, 1]} : vector<2x8xf32> to vector<1x8xf32>
    %37 = vector.broadcast %35 : vector<8x1xf32> to vector<8x8xf32>
    %38 = vector.broadcast %36 : vector<1x8xf32> to vector<8x8xf32>
    %39 = arith.subf %37, %38 : vector<8x8xf32>
    %40 = vector.extract_strided_slice %32 {offsets = [0, 1], sizes = [8, 1], strides = [1, 1]} : vector<8x2xf32> to vector<8x1xf32>
    %41 = vector.extract_strided_slice %34 {offsets = [1, 0], sizes = [1, 8], strides = [1, 1]} : vector<2x8xf32> to vector<1x8xf32>
    %42 = vector.broadcast %40 : vector<8x1xf32> to vector<8x8xf32>
    %43 = vector.broadcast %41 : vector<1x8xf32> to vector<8x8xf32>
    %44 = arith.subf %42, %43 : vector<8x8xf32>
    %45 = arith.mulf %39, %39 : vector<8x8xf32>
    %46 = arith.mulf %44, %44 : vector<8x8xf32>
    %47 = arith.addf %45, %46 : vector<8x8xf32>
    %48 = math.sqrt %47 : vector<8x8xf32>
    %cst_31 = arith.constant 141421.359 : f32
    %49 = vector.broadcast %cst_31 : f32 to vector<8x8xf32>
    %50 = arith.divf %48, %49 : vector<8x8xf32>
    %cst_32 = arith.constant 9.000000e+00 : f32
    %51 = vector.broadcast %cst_32 : f32 to vector<8x8xf32>
    %52 = arith.mulf %50, %51 : vector<8x8xf32>
    %53 = math.roundeven %52 : vector<8x8xf32>
    %cst_33 = arith.constant 0.000000e+00 : f32
    %cst_34 = arith.constant 9.000000e+00 : f32
    %54 = vector.broadcast %cst_33 : f32 to vector<8x8xf32>
    %55 = arith.maximumf %54, %53 : vector<8x8xf32>
    %56 = vector.broadcast %cst_34 : f32 to vector<8x8xf32>
    %57 = arith.minimumf %56, %55 : vector<8x8xf32>
    %58 = arith.fptosi %57 : vector<8x8xf32> to vector<8x8xi32>
    %c0_i32 = arith.constant 0 : i32
    %59 = vector.broadcast %c0_i32 : i32 to vector<8x8xi32>
    %60 = arith.cmpi eq, %58, %59 : vector<8x8xi32>
    %c1_i32 = arith.constant 1 : i32
    %61 = vector.broadcast %c1_i32 : i32 to vector<8x8xi32>
    %62 = arith.cmpi eq, %58, %61 : vector<8x8xi32>
    %c2_i32 = arith.constant 2 : i32
    %63 = vector.broadcast %c2_i32 : i32 to vector<8x8xi32>
    %64 = arith.cmpi eq, %58, %63 : vector<8x8xi32>
    %c3_i32 = arith.constant 3 : i32
    %65 = vector.broadcast %c3_i32 : i32 to vector<8x8xi32>
    %66 = arith.cmpi eq, %58, %65 : vector<8x8xi32>
    %c4_i32 = arith.constant 4 : i32
    %67 = vector.broadcast %c4_i32 : i32 to vector<8x8xi32>
    %68 = arith.cmpi eq, %58, %67 : vector<8x8xi32>
    %c5_i32 = arith.constant 5 : i32
    %69 = vector.broadcast %c5_i32 : i32 to vector<8x8xi32>
    %70 = arith.cmpi eq, %58, %69 : vector<8x8xi32>
    %c6_i32 = arith.constant 6 : i32
    %71 = vector.broadcast %c6_i32 : i32 to vector<8x8xi32>
    %72 = arith.cmpi eq, %58, %71 : vector<8x8xi32>
    %c7_i32 = arith.constant 7 : i32
    %73 = vector.broadcast %c7_i32 : i32 to vector<8x8xi32>
    %74 = arith.cmpi eq, %58, %73 : vector<8x8xi32>
    %c8_i32 = arith.constant 8 : i32
    %75 = vector.broadcast %c8_i32 : i32 to vector<8x8xi32>
    %76 = arith.cmpi eq, %58, %75 : vector<8x8xi32>
    %c9_i32 = arith.constant 9 : i32
    %77 = vector.broadcast %c9_i32 : i32 to vector<8x8xi32>
    %78 = arith.cmpi eq, %58, %77 : vector<8x8xi32>
    %79 = vector.extract_strided_slice %20 {offsets = [0, 0], sizes = [8, 32], strides = [1, 1]} : vector<16x32xf32> to vector<8x32xf32>
    %80 = vector.extract_strided_slice %24 {offsets = [0, 0], sizes = [8, 32], strides = [1, 1]} : vector<16x32xf32> to vector<8x32xf32>
    %81 = vector.extract_strided_slice %28 {offsets = [0, 0], sizes = [8, 32], strides = [1, 1]} : vector<16x32xf32> to vector<8x32xf32>
    %82 = vector.extract_strided_slice %79 {offsets = [0, 0], sizes = [8, 8], strides = [1, 1]} : vector<8x32xf32> to vector<8x8xf32>
    %83 = arith.truncf %82 : vector<8x8xf32> to vector<8x8xbf16>
    %84 = vector.extract_strided_slice %80 {offsets = [0, 0], sizes = [8, 8], strides = [1, 1]} : vector<8x32xf32> to vector<8x8xf32>
    %85 = arith.truncf %84 : vector<8x8xf32> to vector<8x8xbf16>
    %86 = vector.extract_strided_slice %81 {offsets = [0, 0], sizes = [8, 8], strides = [1, 1]} : vector<8x32xf32> to vector<8x8xf32>
    %87 = arith.truncf %86 : vector<8x8xf32> to vector<8x8xbf16>
    %cst_35 = arith.constant dense<0.000000e+00> : vector<8x8xf32>
    %88 = tpu.matmul %83, %85, %cst_35 {dimension_numbers = #tpu.dot_dimension_numbers<[1], [1], [0], [0], [0, 0, 1, 0], [], []>} : vector<8x8xbf16>, vector<8x8xbf16>, vector<8x8xf32> -> vector<8x8xf32>
    %cst_36 = arith.constant dense<0.000000e+00> : vector<8x10xf32>
    %89 = tpu.matmul %83, %30, %cst_36 {dimension_numbers = #tpu.dot_dimension_numbers<[1], [0], [0], [1], [0, 0, 1, 1], [], []>} : vector<8x8xbf16>, vector<8x10xbf16>, vector<8x10xf32> -> vector<8x10xf32>
    %90 = vector.extract_strided_slice %89 {offsets = [0, 0], sizes = [8, 1], strides = [1, 1]} : vector<8x10xf32> to vector<8x1xf32>
    %cst_37 = arith.constant 0.000000e+00 : f32
    %91 = vector.shape_cast %90 : vector<8x1xf32> to vector<8x1xf32>
    %92 = vector.broadcast %91 : vector<8x1xf32> to vector<8x8xf32>
    %93 = vector.broadcast %cst_37 : f32 to vector<8x8xf32>
    %94 = arith.select %60, %92, %93 : vector<8x8xi1>, vector<8x8xf32>
    %95 = vector.extract_strided_slice %89 {offsets = [0, 1], sizes = [8, 1], strides = [1, 1]} : vector<8x10xf32> to vector<8x1xf32>
    %cst_38 = arith.constant 0.000000e+00 : f32
    %96 = vector.shape_cast %95 : vector<8x1xf32> to vector<8x1xf32>
    %97 = vector.broadcast %96 : vector<8x1xf32> to vector<8x8xf32>
    %98 = vector.broadcast %cst_38 : f32 to vector<8x8xf32>
    %99 = arith.select %62, %97, %98 : vector<8x8xi1>, vector<8x8xf32>
    %100 = arith.addf %94, %99 : vector<8x8xf32>
    %101 = vector.extract_strided_slice %89 {offsets = [0, 2], sizes = [8, 1], strides = [1, 1]} : vector<8x10xf32> to vector<8x1xf32>
    %cst_39 = arith.constant 0.000000e+00 : f32
    %102 = vector.shape_cast %101 : vector<8x1xf32> to vector<8x1xf32>
    %103 = vector.broadcast %102 : vector<8x1xf32> to vector<8x8xf32>
    %104 = vector.broadcast %cst_39 : f32 to vector<8x8xf32>
    %105 = arith.select %64, %103, %104 : vector<8x8xi1>, vector<8x8xf32>
    %106 = arith.addf %100, %105 : vector<8x8xf32>
    %107 = vector.extract_strided_slice %89 {offsets = [0, 3], sizes = [8, 1], strides = [1, 1]} : vector<8x10xf32> to vector<8x1xf32>
    %cst_40 = arith.constant 0.000000e+00 : f32
    %108 = vector.shape_cast %107 : vector<8x1xf32> to vector<8x1xf32>
    %109 = vector.broadcast %108 : vector<8x1xf32> to vector<8x8xf32>
    %110 = vector.broadcast %cst_40 : f32 to vector<8x8xf32>
    %111 = arith.select %66, %109, %110 : vector<8x8xi1>, vector<8x8xf32>
    %112 = arith.addf %106, %111 : vector<8x8xf32>
    %113 = vector.extract_strided_slice %89 {offsets = [0, 4], sizes = [8, 1], strides = [1, 1]} : vector<8x10xf32> to vector<8x1xf32>
    %cst_41 = arith.constant 0.000000e+00 : f32
    %114 = vector.shape_cast %113 : vector<8x1xf32> to vector<8x1xf32>
    %115 = vector.broadcast %114 : vector<8x1xf32> to vector<8x8xf32>
    %116 = vector.broadcast %cst_41 : f32 to vector<8x8xf32>
    %117 = arith.select %68, %115, %116 : vector<8x8xi1>, vector<8x8xf32>
    %118 = arith.addf %112, %117 : vector<8x8xf32>
    %119 = vector.extract_strided_slice %89 {offsets = [0, 5], sizes = [8, 1], strides = [1, 1]} : vector<8x10xf32> to vector<8x1xf32>
    %cst_42 = arith.constant 0.000000e+00 : f32
    %120 = vector.shape_cast %119 : vector<8x1xf32> to vector<8x1xf32>
    %121 = vector.broadcast %120 : vector<8x1xf32> to vector<8x8xf32>
    %122 = vector.broadcast %cst_42 : f32 to vector<8x8xf32>
    %123 = arith.select %70, %121, %122 : vector<8x8xi1>, vector<8x8xf32>
    %124 = arith.addf %118, %123 : vector<8x8xf32>
    %125 = vector.extract_strided_slice %89 {offsets = [0, 6], sizes = [8, 1], strides = [1, 1]} : vector<8x10xf32> to vector<8x1xf32>
    %cst_43 = arith.constant 0.000000e+00 : f32
    %126 = vector.shape_cast %125 : vector<8x1xf32> to vector<8x1xf32>
    %127 = vector.broadcast %126 : vector<8x1xf32> to vector<8x8xf32>
    %128 = vector.broadcast %cst_43 : f32 to vector<8x8xf32>
    %129 = arith.select %72, %127, %128 : vector<8x8xi1>, vector<8x8xf32>
    %130 = arith.addf %124, %129 : vector<8x8xf32>
    %131 = vector.extract_strided_slice %89 {offsets = [0, 7], sizes = [8, 1], strides = [1, 1]} : vector<8x10xf32> to vector<8x1xf32>
    %cst_44 = arith.constant 0.000000e+00 : f32
    %132 = vector.shape_cast %131 : vector<8x1xf32> to vector<8x1xf32>
    %133 = vector.broadcast %132 : vector<8x1xf32> to vector<8x8xf32>
    %134 = vector.broadcast %cst_44 : f32 to vector<8x8xf32>
    %135 = arith.select %74, %133, %134 : vector<8x8xi1>, vector<8x8xf32>
    %136 = arith.addf %130, %135 : vector<8x8xf32>
    %137 = vector.extract_strided_slice %89 {offsets = [0, 8], sizes = [8, 1], strides = [1, 1]} : vector<8x10xf32> to vector<8x1xf32>
    %cst_45 = arith.constant 0.000000e+00 : f32
    %138 = vector.shape_cast %137 : vector<8x1xf32> to vector<8x1xf32>
    %139 = vector.broadcast %138 : vector<8x1xf32> to vector<8x8xf32>
    %140 = vector.broadcast %cst_45 : f32 to vector<8x8xf32>
    %141 = arith.select %76, %139, %140 : vector<8x8xi1>, vector<8x8xf32>
    %142 = arith.addf %136, %141 : vector<8x8xf32>
    %143 = vector.extract_strided_slice %89 {offsets = [0, 9], sizes = [8, 1], strides = [1, 1]} : vector<8x10xf32> to vector<8x1xf32>
    %cst_46 = arith.constant 0.000000e+00 : f32
    %144 = vector.shape_cast %143 : vector<8x1xf32> to vector<8x1xf32>
    %145 = vector.broadcast %144 : vector<8x1xf32> to vector<8x8xf32>
    %146 = vector.broadcast %cst_46 : f32 to vector<8x8xf32>
    %147 = arith.select %78, %145, %146 : vector<8x8xi1>, vector<8x8xf32>
    %148 = arith.addf %142, %147 : vector<8x8xf32>
    %149 = arith.addf %88, %148 : vector<8x8xf32>
    %cst_47 = arith.constant dense<0xFF800000> : vector<8xf32>
    %150 = vector.multi_reduction <maximumf>, %149, %cst_47 [1] : vector<8x8xf32> to vector<8xf32>
    %151 = vector.shape_cast %150 : vector<8xf32> to vector<8x1xf32>
    %152 = vector.broadcast %151 : vector<8x1xf32> to vector<8x8xf32>
    %153 = arith.subf %149, %152 : vector<8x8xf32>
    %154 = math.exp %153 : vector<8x8xf32>
    %cst_48 = arith.constant dense<0.000000e+00> : vector<8xf32>
    %155 = vector.multi_reduction <add>, %154, %cst_48 [1] : vector<8x8xf32> to vector<8xf32>
    %156 = vector.shape_cast %155 : vector<8xf32> to vector<8x1xf32>
    %157 = vector.broadcast %156 : vector<8x1xf32> to vector<8x8xf32>
    %158 = arith.divf %154, %157 : vector<8x8xf32>
    %159 = arith.truncf %158 : vector<8x8xf32> to vector<8x8xbf16>
    %cst_49 = arith.constant dense<0.000000e+00> : vector<8x8xf32>
    %160 = tpu.matmul %159, %87, %cst_49 {dimension_numbers = #tpu.dot_dimension_numbers<[1], [0], [0], [1], [0, 0, 1, 1], [], []>} : vector<8x8xbf16>, vector<8x8xbf16>, vector<8x8xf32> -> vector<8x8xf32>
    %c0_50 = arith.constant 0 : index
    %c0_51 = arith.constant 0 : index
    %c0_52 = arith.constant 0 : index
    %161 = vector.load %arg13[%c0_50, %c0_51, %c0_52] : memref<2x8x32xf32, #tpu.memory_space<vmem>>, vector<1x8x8xf32>
    %162 = vector.shape_cast %161 : vector<1x8x8xf32> to vector<8x8xf32>
    %163 = vector.shape_cast %160 : vector<8x8xf32> to vector<1x8x8xf32>
    tpu.vector_store %arg13[%c0_50, %c0_51, %c0_52], %163 {strides = array<i32>} : memref<2x8x32xf32, #tpu.memory_space<vmem>>, vector<1x8x8xf32>,
    %164 = vector.extract_strided_slice %79 {offsets = [0, 8], sizes = [8, 8], strides = [1, 1]} : vector<8x32xf32> to vector<8x8xf32>
    %165 = arith.truncf %164 : vector<8x8xf32> to vector<8x8xbf16>
    %166 = vector.extract_strided_slice %80 {offsets = [0, 8], sizes = [8, 8], strides = [1, 1]} : vector<8x32xf32> to vector<8x8xf32>
    %167 = arith.truncf %166 : vector<8x8xf32> to vector<8x8xbf16>
    %168 = vector.extract_strided_slice %81 {offsets = [0, 8], sizes = [8, 8], strides = [1, 1]} : vector<8x32xf32> to vector<8x8xf32>
    %169 = arith.truncf %168 : vector<8x8xf32> to vector<8x8xbf16>
    %cst_53 = arith.constant dense<0.000000e+00> : vector<8x8xf32>
    %170 = tpu.matmul %165, %167, %cst_53 {dimension_numbers = #tpu.dot_dimension_numbers<[1], [1], [0], [0], [0, 0, 1, 0], [], []>} : vector<8x8xbf16>, vector<8x8xbf16>, vector<8x8xf32> -> vector<8x8xf32>
    %cst_54 = arith.constant dense<0.000000e+00> : vector<8x10xf32>
    %171 = tpu.matmul %165, %30, %cst_54 {dimension_numbers = #tpu.dot_dimension_numbers<[1], [0], [0], [1], [0, 0, 1, 1], [], []>} : vector<8x8xbf16>, vector<8x10xbf16>, vector<8x10xf32> -> vector<8x10xf32>
    %172 = vector.extract_strided_slice %171 {offsets = [0, 0], sizes = [8, 1], strides = [1, 1]} : vector<8x10xf32> to vector<8x1xf32>
    %cst_55 = arith.constant 0.000000e+00 : f32
    %173 = vector.shape_cast %172 : vector<8x1xf32> to vector<8x1xf32>
    %174 = vector.broadcast %173 : vector<8x1xf32> to vector<8x8xf32>
    %175 = vector.broadcast %cst_55 : f32 to vector<8x8xf32>
    %176 = arith.select %60, %174, %175 : vector<8x8xi1>, vector<8x8xf32>
    %177 = vector.extract_strided_slice %171 {offsets = [0, 1], sizes = [8, 1], strides = [1, 1]} : vector<8x10xf32> to vector<8x1xf32>
    %cst_56 = arith.constant 0.000000e+00 : f32
    %178 = vector.shape_cast %177 : vector<8x1xf32> to vector<8x1xf32>
    %179 = vector.broadcast %178 : vector<8x1xf32> to vector<8x8xf32>
    %180 = vector.broadcast %cst_56 : f32 to vector<8x8xf32>
    %181 = arith.select %62, %179, %180 : vector<8x8xi1>, vector<8x8xf32>
    %182 = arith.addf %176, %181 : vector<8x8xf32>
    %183 = vector.extract_strided_slice %171 {offsets = [0, 2], sizes = [8, 1], strides = [1, 1]} : vector<8x10xf32> to vector<8x1xf32>
    %cst_57 = arith.constant 0.000000e+00 : f32
    %184 = vector.shape_cast %183 : vector<8x1xf32> to vector<8x1xf32>
    %185 = vector.broadcast %184 : vector<8x1xf32> to vector<8x8xf32>
    %186 = vector.broadcast %cst_57 : f32 to vector<8x8xf32>
    %187 = arith.select %64, %185, %186 : vector<8x8xi1>, vector<8x8xf32>
    %188 = arith.addf %182, %187 : vector<8x8xf32>
    %189 = vector.extract_strided_slice %171 {offsets = [0, 3], sizes = [8, 1], strides = [1, 1]} : vector<8x10xf32> to vector<8x1xf32>
    %cst_58 = arith.constant 0.000000e+00 : f32
    %190 = vector.shape_cast %189 : vector<8x1xf32> to vector<8x1xf32>
    %191 = vector.broadcast %190 : vector<8x1xf32> to vector<8x8xf32>
    %192 = vector.broadcast %cst_58 : f32 to vector<8x8xf32>
    %193 = arith.select %66, %191, %192 : vector<8x8xi1>, vector<8x8xf32>
    %194 = arith.addf %188, %193 : vector<8x8xf32>
    %195 = vector.extract_strided_slice %171 {offsets = [0, 4], sizes = [8, 1], strides = [1, 1]} : vector<8x10xf32> to vector<8x1xf32>
    %cst_59 = arith.constant 0.000000e+00 : f32
    %196 = vector.shape_cast %195 : vector<8x1xf32> to vector<8x1xf32>
    %197 = vector.broadcast %196 : vector<8x1xf32> to vector<8x8xf32>
    %198 = vector.broadcast %cst_59 : f32 to vector<8x8xf32>
    %199 = arith.select %68, %197, %198 : vector<8x8xi1>, vector<8x8xf32>
    %200 = arith.addf %194, %199 : vector<8x8xf32>
    %201 = vector.extract_strided_slice %171 {offsets = [0, 5], sizes = [8, 1], strides = [1, 1]} : vector<8x10xf32> to vector<8x1xf32>
    %cst_60 = arith.constant 0.000000e+00 : f32
    %202 = vector.shape_cast %201 : vector<8x1xf32> to vector<8x1xf32>
    %203 = vector.broadcast %202 : vector<8x1xf32> to vector<8x8xf32>
    %204 = vector.broadcast %cst_60 : f32 to vector<8x8xf32>
    %205 = arith.select %70, %203, %204 : vector<8x8xi1>, vector<8x8xf32>
    %206 = arith.addf %200, %205 : vector<8x8xf32>
    %207 = vector.extract_strided_slice %171 {offsets = [0, 6], sizes = [8, 1], strides = [1, 1]} : vector<8x10xf32> to vector<8x1xf32>
    %cst_61 = arith.constant 0.000000e+00 : f32
    %208 = vector.shape_cast %207 : vector<8x1xf32> to vector<8x1xf32>
    %209 = vector.broadcast %208 : vector<8x1xf32> to vector<8x8xf32>
    %210 = vector.broadcast %cst_61 : f32 to vector<8x8xf32>
    %211 = arith.select %72, %209, %210 : vector<8x8xi1>, vector<8x8xf32>
    %212 = arith.addf %206, %211 : vector<8x8xf32>
    %213 = vector.extract_strided_slice %171 {offsets = [0, 7], sizes = [8, 1], strides = [1, 1]} : vector<8x10xf32> to vector<8x1xf32>
    %cst_62 = arith.constant 0.000000e+00 : f32
    %214 = vector.shape_cast %213 : vector<8x1xf32> to vector<8x1xf32>
    %215 = vector.broadcast %214 : vector<8x1xf32> to vector<8x8xf32>
    %216 = vector.broadcast %cst_62 : f32 to vector<8x8xf32>
    %217 = arith.select %74, %215, %216 : vector<8x8xi1>, vector<8x8xf32>
    %218 = arith.addf %212, %217 : vector<8x8xf32>
    %219 = vector.extract_strided_slice %171 {offsets = [0, 8], sizes = [8, 1], strides = [1, 1]} : vector<8x10xf32> to vector<8x1xf32>
    %cst_63 = arith.constant 0.000000e+00 : f32
    %220 = vector.shape_cast %219 : vector<8x1xf32> to vector<8x1xf32>
    %221 = vector.broadcast %220 : vector<8x1xf32> to vector<8x8xf32>
    %222 = vector.broadcast %cst_63 : f32 to vector<8x8xf32>
    %223 = arith.select %76, %221, %222 : vector<8x8xi1>, vector<8x8xf32>
    %224 = arith.addf %218, %223 : vector<8x8xf32>
    %225 = vector.extract_strided_slice %171 {offsets = [0, 9], sizes = [8, 1], strides = [1, 1]} : vector<8x10xf32> to vector<8x1xf32>
    %cst_64 = arith.constant 0.000000e+00 : f32
    %226 = vector.shape_cast %225 : vector<8x1xf32> to vector<8x1xf32>
    %227 = vector.broadcast %226 : vector<8x1xf32> to vector<8x8xf32>
    %228 = vector.broadcast %cst_64 : f32 to vector<8x8xf32>
    %229 = arith.select %78, %227, %228 : vector<8x8xi1>, vector<8x8xf32>
    %230 = arith.addf %224, %229 : vector<8x8xf32>
    %231 = arith.addf %170, %230 : vector<8x8xf32>
    %cst_65 = arith.constant dense<0xFF800000> : vector<8xf32>
    %232 = vector.multi_reduction <maximumf>, %231, %cst_65 [1] : vector<8x8xf32> to vector<8xf32>
    %233 = vector.shape_cast %232 : vector<8xf32> to vector<8x1xf32>
    %234 = vector.broadcast %233 : vector<8x1xf32> to vector<8x8xf32>
    %235 = arith.subf %231, %234 : vector<8x8xf32>
    %236 = math.exp %235 : vector<8x8xf32>
    %cst_66 = arith.constant dense<0.000000e+00> : vector<8xf32>
    %237 = vector.multi_reduction <add>, %236, %cst_66 [1] : vector<8x8xf32> to vector<8xf32>
    %238 = vector.shape_cast %237 : vector<8xf32> to vector<8x1xf32>
    %239 = vector.broadcast %238 : vector<8x1xf32> to vector<8x8xf32>
    %240 = arith.divf %236, %239 : vector<8x8xf32>
    %241 = arith.truncf %240 : vector<8x8xf32> to vector<8x8xbf16>
    %cst_67 = arith.constant dense<0.000000e+00> : vector<8x8xf32>
    %242 = tpu.matmul %241, %169, %cst_67 {dimension_numbers = #tpu.dot_dimension_numbers<[1], [0], [0], [1], [0, 0, 1, 1], [], []>} : vector<8x8xbf16>, vector<8x8xbf16>, vector<8x8xf32> -> vector<8x8xf32>
    %c0_68 = arith.constant 0 : index
    %c0_69 = arith.constant 0 : index
    %c8 = arith.constant 8 : index
    %243 = vector.load %arg13[%c0_68, %c0_69, %c8] : memref<2x8x32xf32, #tpu.memory_space<vmem>>, vector<1x8x8xf32>
    %244 = vector.shape_cast %243 : vector<1x8x8xf32> to vector<8x8xf32>
    %245 = vector.shape_cast %242 : vector<8x8xf32> to vector<1x8x8xf32>
    tpu.vector_store %arg13[%c0_68, %c0_69, %c8], %245 {strides = array<i32>} : memref<2x8x32xf32, #tpu.memory_space<vmem>>, vector<1x8x8xf32>,
    %246 = vector.extract_strided_slice %79 {offsets = [0, 16], sizes = [8, 8], strides = [1, 1]} : vector<8x32xf32> to vector<8x8xf32>
    %247 = arith.truncf %246 : vector<8x8xf32> to vector<8x8xbf16>
    %248 = vector.extract_strided_slice %80 {offsets = [0, 16], sizes = [8, 8], strides = [1, 1]} : vector<8x32xf32> to vector<8x8xf32>
    %249 = arith.truncf %248 : vector<8x8xf32> to vector<8x8xbf16>
    %250 = vector.extract_strided_slice %81 {offsets = [0, 16], sizes = [8, 8], strides = [1, 1]} : vector<8x32xf32> to vector<8x8xf32>
    %251 = arith.truncf %250 : vector<8x8xf32> to vector<8x8xbf16>
    %cst_70 = arith.constant dense<0.000000e+00> : vector<8x8xf32>
    %252 = tpu.matmul %247, %249, %cst_70 {dimension_numbers = #tpu.dot_dimension_numbers<[1], [1], [0], [0], [0, 0, 1, 0], [], []>} : vector<8x8xbf16>, vector<8x8xbf16>, vector<8x8xf32> -> vector<8x8xf32>
    %cst_71 = arith.constant dense<0.000000e+00> : vector<8x10xf32>
    %253 = tpu.matmul %247, %30, %cst_71 {dimension_numbers = #tpu.dot_dimension_numbers<[1], [0], [0], [1], [0, 0, 1, 1], [], []>} : vector<8x8xbf16>, vector<8x10xbf16>, vector<8x10xf32> -> vector<8x10xf32>
    %254 = vector.extract_strided_slice %253 {offsets = [0, 0], sizes = [8, 1], strides = [1, 1]} : vector<8x10xf32> to vector<8x1xf32>
    %cst_72 = arith.constant 0.000000e+00 : f32
    %255 = vector.shape_cast %254 : vector<8x1xf32> to vector<8x1xf32>
    %256 = vector.broadcast %255 : vector<8x1xf32> to vector<8x8xf32>
    %257 = vector.broadcast %cst_72 : f32 to vector<8x8xf32>
    %258 = arith.select %60, %256, %257 : vector<8x8xi1>, vector<8x8xf32>
    %259 = vector.extract_strided_slice %253 {offsets = [0, 1], sizes = [8, 1], strides = [1, 1]} : vector<8x10xf32> to vector<8x1xf32>
    %cst_73 = arith.constant 0.000000e+00 : f32
    %260 = vector.shape_cast %259 : vector<8x1xf32> to vector<8x1xf32>
    %261 = vector.broadcast %260 : vector<8x1xf32> to vector<8x8xf32>
    %262 = vector.broadcast %cst_73 : f32 to vector<8x8xf32>
    %263 = arith.select %62, %261, %262 : vector<8x8xi1>, vector<8x8xf32>
    %264 = arith.addf %258, %263 : vector<8x8xf32>
    %265 = vector.extract_strided_slice %253 {offsets = [0, 2], sizes = [8, 1], strides = [1, 1]} : vector<8x10xf32> to vector<8x1xf32>
    %cst_74 = arith.constant 0.000000e+00 : f32
    %266 = vector.shape_cast %265 : vector<8x1xf32> to vector<8x1xf32>
    %267 = vector.broadcast %266 : vector<8x1xf32> to vector<8x8xf32>
    %268 = vector.broadcast %cst_74 : f32 to vector<8x8xf32>
    %269 = arith.select %64, %267, %268 : vector<8x8xi1>, vector<8x8xf32>
    %270 = arith.addf %264, %269 : vector<8x8xf32>
    %271 = vector.extract_strided_slice %253 {offsets = [0, 3], sizes = [8, 1], strides = [1, 1]} : vector<8x10xf32> to vector<8x1xf32>
    %cst_75 = arith.constant 0.000000e+00 : f32
    %272 = vector.shape_cast %271 : vector<8x1xf32> to vector<8x1xf32>
    %273 = vector.broadcast %272 : vector<8x1xf32> to vector<8x8xf32>
    %274 = vector.broadcast %cst_75 : f32 to vector<8x8xf32>
    %275 = arith.select %66, %273, %274 : vector<8x8xi1>, vector<8x8xf32>
    %276 = arith.addf %270, %275 : vector<8x8xf32>
    %277 = vector.extract_strided_slice %253 {offsets = [0, 4], sizes = [8, 1], strides = [1, 1]} : vector<8x10xf32> to vector<8x1xf32>
    %cst_76 = arith.constant 0.000000e+00 : f32
    %278 = vector.shape_cast %277 : vector<8x1xf32> to vector<8x1xf32>
    %279 = vector.broadcast %278 : vector<8x1xf32> to vector<8x8xf32>
    %280 = vector.broadcast %cst_76 : f32 to vector<8x8xf32>
    %281 = arith.select %68, %279, %280 : vector<8x8xi1>, vector<8x8xf32>
    %282 = arith.addf %276, %281 : vector<8x8xf32>
    %283 = vector.extract_strided_slice %253 {offsets = [0, 5], sizes = [8, 1], strides = [1, 1]} : vector<8x10xf32> to vector<8x1xf32>
    %cst_77 = arith.constant 0.000000e+00 : f32
    %284 = vector.shape_cast %283 : vector<8x1xf32> to vector<8x1xf32>
    %285 = vector.broadcast %284 : vector<8x1xf32> to vector<8x8xf32>
    %286 = vector.broadcast %cst_77 : f32 to vector<8x8xf32>
    %287 = arith.select %70, %285, %286 : vector<8x8xi1>, vector<8x8xf32>
    %288 = arith.addf %282, %287 : vector<8x8xf32>
    %289 = vector.extract_strided_slice %253 {offsets = [0, 6], sizes = [8, 1], strides = [1, 1]} : vector<8x10xf32> to vector<8x1xf32>
    %cst_78 = arith.constant 0.000000e+00 : f32
    %290 = vector.shape_cast %289 : vector<8x1xf32> to vector<8x1xf32>
    %291 = vector.broadcast %290 : vector<8x1xf32> to vector<8x8xf32>
    %292 = vector.broadcast %cst_78 : f32 to vector<8x8xf32>
    %293 = arith.select %72, %291, %292 : vector<8x8xi1>, vector<8x8xf32>
    %294 = arith.addf %288, %293 : vector<8x8xf32>
    %295 = vector.extract_strided_slice %253 {offsets = [0, 7], sizes = [8, 1], strides = [1, 1]} : vector<8x10xf32> to vector<8x1xf32>
    %cst_79 = arith.constant 0.000000e+00 : f32
    %296 = vector.shape_cast %295 : vector<8x1xf32> to vector<8x1xf32>
    %297 = vector.broadcast %296 : vector<8x1xf32> to vector<8x8xf32>
    %298 = vector.broadcast %cst_79 : f32 to vector<8x8xf32>
    %299 = arith.select %74, %297, %298 : vector<8x8xi1>, vector<8x8xf32>
    %300 = arith.addf %294, %299 : vector<8x8xf32>
    %301 = vector.extract_strided_slice %253 {offsets = [0, 8], sizes = [8, 1], strides = [1, 1]} : vector<8x10xf32> to vector<8x1xf32>
    %cst_80 = arith.constant 0.000000e+00 : f32
    %302 = vector.shape_cast %301 : vector<8x1xf32> to vector<8x1xf32>
    %303 = vector.broadcast %302 : vector<8x1xf32> to vector<8x8xf32>
    %304 = vector.broadcast %cst_80 : f32 to vector<8x8xf32>
    %305 = arith.select %76, %303, %304 : vector<8x8xi1>, vector<8x8xf32>
    %306 = arith.addf %300, %305 : vector<8x8xf32>
    %307 = vector.extract_strided_slice %253 {offsets = [0, 9], sizes = [8, 1], strides = [1, 1]} : vector<8x10xf32> to vector<8x1xf32>
    %cst_81 = arith.constant 0.000000e+00 : f32
    %308 = vector.shape_cast %307 : vector<8x1xf32> to vector<8x1xf32>
    %309 = vector.broadcast %308 : vector<8x1xf32> to vector<8x8xf32>
    %310 = vector.broadcast %cst_81 : f32 to vector<8x8xf32>
    %311 = arith.select %78, %309, %310 : vector<8x8xi1>, vector<8x8xf32>
    %312 = arith.addf %306, %311 : vector<8x8xf32>
    %313 = arith.addf %252, %312 : vector<8x8xf32>
    %cst_82 = arith.constant dense<0xFF800000> : vector<8xf32>
    %314 = vector.multi_reduction <maximumf>, %313, %cst_82 [1] : vector<8x8xf32> to vector<8xf32>
    %315 = vector.shape_cast %314 : vector<8xf32> to vector<8x1xf32>
    %316 = vector.broadcast %315 : vector<8x1xf32> to vector<8x8xf32>
    %317 = arith.subf %313, %316 : vector<8x8xf32>
    %318 = math.exp %317 : vector<8x8xf32>
    %cst_83 = arith.constant dense<0.000000e+00> : vector<8xf32>
    %319 = vector.multi_reduction <add>, %318, %cst_83 [1] : vector<8x8xf32> to vector<8xf32>
    %320 = vector.shape_cast %319 : vector<8xf32> to vector<8x1xf32>
    %321 = vector.broadcast %320 : vector<8x1xf32> to vector<8x8xf32>
    %322 = arith.divf %318, %321 : vector<8x8xf32>
    %323 = arith.truncf %322 : vector<8x8xf32> to vector<8x8xbf16>
    %cst_84 = arith.constant dense<0.000000e+00> : vector<8x8xf32>
    %324 = tpu.matmul %323, %251, %cst_84 {dimension_numbers = #tpu.dot_dimension_numbers<[1], [0], [0], [1], [0, 0, 1, 1], [], []>} : vector<8x8xbf16>, vector<8x8xbf16>, vector<8x8xf32> -> vector<8x8xf32>
    %c0_85 = arith.constant 0 : index
    %c0_86 = arith.constant 0 : index
    %c16 = arith.constant 16 : index
    %325 = vector.load %arg13[%c0_85, %c0_86, %c16] : memref<2x8x32xf32, #tpu.memory_space<vmem>>, vector<1x8x8xf32>
    %326 = vector.shape_cast %325 : vector<1x8x8xf32> to vector<8x8xf32>
    %327 = vector.shape_cast %324 : vector<8x8xf32> to vector<1x8x8xf32>
    tpu.vector_store %arg13[%c0_85, %c0_86, %c16], %327 {strides = array<i32>} : memref<2x8x32xf32, #tpu.memory_space<vmem>>, vector<1x8x8xf32>,
    %328 = vector.extract_strided_slice %79 {offsets = [0, 24], sizes = [8, 8], strides = [1, 1]} : vector<8x32xf32> to vector<8x8xf32>
    %329 = arith.truncf %328 : vector<8x8xf32> to vector<8x8xbf16>
    %330 = vector.extract_strided_slice %80 {offsets = [0, 24], sizes = [8, 8], strides = [1, 1]} : vector<8x32xf32> to vector<8x8xf32>
    %331 = arith.truncf %330 : vector<8x8xf32> to vector<8x8xbf16>
    %332 = vector.extract_strided_slice %81 {offsets = [0, 24], sizes = [8, 8], strides = [1, 1]} : vector<8x32xf32> to vector<8x8xf32>
    %333 = arith.truncf %332 : vector<8x8xf32> to vector<8x8xbf16>
    %cst_87 = arith.constant dense<0.000000e+00> : vector<8x8xf32>
    %334 = tpu.matmul %329, %331, %cst_87 {dimension_numbers = #tpu.dot_dimension_numbers<[1], [1], [0], [0], [0, 0, 1, 0], [], []>} : vector<8x8xbf16>, vector<8x8xbf16>, vector<8x8xf32> -> vector<8x8xf32>
    %cst_88 = arith.constant dense<0.000000e+00> : vector<8x10xf32>
    %335 = tpu.matmul %329, %30, %cst_88 {dimension_numbers = #tpu.dot_dimension_numbers<[1], [0], [0], [1], [0, 0, 1, 1], [], []>} : vector<8x8xbf16>, vector<8x10xbf16>, vector<8x10xf32> -> vector<8x10xf32>
    %336 = vector.extract_strided_slice %335 {offsets = [0, 0], sizes = [8, 1], strides = [1, 1]} : vector<8x10xf32> to vector<8x1xf32>
    %cst_89 = arith.constant 0.000000e+00 : f32
    %337 = vector.shape_cast %336 : vector<8x1xf32> to vector<8x1xf32>
    %338 = vector.broadcast %337 : vector<8x1xf32> to vector<8x8xf32>
    %339 = vector.broadcast %cst_89 : f32 to vector<8x8xf32>
    %340 = arith.select %60, %338, %339 : vector<8x8xi1>, vector<8x8xf32>
    %341 = vector.extract_strided_slice %335 {offsets = [0, 1], sizes = [8, 1], strides = [1, 1]} : vector<8x10xf32> to vector<8x1xf32>
    %cst_90 = arith.constant 0.000000e+00 : f32
    %342 = vector.shape_cast %341 : vector<8x1xf32> to vector<8x1xf32>
    %343 = vector.broadcast %342 : vector<8x1xf32> to vector<8x8xf32>
    %344 = vector.broadcast %cst_90 : f32 to vector<8x8xf32>
    %345 = arith.select %62, %343, %344 : vector<8x8xi1>, vector<8x8xf32>
    %346 = arith.addf %340, %345 : vector<8x8xf32>
    %347 = vector.extract_strided_slice %335 {offsets = [0, 2], sizes = [8, 1], strides = [1, 1]} : vector<8x10xf32> to vector<8x1xf32>
    %cst_91 = arith.constant 0.000000e+00 : f32
    %348 = vector.shape_cast %347 : vector<8x1xf32> to vector<8x1xf32>
    %349 = vector.broadcast %348 : vector<8x1xf32> to vector<8x8xf32>
    %350 = vector.broadcast %cst_91 : f32 to vector<8x8xf32>
    %351 = arith.select %64, %349, %350 : vector<8x8xi1>, vector<8x8xf32>
    %352 = arith.addf %346, %351 : vector<8x8xf32>
    %353 = vector.extract_strided_slice %335 {offsets = [0, 3], sizes = [8, 1], strides = [1, 1]} : vector<8x10xf32> to vector<8x1xf32>
    %cst_92 = arith.constant 0.000000e+00 : f32
    %354 = vector.shape_cast %353 : vector<8x1xf32> to vector<8x1xf32>
    %355 = vector.broadcast %354 : vector<8x1xf32> to vector<8x8xf32>
    %356 = vector.broadcast %cst_92 : f32 to vector<8x8xf32>
    %357 = arith.select %66, %355, %356 : vector<8x8xi1>, vector<8x8xf32>
    %358 = arith.addf %352, %357 : vector<8x8xf32>
    %359 = vector.extract_strided_slice %335 {offsets = [0, 4], sizes = [8, 1], strides = [1, 1]} : vector<8x10xf32> to vector<8x1xf32>
    %cst_93 = arith.constant 0.000000e+00 : f32
    %360 = vector.shape_cast %359 : vector<8x1xf32> to vector<8x1xf32>
    %361 = vector.broadcast %360 : vector<8x1xf32> to vector<8x8xf32>
    %362 = vector.broadcast %cst_93 : f32 to vector<8x8xf32>
    %363 = arith.select %68, %361, %362 : vector<8x8xi1>, vector<8x8xf32>
    %364 = arith.addf %358, %363 : vector<8x8xf32>
    %365 = vector.extract_strided_slice %335 {offsets = [0, 5], sizes = [8, 1], strides = [1, 1]} : vector<8x10xf32> to vector<8x1xf32>
    %cst_94 = arith.constant 0.000000e+00 : f32
    %366 = vector.shape_cast %365 : vector<8x1xf32> to vector<8x1xf32>
    %367 = vector.broadcast %366 : vector<8x1xf32> to vector<8x8xf32>
    %368 = vector.broadcast %cst_94 : f32 to vector<8x8xf32>
    %369 = arith.select %70, %367, %368 : vector<8x8xi1>, vector<8x8xf32>
    %370 = arith.addf %364, %369 : vector<8x8xf32>
    %371 = vector.extract_strided_slice %335 {offsets = [0, 6], sizes = [8, 1], strides = [1, 1]} : vector<8x10xf32> to vector<8x1xf32>
    %cst_95 = arith.constant 0.000000e+00 : f32
    %372 = vector.shape_cast %371 : vector<8x1xf32> to vector<8x1xf32>
    %373 = vector.broadcast %372 : vector<8x1xf32> to vector<8x8xf32>
    %374 = vector.broadcast %cst_95 : f32 to vector<8x8xf32>
    %375 = arith.select %72, %373, %374 : vector<8x8xi1>, vector<8x8xf32>
    %376 = arith.addf %370, %375 : vector<8x8xf32>
    %377 = vector.extract_strided_slice %335 {offsets = [0, 7], sizes = [8, 1], strides = [1, 1]} : vector<8x10xf32> to vector<8x1xf32>
    %cst_96 = arith.constant 0.000000e+00 : f32
    %378 = vector.shape_cast %377 : vector<8x1xf32> to vector<8x1xf32>
    %379 = vector.broadcast %378 : vector<8x1xf32> to vector<8x8xf32>
    %380 = vector.broadcast %cst_96 : f32 to vector<8x8xf32>
    %381 = arith.select %74, %379, %380 : vector<8x8xi1>, vector<8x8xf32>
    %382 = arith.addf %376, %381 : vector<8x8xf32>
    %383 = vector.extract_strided_slice %335 {offsets = [0, 8], sizes = [8, 1], strides = [1, 1]} : vector<8x10xf32> to vector<8x1xf32>
    %cst_97 = arith.constant 0.000000e+00 : f32
    %384 = vector.shape_cast %383 : vector<8x1xf32> to vector<8x1xf32>
    %385 = vector.broadcast %384 : vector<8x1xf32> to vector<8x8xf32>
    %386 = vector.broadcast %cst_97 : f32 to vector<8x8xf32>
    %387 = arith.select %76, %385, %386 : vector<8x8xi1>, vector<8x8xf32>
    %388 = arith.addf %382, %387 : vector<8x8xf32>
    %389 = vector.extract_strided_slice %335 {offsets = [0, 9], sizes = [8, 1], strides = [1, 1]} : vector<8x10xf32> to vector<8x1xf32>
    %cst_98 = arith.constant 0.000000e+00 : f32
    %390 = vector.shape_cast %389 : vector<8x1xf32> to vector<8x1xf32>
    %391 = vector.broadcast %390 : vector<8x1xf32> to vector<8x8xf32>
    %392 = vector.broadcast %cst_98 : f32 to vector<8x8xf32>
    %393 = arith.select %78, %391, %392 : vector<8x8xi1>, vector<8x8xf32>
    %394 = arith.addf %388, %393 : vector<8x8xf32>
    %395 = arith.addf %334, %394 : vector<8x8xf32>
    %cst_99 = arith.constant dense<0xFF800000> : vector<8xf32>
    %396 = vector.multi_reduction <maximumf>, %395, %cst_99 [1] : vector<8x8xf32> to vector<8xf32>
    %397 = vector.shape_cast %396 : vector<8xf32> to vector<8x1xf32>
    %398 = vector.broadcast %397 : vector<8x1xf32> to vector<8x8xf32>
    %399 = arith.subf %395, %398 : vector<8x8xf32>
    %400 = math.exp %399 : vector<8x8xf32>
    %cst_100 = arith.constant dense<0.000000e+00> : vector<8xf32>
    %401 = vector.multi_reduction <add>, %400, %cst_100 [1] : vector<8x8xf32> to vector<8xf32>
    %402 = vector.shape_cast %401 : vector<8xf32> to vector<8x1xf32>
    %403 = vector.broadcast %402 : vector<8x1xf32> to vector<8x8xf32>
    %404 = arith.divf %400, %403 : vector<8x8xf32>
    %405 = arith.truncf %404 : vector<8x8xf32> to vector<8x8xbf16>
    %cst_101 = arith.constant dense<0.000000e+00> : vector<8x8xf32>
    %406 = tpu.matmul %405, %333, %cst_101 {dimension_numbers = #tpu.dot_dimension_numbers<[1], [0], [0], [1], [0, 0, 1, 1], [], []>} : vector<8x8xbf16>, vector<8x8xbf16>, vector<8x8xf32> -> vector<8x8xf32>
    %c0_102 = arith.constant 0 : index
    %c0_103 = arith.constant 0 : index
    %c24 = arith.constant 24 : index
    %407 = vector.load %arg13[%c0_102, %c0_103, %c24] : memref<2x8x32xf32, #tpu.memory_space<vmem>>, vector<1x8x8xf32>
    %408 = vector.shape_cast %407 : vector<1x8x8xf32> to vector<8x8xf32>
    %409 = vector.shape_cast %406 : vector<8x8xf32> to vector<1x8x8xf32>
    tpu.vector_store %arg13[%c0_102, %c0_103, %c24], %409 {strides = array<i32>} : memref<2x8x32xf32, #tpu.memory_space<vmem>>, vector<1x8x8xf32>,
    %c1 = arith.constant 1 : index
    %c0_104 = arith.constant 0 : index
    %c0_105 = arith.constant 0 : index
    %410 = vector.load %arg10[%c1, %c0_104, %c0_105] : memref<2x8x2xf32, #tpu.memory_space<vmem>>, vector<1x8x2xf32>
    %411 = vector.shape_cast %410 : vector<1x8x2xf32> to vector<8x2xf32>
    %c1_106 = arith.constant 1 : index
    %c0_107 = arith.constant 0 : index
    %c0_108 = arith.constant 0 : index
    %412 = vector.load %arg11[%c1_106, %c0_107, %c0_108] : memref<2x2x8xf32, #tpu.memory_space<vmem>>, vector<1x2x8xf32>
    %413 = vector.shape_cast %412 : vector<1x2x8xf32> to vector<2x8xf32>
    %414 = vector.extract_strided_slice %411 {offsets = [0, 0], sizes = [8, 1], strides = [1, 1]} : vector<8x2xf32> to vector<8x1xf32>
    %415 = vector.extract_strided_slice %413 {offsets = [0, 0], sizes = [1, 8], strides = [1, 1]} : vector<2x8xf32> to vector<1x8xf32>
    %416 = vector.broadcast %414 : vector<8x1xf32> to vector<8x8xf32>
    %417 = vector.broadcast %415 : vector<1x8xf32> to vector<8x8xf32>
    %418 = arith.subf %416, %417 : vector<8x8xf32>
    %419 = vector.extract_strided_slice %411 {offsets = [0, 1], sizes = [8, 1], strides = [1, 1]} : vector<8x2xf32> to vector<8x1xf32>
    %420 = vector.extract_strided_slice %413 {offsets = [1, 0], sizes = [1, 8], strides = [1, 1]} : vector<2x8xf32> to vector<1x8xf32>
    %421 = vector.broadcast %419 : vector<8x1xf32> to vector<8x8xf32>
    %422 = vector.broadcast %420 : vector<1x8xf32> to vector<8x8xf32>
    %423 = arith.subf %421, %422 : vector<8x8xf32>
    %424 = arith.mulf %418, %418 : vector<8x8xf32>
    %425 = arith.mulf %423, %423 : vector<8x8xf32>
    %426 = arith.addf %424, %425 : vector<8x8xf32>
    %427 = math.sqrt %426 : vector<8x8xf32>
    %cst_109 = arith.constant 141421.359 : f32
    %428 = vector.broadcast %cst_109 : f32 to vector<8x8xf32>
    %429 = arith.divf %427, %428 : vector<8x8xf32>
    %cst_110 = arith.constant 9.000000e+00 : f32
    %430 = vector.broadcast %cst_110 : f32 to vector<8x8xf32>
    %431 = arith.mulf %429, %430 : vector<8x8xf32>
    %432 = math.roundeven %431 : vector<8x8xf32>
    %cst_111 = arith.constant 0.000000e+00 : f32
    %cst_112 = arith.constant 9.000000e+00 : f32
    %433 = vector.broadcast %cst_111 : f32 to vector<8x8xf32>
    %434 = arith.maximumf %433, %432 : vector<8x8xf32>
    %435 = vector.broadcast %cst_112 : f32 to vector<8x8xf32>
    %436 = arith.minimumf %435, %434 : vector<8x8xf32>
    %437 = arith.fptosi %436 : vector<8x8xf32> to vector<8x8xi32>
    %c0_i32_113 = arith.constant 0 : i32
    %438 = vector.broadcast %c0_i32_113 : i32 to vector<8x8xi32>
    %439 = arith.cmpi eq, %437, %438 : vector<8x8xi32>
    %c1_i32_114 = arith.constant 1 : i32
    %440 = vector.broadcast %c1_i32_114 : i32 to vector<8x8xi32>
    %441 = arith.cmpi eq, %437, %440 : vector<8x8xi32>
    %c2_i32_115 = arith.constant 2 : i32
    %442 = vector.broadcast %c2_i32_115 : i32 to vector<8x8xi32>
    %443 = arith.cmpi eq, %437, %442 : vector<8x8xi32>
    %c3_i32_116 = arith.constant 3 : i32
    %444 = vector.broadcast %c3_i32_116 : i32 to vector<8x8xi32>
    %445 = arith.cmpi eq, %437, %444 : vector<8x8xi32>
    %c4_i32_117 = arith.constant 4 : i32
    %446 = vector.broadcast %c4_i32_117 : i32 to vector<8x8xi32>
    %447 = arith.cmpi eq, %437, %446 : vector<8x8xi32>
    %c5_i32_118 = arith.constant 5 : i32
    %448 = vector.broadcast %c5_i32_118 : i32 to vector<8x8xi32>
    %449 = arith.cmpi eq, %437, %448 : vector<8x8xi32>
    %c6_i32_119 = arith.constant 6 : i32
    %450 = vector.broadcast %c6_i32_119 : i32 to vector<8x8xi32>
    %451 = arith.cmpi eq, %437, %450 : vector<8x8xi32>
    %c7_i32_120 = arith.constant 7 : i32
    %452 = vector.broadcast %c7_i32_120 : i32 to vector<8x8xi32>
    %453 = arith.cmpi eq, %437, %452 : vector<8x8xi32>
    %c8_i32_121 = arith.constant 8 : i32
    %454 = vector.broadcast %c8_i32_121 : i32 to vector<8x8xi32>
    %455 = arith.cmpi eq, %437, %454 : vector<8x8xi32>
    %c9_i32_122 = arith.constant 9 : i32
    %456 = vector.broadcast %c9_i32_122 : i32 to vector<8x8xi32>
    %457 = arith.cmpi eq, %437, %456 : vector<8x8xi32>
    %458 = vector.extract_strided_slice %20 {offsets = [8, 0], sizes = [8, 32], strides = [1, 1]} : vector<16x32xf32> to vector<8x32xf32>
    %459 = vector.extract_strided_slice %24 {offsets = [8, 0], sizes = [8, 32], strides = [1, 1]} : vector<16x32xf32> to vector<8x32xf32>
    %460 = vector.extract_strided_slice %28 {offsets = [8, 0], sizes = [8, 32], strides = [1, 1]} : vector<16x32xf32> to vector<8x32xf32>
    %461 = vector.extract_strided_slice %458 {offsets = [0, 0], sizes = [8, 8], strides = [1, 1]} : vector<8x32xf32> to vector<8x8xf32>
    %462 = arith.truncf %461 : vector<8x8xf32> to vector<8x8xbf16>
    %463 = vector.extract_strided_slice %459 {offsets = [0, 0], sizes = [8, 8], strides = [1, 1]} : vector<8x32xf32> to vector<8x8xf32>
    %464 = arith.truncf %463 : vector<8x8xf32> to vector<8x8xbf16>
    %465 = vector.extract_strided_slice %460 {offsets = [0, 0], sizes = [8, 8], strides = [1, 1]} : vector<8x32xf32> to vector<8x8xf32>
    %466 = arith.truncf %465 : vector<8x8xf32> to vector<8x8xbf16>
    %cst_123 = arith.constant dense<0.000000e+00> : vector<8x8xf32>
    %467 = tpu.matmul %462, %464, %cst_123 {dimension_numbers = #tpu.dot_dimension_numbers<[1], [1], [0], [0], [0, 0, 1, 0], [], []>} : vector<8x8xbf16>, vector<8x8xbf16>, vector<8x8xf32> -> vector<8x8xf32>
    %cst_124 = arith.constant dense<0.000000e+00> : vector<8x10xf32>
    %468 = tpu.matmul %462, %30, %cst_124 {dimension_numbers = #tpu.dot_dimension_numbers<[1], [0], [0], [1], [0, 0, 1, 1], [], []>} : vector<8x8xbf16>, vector<8x10xbf16>, vector<8x10xf32> -> vector<8x10xf32>
    %469 = vector.extract_strided_slice %468 {offsets = [0, 0], sizes = [8, 1], strides = [1, 1]} : vector<8x10xf32> to vector<8x1xf32>
    %cst_125 = arith.constant 0.000000e+00 : f32
    %470 = vector.shape_cast %469 : vector<8x1xf32> to vector<8x1xf32>
    %471 = vector.broadcast %470 : vector<8x1xf32> to vector<8x8xf32>
    %472 = vector.broadcast %cst_125 : f32 to vector<8x8xf32>
    %473 = arith.select %439, %471, %472 : vector<8x8xi1>, vector<8x8xf32>
    %474 = vector.extract_strided_slice %468 {offsets = [0, 1], sizes = [8, 1], strides = [1, 1]} : vector<8x10xf32> to vector<8x1xf32>
    %cst_126 = arith.constant 0.000000e+00 : f32
    %475 = vector.shape_cast %474 : vector<8x1xf32> to vector<8x1xf32>
    %476 = vector.broadcast %475 : vector<8x1xf32> to vector<8x8xf32>
    %477 = vector.broadcast %cst_126 : f32 to vector<8x8xf32>
    %478 = arith.select %441, %476, %477 : vector<8x8xi1>, vector<8x8xf32>
    %479 = arith.addf %473, %478 : vector<8x8xf32>
    %480 = vector.extract_strided_slice %468 {offsets = [0, 2], sizes = [8, 1], strides = [1, 1]} : vector<8x10xf32> to vector<8x1xf32>
    %cst_127 = arith.constant 0.000000e+00 : f32
    %481 = vector.shape_cast %480 : vector<8x1xf32> to vector<8x1xf32>
    %482 = vector.broadcast %481 : vector<8x1xf32> to vector<8x8xf32>
    %483 = vector.broadcast %cst_127 : f32 to vector<8x8xf32>
    %484 = arith.select %443, %482, %483 : vector<8x8xi1>, vector<8x8xf32>
    %485 = arith.addf %479, %484 : vector<8x8xf32>
    %486 = vector.extract_strided_slice %468 {offsets = [0, 3], sizes = [8, 1], strides = [1, 1]} : vector<8x10xf32> to vector<8x1xf32>
    %cst_128 = arith.constant 0.000000e+00 : f32
    %487 = vector.shape_cast %486 : vector<8x1xf32> to vector<8x1xf32>
    %488 = vector.broadcast %487 : vector<8x1xf32> to vector<8x8xf32>
    %489 = vector.broadcast %cst_128 : f32 to vector<8x8xf32>
    %490 = arith.select %445, %488, %489 : vector<8x8xi1>, vector<8x8xf32>
    %491 = arith.addf %485, %490 : vector<8x8xf32>
    %492 = vector.extract_strided_slice %468 {offsets = [0, 4], sizes = [8, 1], strides = [1, 1]} : vector<8x10xf32> to vector<8x1xf32>
    %cst_129 = arith.constant 0.000000e+00 : f32
    %493 = vector.shape_cast %492 : vector<8x1xf32> to vector<8x1xf32>
    %494 = vector.broadcast %493 : vector<8x1xf32> to vector<8x8xf32>
    %495 = vector.broadcast %cst_129 : f32 to vector<8x8xf32>
    %496 = arith.select %447, %494, %495 : vector<8x8xi1>, vector<8x8xf32>
    %497 = arith.addf %491, %496 : vector<8x8xf32>
    %498 = vector.extract_strided_slice %468 {offsets = [0, 5], sizes = [8, 1], strides = [1, 1]} : vector<8x10xf32> to vector<8x1xf32>
    %cst_130 = arith.constant 0.000000e+00 : f32
    %499 = vector.shape_cast %498 : vector<8x1xf32> to vector<8x1xf32>
    %500 = vector.broadcast %499 : vector<8x1xf32> to vector<8x8xf32>
    %501 = vector.broadcast %cst_130 : f32 to vector<8x8xf32>
    %502 = arith.select %449, %500, %501 : vector<8x8xi1>, vector<8x8xf32>
    %503 = arith.addf %497, %502 : vector<8x8xf32>
    %504 = vector.extract_strided_slice %468 {offsets = [0, 6], sizes = [8, 1], strides = [1, 1]} : vector<8x10xf32> to vector<8x1xf32>
    %cst_131 = arith.constant 0.000000e+00 : f32
    %505 = vector.shape_cast %504 : vector<8x1xf32> to vector<8x1xf32>
    %506 = vector.broadcast %505 : vector<8x1xf32> to vector<8x8xf32>
    %507 = vector.broadcast %cst_131 : f32 to vector<8x8xf32>
    %508 = arith.select %451, %506, %507 : vector<8x8xi1>, vector<8x8xf32>
    %509 = arith.addf %503, %508 : vector<8x8xf32>
    %510 = vector.extract_strided_slice %468 {offsets = [0, 7], sizes = [8, 1], strides = [1, 1]} : vector<8x10xf32> to vector<8x1xf32>
    %cst_132 = arith.constant 0.000000e+00 : f32
    %511 = vector.shape_cast %510 : vector<8x1xf32> to vector<8x1xf32>
    %512 = vector.broadcast %511 : vector<8x1xf32> to vector<8x8xf32>
    %513 = vector.broadcast %cst_132 : f32 to vector<8x8xf32>
    %514 = arith.select %453, %512, %513 : vector<8x8xi1>, vector<8x8xf32>
    %515 = arith.addf %509, %514 : vector<8x8xf32>
    %516 = vector.extract_strided_slice %468 {offsets = [0, 8], sizes = [8, 1], strides = [1, 1]} : vector<8x10xf32> to vector<8x1xf32>
    %cst_133 = arith.constant 0.000000e+00 : f32
    %517 = vector.shape_cast %516 : vector<8x1xf32> to vector<8x1xf32>
    %518 = vector.broadcast %517 : vector<8x1xf32> to vector<8x8xf32>
    %519 = vector.broadcast %cst_133 : f32 to vector<8x8xf32>
    %520 = arith.select %455, %518, %519 : vector<8x8xi1>, vector<8x8xf32>
    %521 = arith.addf %515, %520 : vector<8x8xf32>
    %522 = vector.extract_strided_slice %468 {offsets = [0, 9], sizes = [8, 1], strides = [1, 1]} : vector<8x10xf32> to vector<8x1xf32>
    %cst_134 = arith.constant 0.000000e+00 : f32
    %523 = vector.shape_cast %522 : vector<8x1xf32> to vector<8x1xf32>
    %524 = vector.broadcast %523 : vector<8x1xf32> to vector<8x8xf32>
    %525 = vector.broadcast %cst_134 : f32 to vector<8x8xf32>
    %526 = arith.select %457, %524, %525 : vector<8x8xi1>, vector<8x8xf32>
    %527 = arith.addf %521, %526 : vector<8x8xf32>
    %528 = arith.addf %467, %527 : vector<8x8xf32>
    %cst_135 = arith.constant dense<0xFF800000> : vector<8xf32>
    %529 = vector.multi_reduction <maximumf>, %528, %cst_135 [1] : vector<8x8xf32> to vector<8xf32>
    %530 = vector.shape_cast %529 : vector<8xf32> to vector<8x1xf32>
    %531 = vector.broadcast %530 : vector<8x1xf32> to vector<8x8xf32>
    %532 = arith.subf %528, %531 : vector<8x8xf32>
    %533 = math.exp %532 : vector<8x8xf32>
    %cst_136 = arith.constant dense<0.000000e+00> : vector<8xf32>
    %534 = vector.multi_reduction <add>, %533, %cst_136 [1] : vector<8x8xf32> to vector<8xf32>
    %535 = vector.shape_cast %534 : vector<8xf32> to vector<8x1xf32>
    %536 = vector.broadcast %535 : vector<8x1xf32> to vector<8x8xf32>
    %537 = arith.divf %533, %536 : vector<8x8xf32>
    %538 = arith.truncf %537 : vector<8x8xf32> to vector<8x8xbf16>
    %cst_137 = arith.constant dense<0.000000e+00> : vector<8x8xf32>
    %539 = tpu.matmul %538, %466, %cst_137 {dimension_numbers = #tpu.dot_dimension_numbers<[1], [0], [0], [1], [0, 0, 1, 1], [], []>} : vector<8x8xbf16>, vector<8x8xbf16>, vector<8x8xf32> -> vector<8x8xf32>
    %c1_138 = arith.constant 1 : index
    %c0_139 = arith.constant 0 : index
    %c0_140 = arith.constant 0 : index
    %540 = vector.load %arg13[%c1_138, %c0_139, %c0_140] : memref<2x8x32xf32, #tpu.memory_space<vmem>>, vector<1x8x8xf32>
    %541 = vector.shape_cast %540 : vector<1x8x8xf32> to vector<8x8xf32>
    %542 = vector.shape_cast %539 : vector<8x8xf32> to vector<1x8x8xf32>
    tpu.vector_store %arg13[%c1_138, %c0_139, %c0_140], %542 {strides = array<i32>} : memref<2x8x32xf32, #tpu.memory_space<vmem>>, vector<1x8x8xf32>,
    %543 = vector.extract_strided_slice %458 {offsets = [0, 8], sizes = [8, 8], strides = [1, 1]} : vector<8x32xf32> to vector<8x8xf32>
    %544 = arith.truncf %543 : vector<8x8xf32> to vector<8x8xbf16>
    %545 = vector.extract_strided_slice %459 {offsets = [0, 8], sizes = [8, 8], strides = [1, 1]} : vector<8x32xf32> to vector<8x8xf32>
    %546 = arith.truncf %545 : vector<8x8xf32> to vector<8x8xbf16>
    %547 = vector.extract_strided_slice %460 {offsets = [0, 8], sizes = [8, 8], strides = [1, 1]} : vector<8x32xf32> to vector<8x8xf32>
    %548 = arith.truncf %547 : vector<8x8xf32> to vector<8x8xbf16>
    %cst_141 = arith.constant dense<0.000000e+00> : vector<8x8xf32>
    %549 = tpu.matmul %544, %546, %cst_141 {dimension_numbers = #tpu.dot_dimension_numbers<[1], [1], [0], [0], [0, 0, 1, 0], [], []>} : vector<8x8xbf16>, vector<8x8xbf16>, vector<8x8xf32> -> vector<8x8xf32>
    %cst_142 = arith.constant dense<0.000000e+00> : vector<8x10xf32>
    %550 = tpu.matmul %544, %30, %cst_142 {dimension_numbers = #tpu.dot_dimension_numbers<[1], [0], [0], [1], [0, 0, 1, 1], [], []>} : vector<8x8xbf16>, vector<8x10xbf16>, vector<8x10xf32> -> vector<8x10xf32>
    %551 = vector.extract_strided_slice %550 {offsets = [0, 0], sizes = [8, 1], strides = [1, 1]} : vector<8x10xf32> to vector<8x1xf32>
    %cst_143 = arith.constant 0.000000e+00 : f32
    %552 = vector.shape_cast %551 : vector<8x1xf32> to vector<8x1xf32>
    %553 = vector.broadcast %552 : vector<8x1xf32> to vector<8x8xf32>
    %554 = vector.broadcast %cst_143 : f32 to vector<8x8xf32>
    %555 = arith.select %439, %553, %554 : vector<8x8xi1>, vector<8x8xf32>
    %556 = vector.extract_strided_slice %550 {offsets = [0, 1], sizes = [8, 1], strides = [1, 1]} : vector<8x10xf32> to vector<8x1xf32>
    %cst_144 = arith.constant 0.000000e+00 : f32
    %557 = vector.shape_cast %556 : vector<8x1xf32> to vector<8x1xf32>
    %558 = vector.broadcast %557 : vector<8x1xf32> to vector<8x8xf32>
    %559 = vector.broadcast %cst_144 : f32 to vector<8x8xf32>
    %560 = arith.select %441, %558, %559 : vector<8x8xi1>, vector<8x8xf32>
    %561 = arith.addf %555, %560 : vector<8x8xf32>
    %562 = vector.extract_strided_slice %550 {offsets = [0, 2], sizes = [8, 1], strides = [1, 1]} : vector<8x10xf32> to vector<8x1xf32>
    %cst_145 = arith.constant 0.000000e+00 : f32
    %563 = vector.shape_cast %562 : vector<8x1xf32> to vector<8x1xf32>
    %564 = vector.broadcast %563 : vector<8x1xf32> to vector<8x8xf32>
    %565 = vector.broadcast %cst_145 : f32 to vector<8x8xf32>
    %566 = arith.select %443, %564, %565 : vector<8x8xi1>, vector<8x8xf32>
    %567 = arith.addf %561, %566 : vector<8x8xf32>
    %568 = vector.extract_strided_slice %550 {offsets = [0, 3], sizes = [8, 1], strides = [1, 1]} : vector<8x10xf32> to vector<8x1xf32>
    %cst_146 = arith.constant 0.000000e+00 : f32
    %569 = vector.shape_cast %568 : vector<8x1xf32> to vector<8x1xf32>
    %570 = vector.broadcast %569 : vector<8x1xf32> to vector<8x8xf32>
    %571 = vector.broadcast %cst_146 : f32 to vector<8x8xf32>
    %572 = arith.select %445, %570, %571 : vector<8x8xi1>, vector<8x8xf32>
    %573 = arith.addf %567, %572 : vector<8x8xf32>
    %574 = vector.extract_strided_slice %550 {offsets = [0, 4], sizes = [8, 1], strides = [1, 1]} : vector<8x10xf32> to vector<8x1xf32>
    %cst_147 = arith.constant 0.000000e+00 : f32
    %575 = vector.shape_cast %574 : vector<8x1xf32> to vector<8x1xf32>
    %576 = vector.broadcast %575 : vector<8x1xf32> to vector<8x8xf32>
    %577 = vector.broadcast %cst_147 : f32 to vector<8x8xf32>
    %578 = arith.select %447, %576, %577 : vector<8x8xi1>, vector<8x8xf32>
    %579 = arith.addf %573, %578 : vector<8x8xf32>
    %580 = vector.extract_strided_slice %550 {offsets = [0, 5], sizes = [8, 1], strides = [1, 1]} : vector<8x10xf32> to vector<8x1xf32>
    %cst_148 = arith.constant 0.000000e+00 : f32
    %581 = vector.shape_cast %580 : vector<8x1xf32> to vector<8x1xf32>
    %582 = vector.broadcast %581 : vector<8x1xf32> to vector<8x8xf32>
    %583 = vector.broadcast %cst_148 : f32 to vector<8x8xf32>
    %584 = arith.select %449, %582, %583 : vector<8x8xi1>, vector<8x8xf32>
    %585 = arith.addf %579, %584 : vector<8x8xf32>
    %586 = vector.extract_strided_slice %550 {offsets = [0, 6], sizes = [8, 1], strides = [1, 1]} : vector<8x10xf32> to vector<8x1xf32>
    %cst_149 = arith.constant 0.000000e+00 : f32
    %587 = vector.shape_cast %586 : vector<8x1xf32> to vector<8x1xf32>
    %588 = vector.broadcast %587 : vector<8x1xf32> to vector<8x8xf32>
    %589 = vector.broadcast %cst_149 : f32 to vector<8x8xf32>
    %590 = arith.select %451, %588, %589 : vector<8x8xi1>, vector<8x8xf32>
    %591 = arith.addf %585, %590 : vector<8x8xf32>
    %592 = vector.extract_strided_slice %550 {offsets = [0, 7], sizes = [8, 1], strides = [1, 1]} : vector<8x10xf32> to vector<8x1xf32>
    %cst_150 = arith.constant 0.000000e+00 : f32
    %593 = vector.shape_cast %592 : vector<8x1xf32> to vector<8x1xf32>
    %594 = vector.broadcast %593 : vector<8x1xf32> to vector<8x8xf32>
    %595 = vector.broadcast %cst_150 : f32 to vector<8x8xf32>
    %596 = arith.select %453, %594, %595 : vector<8x8xi1>, vector<8x8xf32>
    %597 = arith.addf %591, %596 : vector<8x8xf32>
    %598 = vector.extract_strided_slice %550 {offsets = [0, 8], sizes = [8, 1], strides = [1, 1]} : vector<8x10xf32> to vector<8x1xf32>
    %cst_151 = arith.constant 0.000000e+00 : f32
    %599 = vector.shape_cast %598 : vector<8x1xf32> to vector<8x1xf32>
    %600 = vector.broadcast %599 : vector<8x1xf32> to vector<8x8xf32>
    %601 = vector.broadcast %cst_151 : f32 to vector<8x8xf32>
    %602 = arith.select %455, %600, %601 : vector<8x8xi1>, vector<8x8xf32>
    %603 = arith.addf %597, %602 : vector<8x8xf32>
    %604 = vector.extract_strided_slice %550 {offsets = [0, 9], sizes = [8, 1], strides = [1, 1]} : vector<8x10xf32> to vector<8x1xf32>
    %cst_152 = arith.constant 0.000000e+00 : f32
    %605 = vector.shape_cast %604 : vector<8x1xf32> to vector<8x1xf32>
    %606 = vector.broadcast %605 : vector<8x1xf32> to vector<8x8xf32>
    %607 = vector.broadcast %cst_152 : f32 to vector<8x8xf32>
    %608 = arith.select %457, %606, %607 : vector<8x8xi1>, vector<8x8xf32>
    %609 = arith.addf %603, %608 : vector<8x8xf32>
    %610 = arith.addf %549, %609 : vector<8x8xf32>
    %cst_153 = arith.constant dense<0xFF800000> : vector<8xf32>
    %611 = vector.multi_reduction <maximumf>, %610, %cst_153 [1] : vector<8x8xf32> to vector<8xf32>
    %612 = vector.shape_cast %611 : vector<8xf32> to vector<8x1xf32>
    %613 = vector.broadcast %612 : vector<8x1xf32> to vector<8x8xf32>
    %614 = arith.subf %610, %613 : vector<8x8xf32>
    %615 = math.exp %614 : vector<8x8xf32>
    %cst_154 = arith.constant dense<0.000000e+00> : vector<8xf32>
    %616 = vector.multi_reduction <add>, %615, %cst_154 [1] : vector<8x8xf32> to vector<8xf32>
    %617 = vector.shape_cast %616 : vector<8xf32> to vector<8x1xf32>
    %618 = vector.broadcast %617 : vector<8x1xf32> to vector<8x8xf32>
    %619 = arith.divf %615, %618 : vector<8x8xf32>
    %620 = arith.truncf %619 : vector<8x8xf32> to vector<8x8xbf16>
    %cst_155 = arith.constant dense<0.000000e+00> : vector<8x8xf32>
    %621 = tpu.matmul %620, %548, %cst_155 {dimension_numbers = #tpu.dot_dimension_numbers<[1], [0], [0], [1], [0, 0, 1, 1], [], []>} : vector<8x8xbf16>, vector<8x8xbf16>, vector<8x8xf32> -> vector<8x8xf32>
    %c1_156 = arith.constant 1 : index
    %c0_157 = arith.constant 0 : index
    %c8_158 = arith.constant 8 : index
    %622 = vector.load %arg13[%c1_156, %c0_157, %c8_158] : memref<2x8x32xf32, #tpu.memory_space<vmem>>, vector<1x8x8xf32>
    %623 = vector.shape_cast %622 : vector<1x8x8xf32> to vector<8x8xf32>
    %624 = vector.shape_cast %621 : vector<8x8xf32> to vector<1x8x8xf32>
    tpu.vector_store %arg13[%c1_156, %c0_157, %c8_158], %624 {strides = array<i32>} : memref<2x8x32xf32, #tpu.memory_space<vmem>>, vector<1x8x8xf32>,
    %625 = vector.extract_strided_slice %458 {offsets = [0, 16], sizes = [8, 8], strides = [1, 1]} : vector<8x32xf32> to vector<8x8xf32>
    %626 = arith.truncf %625 : vector<8x8xf32> to vector<8x8xbf16>
    %627 = vector.extract_strided_slice %459 {offsets = [0, 16], sizes = [8, 8], strides = [1, 1]} : vector<8x32xf32> to vector<8x8xf32>
    %628 = arith.truncf %627 : vector<8x8xf32> to vector<8x8xbf16>
    %629 = vector.extract_strided_slice %460 {offsets = [0, 16], sizes = [8, 8], strides = [1, 1]} : vector<8x32xf32> to vector<8x8xf32>
    %630 = arith.truncf %629 : vector<8x8xf32> to vector<8x8xbf16>
    %cst_159 = arith.constant dense<0.000000e+00> : vector<8x8xf32>
    %631 = tpu.matmul %626, %628, %cst_159 {dimension_numbers = #tpu.dot_dimension_numbers<[1], [1], [0], [0], [0, 0, 1, 0], [], []>} : vector<8x8xbf16>, vector<8x8xbf16>, vector<8x8xf32> -> vector<8x8xf32>
    %cst_160 = arith.constant dense<0.000000e+00> : vector<8x10xf32>
    %632 = tpu.matmul %626, %30, %cst_160 {dimension_numbers = #tpu.dot_dimension_numbers<[1], [0], [0], [1], [0, 0, 1, 1], [], []>} : vector<8x8xbf16>, vector<8x10xbf16>, vector<8x10xf32> -> vector<8x10xf32>
    %633 = vector.extract_strided_slice %632 {offsets = [0, 0], sizes = [8, 1], strides = [1, 1]} : vector<8x10xf32> to vector<8x1xf32>
    %cst_161 = arith.constant 0.000000e+00 : f32
    %634 = vector.shape_cast %633 : vector<8x1xf32> to vector<8x1xf32>
    %635 = vector.broadcast %634 : vector<8x1xf32> to vector<8x8xf32>
    %636 = vector.broadcast %cst_161 : f32 to vector<8x8xf32>
    %637 = arith.select %439, %635, %636 : vector<8x8xi1>, vector<8x8xf32>
    %638 = vector.extract_strided_slice %632 {offsets = [0, 1], sizes = [8, 1], strides = [1, 1]} : vector<8x10xf32> to vector<8x1xf32>
    %cst_162 = arith.constant 0.000000e+00 : f32
    %639 = vector.shape_cast %638 : vector<8x1xf32> to vector<8x1xf32>
    %640 = vector.broadcast %639 : vector<8x1xf32> to vector<8x8xf32>
    %641 = vector.broadcast %cst_162 : f32 to vector<8x8xf32>
    %642 = arith.select %441, %640, %641 : vector<8x8xi1>, vector<8x8xf32>
    %643 = arith.addf %637, %642 : vector<8x8xf32>
    %644 = vector.extract_strided_slice %632 {offsets = [0, 2], sizes = [8, 1], strides = [1, 1]} : vector<8x10xf32> to vector<8x1xf32>
    %cst_163 = arith.constant 0.000000e+00 : f32
    %645 = vector.shape_cast %644 : vector<8x1xf32> to vector<8x1xf32>
    %646 = vector.broadcast %645 : vector<8x1xf32> to vector<8x8xf32>
    %647 = vector.broadcast %cst_163 : f32 to vector<8x8xf32>
    %648 = arith.select %443, %646, %647 : vector<8x8xi1>, vector<8x8xf32>
    %649 = arith.addf %643, %648 : vector<8x8xf32>
    %650 = vector.extract_strided_slice %632 {offsets = [0, 3], sizes = [8, 1], strides = [1, 1]} : vector<8x10xf32> to vector<8x1xf32>
    %cst_164 = arith.constant 0.000000e+00 : f32
    %651 = vector.shape_cast %650 : vector<8x1xf32> to vector<8x1xf32>
    %652 = vector.broadcast %651 : vector<8x1xf32> to vector<8x8xf32>
    %653 = vector.broadcast %cst_164 : f32 to vector<8x8xf32>
    %654 = arith.select %445, %652, %653 : vector<8x8xi1>, vector<8x8xf32>
    %655 = arith.addf %649, %654 : vector<8x8xf32>
    %656 = vector.extract_strided_slice %632 {offsets = [0, 4], sizes = [8, 1], strides = [1, 1]} : vector<8x10xf32> to vector<8x1xf32>
    %cst_165 = arith.constant 0.000000e+00 : f32
    %657 = vector.shape_cast %656 : vector<8x1xf32> to vector<8x1xf32>
    %658 = vector.broadcast %657 : vector<8x1xf32> to vector<8x8xf32>
    %659 = vector.broadcast %cst_165 : f32 to vector<8x8xf32>
    %660 = arith.select %447, %658, %659 : vector<8x8xi1>, vector<8x8xf32>
    %661 = arith.addf %655, %660 : vector<8x8xf32>
    %662 = vector.extract_strided_slice %632 {offsets = [0, 5], sizes = [8, 1], strides = [1, 1]} : vector<8x10xf32> to vector<8x1xf32>
    %cst_166 = arith.constant 0.000000e+00 : f32
    %663 = vector.shape_cast %662 : vector<8x1xf32> to vector<8x1xf32>
    %664 = vector.broadcast %663 : vector<8x1xf32> to vector<8x8xf32>
    %665 = vector.broadcast %cst_166 : f32 to vector<8x8xf32>
    %666 = arith.select %449, %664, %665 : vector<8x8xi1>, vector<8x8xf32>
    %667 = arith.addf %661, %666 : vector<8x8xf32>
    %668 = vector.extract_strided_slice %632 {offsets = [0, 6], sizes = [8, 1], strides = [1, 1]} : vector<8x10xf32> to vector<8x1xf32>
    %cst_167 = arith.constant 0.000000e+00 : f32
    %669 = vector.shape_cast %668 : vector<8x1xf32> to vector<8x1xf32>
    %670 = vector.broadcast %669 : vector<8x1xf32> to vector<8x8xf32>
    %671 = vector.broadcast %cst_167 : f32 to vector<8x8xf32>
    %672 = arith.select %451, %670, %671 : vector<8x8xi1>, vector<8x8xf32>
    %673 = arith.addf %667, %672 : vector<8x8xf32>
    %674 = vector.extract_strided_slice %632 {offsets = [0, 7], sizes = [8, 1], strides = [1, 1]} : vector<8x10xf32> to vector<8x1xf32>
    %cst_168 = arith.constant 0.000000e+00 : f32
    %675 = vector.shape_cast %674 : vector<8x1xf32> to vector<8x1xf32>
    %676 = vector.broadcast %675 : vector<8x1xf32> to vector<8x8xf32>
    %677 = vector.broadcast %cst_168 : f32 to vector<8x8xf32>
    %678 = arith.select %453, %676, %677 : vector<8x8xi1>, vector<8x8xf32>
    %679 = arith.addf %673, %678 : vector<8x8xf32>
    %680 = vector.extract_strided_slice %632 {offsets = [0, 8], sizes = [8, 1], strides = [1, 1]} : vector<8x10xf32> to vector<8x1xf32>
    %cst_169 = arith.constant 0.000000e+00 : f32
    %681 = vector.shape_cast %680 : vector<8x1xf32> to vector<8x1xf32>
    %682 = vector.broadcast %681 : vector<8x1xf32> to vector<8x8xf32>
    %683 = vector.broadcast %cst_169 : f32 to vector<8x8xf32>
    %684 = arith.select %455, %682, %683 : vector<8x8xi1>, vector<8x8xf32>
    %685 = arith.addf %679, %684 : vector<8x8xf32>
    %686 = vector.extract_strided_slice %632 {offsets = [0, 9], sizes = [8, 1], strides = [1, 1]} : vector<8x10xf32> to vector<8x1xf32>
    %cst_170 = arith.constant 0.000000e+00 : f32
    %687 = vector.shape_cast %686 : vector<8x1xf32> to vector<8x1xf32>
    %688 = vector.broadcast %687 : vector<8x1xf32> to vector<8x8xf32>
    %689 = vector.broadcast %cst_170 : f32 to vector<8x8xf32>
    %690 = arith.select %457, %688, %689 : vector<8x8xi1>, vector<8x8xf32>
    %691 = arith.addf %685, %690 : vector<8x8xf32>
    %692 = arith.addf %631, %691 : vector<8x8xf32>
    %cst_171 = arith.constant dense<0xFF800000> : vector<8xf32>
    %693 = vector.multi_reduction <maximumf>, %692, %cst_171 [1] : vector<8x8xf32> to vector<8xf32>
    %694 = vector.shape_cast %693 : vector<8xf32> to vector<8x1xf32>
    %695 = vector.broadcast %694 : vector<8x1xf32> to vector<8x8xf32>
    %696 = arith.subf %692, %695 : vector<8x8xf32>
    %697 = math.exp %696 : vector<8x8xf32>
    %cst_172 = arith.constant dense<0.000000e+00> : vector<8xf32>
    %698 = vector.multi_reduction <add>, %697, %cst_172 [1] : vector<8x8xf32> to vector<8xf32>
    %699 = vector.shape_cast %698 : vector<8xf32> to vector<8x1xf32>
    %700 = vector.broadcast %699 : vector<8x1xf32> to vector<8x8xf32>
    %701 = arith.divf %697, %700 : vector<8x8xf32>
    %702 = arith.truncf %701 : vector<8x8xf32> to vector<8x8xbf16>
    %cst_173 = arith.constant dense<0.000000e+00> : vector<8x8xf32>
    %703 = tpu.matmul %702, %630, %cst_173 {dimension_numbers = #tpu.dot_dimension_numbers<[1], [0], [0], [1], [0, 0, 1, 1], [], []>} : vector<8x8xbf16>, vector<8x8xbf16>, vector<8x8xf32> -> vector<8x8xf32>
    %c1_174 = arith.constant 1 : index
    %c0_175 = arith.constant 0 : index
    %c16_176 = arith.constant 16 : index
    %704 = vector.load %arg13[%c1_174, %c0_175, %c16_176] : memref<2x8x32xf32, #tpu.memory_space<vmem>>, vector<1x8x8xf32>
    %705 = vector.shape_cast %704 : vector<1x8x8xf32> to vector<8x8xf32>
    %706 = vector.shape_cast %703 : vector<8x8xf32> to vector<1x8x8xf32>
    tpu.vector_store %arg13[%c1_174, %c0_175, %c16_176], %706 {strides = array<i32>} : memref<2x8x32xf32, #tpu.memory_space<vmem>>, vector<1x8x8xf32>,
    %707 = vector.extract_strided_slice %458 {offsets = [0, 24], sizes = [8, 8], strides = [1, 1]} : vector<8x32xf32> to vector<8x8xf32>
    %708 = arith.truncf %707 : vector<8x8xf32> to vector<8x8xbf16>
    %709 = vector.extract_strided_slice %459 {offsets = [0, 24], sizes = [8, 8], strides = [1, 1]} : vector<8x32xf32> to vector<8x8xf32>
    %710 = arith.truncf %709 : vector<8x8xf32> to vector<8x8xbf16>
    %711 = vector.extract_strided_slice %460 {offsets = [0, 24], sizes = [8, 8], strides = [1, 1]} : vector<8x32xf32> to vector<8x8xf32>
    %712 = arith.truncf %711 : vector<8x8xf32> to vector<8x8xbf16>
    %cst_177 = arith.constant dense<0.000000e+00> : vector<8x8xf32>
    %713 = tpu.matmul %708, %710, %cst_177 {dimension_numbers = #tpu.dot_dimension_numbers<[1], [1], [0], [0], [0, 0, 1, 0], [], []>} : vector<8x8xbf16>, vector<8x8xbf16>, vector<8x8xf32> -> vector<8x8xf32>
    %cst_178 = arith.constant dense<0.000000e+00> : vector<8x10xf32>
    %714 = tpu.matmul %708, %30, %cst_178 {dimension_numbers = #tpu.dot_dimension_numbers<[1], [0], [0], [1], [0, 0, 1, 1], [], []>} : vector<8x8xbf16>, vector<8x10xbf16>, vector<8x10xf32> -> vector<8x10xf32>
    %715 = vector.extract_strided_slice %714 {offsets = [0, 0], sizes = [8, 1], strides = [1, 1]} : vector<8x10xf32> to vector<8x1xf32>
    %cst_179 = arith.constant 0.000000e+00 : f32
    %716 = vector.shape_cast %715 : vector<8x1xf32> to vector<8x1xf32>
    %717 = vector.broadcast %716 : vector<8x1xf32> to vector<8x8xf32>
    %718 = vector.broadcast %cst_179 : f32 to vector<8x8xf32>
    %719 = arith.select %439, %717, %718 : vector<8x8xi1>, vector<8x8xf32>
    %720 = vector.extract_strided_slice %714 {offsets = [0, 1], sizes = [8, 1], strides = [1, 1]} : vector<8x10xf32> to vector<8x1xf32>
    %cst_180 = arith.constant 0.000000e+00 : f32
    %721 = vector.shape_cast %720 : vector<8x1xf32> to vector<8x1xf32>
    %722 = vector.broadcast %721 : vector<8x1xf32> to vector<8x8xf32>
    %723 = vector.broadcast %cst_180 : f32 to vector<8x8xf32>
    %724 = arith.select %441, %722, %723 : vector<8x8xi1>, vector<8x8xf32>
    %725 = arith.addf %719, %724 : vector<8x8xf32>
    %726 = vector.extract_strided_slice %714 {offsets = [0, 2], sizes = [8, 1], strides = [1, 1]} : vector<8x10xf32> to vector<8x1xf32>
    %cst_181 = arith.constant 0.000000e+00 : f32
    %727 = vector.shape_cast %726 : vector<8x1xf32> to vector<8x1xf32>
    %728 = vector.broadcast %727 : vector<8x1xf32> to vector<8x8xf32>
    %729 = vector.broadcast %cst_181 : f32 to vector<8x8xf32>
    %730 = arith.select %443, %728, %729 : vector<8x8xi1>, vector<8x8xf32>
    %731 = arith.addf %725, %730 : vector<8x8xf32>
    %732 = vector.extract_strided_slice %714 {offsets = [0, 3], sizes = [8, 1], strides = [1, 1]} : vector<8x10xf32> to vector<8x1xf32>
    %cst_182 = arith.constant 0.000000e+00 : f32
    %733 = vector.shape_cast %732 : vector<8x1xf32> to vector<8x1xf32>
    %734 = vector.broadcast %733 : vector<8x1xf32> to vector<8x8xf32>
    %735 = vector.broadcast %cst_182 : f32 to vector<8x8xf32>
    %736 = arith.select %445, %734, %735 : vector<8x8xi1>, vector<8x8xf32>
    %737 = arith.addf %731, %736 : vector<8x8xf32>
    %738 = vector.extract_strided_slice %714 {offsets = [0, 4], sizes = [8, 1], strides = [1, 1]} : vector<8x10xf32> to vector<8x1xf32>
    %cst_183 = arith.constant 0.000000e+00 : f32
    %739 = vector.shape_cast %738 : vector<8x1xf32> to vector<8x1xf32>
    %740 = vector.broadcast %739 : vector<8x1xf32> to vector<8x8xf32>
    %741 = vector.broadcast %cst_183 : f32 to vector<8x8xf32>
    %742 = arith.select %447, %740, %741 : vector<8x8xi1>, vector<8x8xf32>
    %743 = arith.addf %737, %742 : vector<8x8xf32>
    %744 = vector.extract_strided_slice %714 {offsets = [0, 5], sizes = [8, 1], strides = [1, 1]} : vector<8x10xf32> to vector<8x1xf32>
    %cst_184 = arith.constant 0.000000e+00 : f32
    %745 = vector.shape_cast %744 : vector<8x1xf32> to vector<8x1xf32>
    %746 = vector.broadcast %745 : vector<8x1xf32> to vector<8x8xf32>
    %747 = vector.broadcast %cst_184 : f32 to vector<8x8xf32>
    %748 = arith.select %449, %746, %747 : vector<8x8xi1>, vector<8x8xf32>
    %749 = arith.addf %743, %748 : vector<8x8xf32>
    %750 = vector.extract_strided_slice %714 {offsets = [0, 6], sizes = [8, 1], strides = [1, 1]} : vector<8x10xf32> to vector<8x1xf32>
    %cst_185 = arith.constant 0.000000e+00 : f32
    %751 = vector.shape_cast %750 : vector<8x1xf32> to vector<8x1xf32>
    %752 = vector.broadcast %751 : vector<8x1xf32> to vector<8x8xf32>
    %753 = vector.broadcast %cst_185 : f32 to vector<8x8xf32>
    %754 = arith.select %451, %752, %753 : vector<8x8xi1>, vector<8x8xf32>
    %755 = arith.addf %749, %754 : vector<8x8xf32>
    %756 = vector.extract_strided_slice %714 {offsets = [0, 7], sizes = [8, 1], strides = [1, 1]} : vector<8x10xf32> to vector<8x1xf32>
    %cst_186 = arith.constant 0.000000e+00 : f32
    %757 = vector.shape_cast %756 : vector<8x1xf32> to vector<8x1xf32>
    %758 = vector.broadcast %757 : vector<8x1xf32> to vector<8x8xf32>
    %759 = vector.broadcast %cst_186 : f32 to vector<8x8xf32>
    %760 = arith.select %453, %758, %759 : vector<8x8xi1>, vector<8x8xf32>
    %761 = arith.addf %755, %760 : vector<8x8xf32>
    %762 = vector.extract_strided_slice %714 {offsets = [0, 8], sizes = [8, 1], strides = [1, 1]} : vector<8x10xf32> to vector<8x1xf32>
    %cst_187 = arith.constant 0.000000e+00 : f32
    %763 = vector.shape_cast %762 : vector<8x1xf32> to vector<8x1xf32>
    %764 = vector.broadcast %763 : vector<8x1xf32> to vector<8x8xf32>
    %765 = vector.broadcast %cst_187 : f32 to vector<8x8xf32>
    %766 = arith.select %455, %764, %765 : vector<8x8xi1>, vector<8x8xf32>
    %767 = arith.addf %761, %766 : vector<8x8xf32>
    %768 = vector.extract_strided_slice %714 {offsets = [0, 9], sizes = [8, 1], strides = [1, 1]} : vector<8x10xf32> to vector<8x1xf32>
    %cst_188 = arith.constant 0.000000e+00 : f32
    %769 = vector.shape_cast %768 : vector<8x1xf32> to vector<8x1xf32>
    %770 = vector.broadcast %769 : vector<8x1xf32> to vector<8x8xf32>
    %771 = vector.broadcast %cst_188 : f32 to vector<8x8xf32>
    %772 = arith.select %457, %770, %771 : vector<8x8xi1>, vector<8x8xf32>
    %773 = arith.addf %767, %772 : vector<8x8xf32>
    %774 = arith.addf %713, %773 : vector<8x8xf32>
    %cst_189 = arith.constant dense<0xFF800000> : vector<8xf32>
    %775 = vector.multi_reduction <maximumf>, %774, %cst_189 [1] : vector<8x8xf32> to vector<8xf32>
    %776 = vector.shape_cast %775 : vector<8xf32> to vector<8x1xf32>
    %777 = vector.broadcast %776 : vector<8x1xf32> to vector<8x8xf32>
    %778 = arith.subf %774, %777 : vector<8x8xf32>
    %779 = math.exp %778 : vector<8x8xf32>
    %cst_190 = arith.constant dense<0.000000e+00> : vector<8xf32>
    %780 = vector.multi_reduction <add>, %779, %cst_190 [1] : vector<8x8xf32> to vector<8xf32>
    %781 = vector.shape_cast %780 : vector<8xf32> to vector<8x1xf32>
    %782 = vector.broadcast %781 : vector<8x1xf32> to vector<8x8xf32>
    %783 = arith.divf %779, %782 : vector<8x8xf32>
    %784 = arith.truncf %783 : vector<8x8xf32> to vector<8x8xbf16>
    %cst_191 = arith.constant dense<0.000000e+00> : vector<8x8xf32>
    %785 = tpu.matmul %784, %712, %cst_191 {dimension_numbers = #tpu.dot_dimension_numbers<[1], [0], [0], [1], [0, 0, 1, 1], [], []>} : vector<8x8xbf16>, vector<8x8xbf16>, vector<8x8xf32> -> vector<8x8xf32>
    %c1_192 = arith.constant 1 : index
    %c0_193 = arith.constant 0 : index
    %c24_194 = arith.constant 24 : index
    %786 = vector.load %arg13[%c1_192, %c0_193, %c24_194] : memref<2x8x32xf32, #tpu.memory_space<vmem>>, vector<1x8x8xf32>
    %787 = vector.shape_cast %786 : vector<1x8x8xf32> to vector<8x8xf32>
    %788 = vector.shape_cast %785 : vector<8x8xf32> to vector<1x8x8xf32>
    tpu.vector_store %arg13[%c1_192, %c0_193, %c24_194], %788 {strides = array<i32>} : memref<2x8x32xf32, #tpu.memory_space<vmem>>, vector<1x8x8xf32>,
    return
  }
  func.func @transform_0(%arg0: i32) -> (i32, i32, i32) {
    %c0_i32 = arith.constant 0 : i32
    %c0_i32_0 = arith.constant 0 : i32
    %c0_i32_1 = arith.constant 0 : i32
    return %arg0, %c0_i32, %c0_i32_0 : i32, i32, i32
  }
  func.func @transform_1(%arg0: i32) -> (i32, i32, i32) {
    %c0_i32 = arith.constant 0 : i32
    %c0_i32_0 = arith.constant 0 : i32
    %c0_i32_1 = arith.constant 0 : i32
    return %arg0, %c0_i32, %c0_i32_0 : i32, i32, i32
  }
  func.func @transform_2(%arg0: i32) -> (i32, i32, i32) {
    %c0_i32 = arith.constant 0 : i32
    %c0_i32_0 = arith.constant 0 : i32
    %c0_i32_1 = arith.constant 0 : i32
    return %arg0, %c0_i32, %c0_i32_0 : i32, i32, i32
  }
  func.func @transform_3(%arg0: i32) -> (i32, i32) {
    %c0_i32 = arith.constant 0 : i32
    %c0_i32_0 = arith.constant 0 : i32
    %c0_i32_1 = arith.constant 0 : i32
    return %c0_i32, %c0_i32_0 : i32, i32
  }
  func.func @transform_4(%arg0: i32) -> (i32, i32) {
    %c0_i32 = arith.constant 0 : i32
    %c0_i32_0 = arith.constant 0 : i32
    %c0_i32_1 = arith.constant 0 : i32
    return %c0_i32, %c0_i32_0 : i32, i32
  }
  func.func @transform_5(%arg0: i32) -> (i32, i32) {
    %c0_i32 = arith.constant 0 : i32
    %c0_i32_0 = arith.constant 0 : i32
    %c0_i32_1 = arith.constant 0 : i32
    return %c0_i32, %c0_i32_0 : i32, i32
  }
  func.func @transform_6(%arg0: i32) -> (i32, i32) {
    %c0_i32 = arith.constant 0 : i32
    %c0_i32_0 = arith.constant 0 : i32
    %c0_i32_1 = arith.constant 0 : i32
    return %c0_i32, %c0_i32_0 : i32, i32
  }
  func.func @transform_7(%arg0: i32) -> (i32, i32) {
    %c0_i32 = arith.constant 0 : i32
    %c0_i32_0 = arith.constant 0 : i32
    %c0_i32_1 = arith.constant 0 : i32
    return %c0_i32, %c0_i32_0 : i32, i32
  }
  func.func @transform_8(%arg0: i32) -> (i32, i32) {
    %c0_i32 = arith.constant 0 : i32
    %c0_i32_0 = arith.constant 0 : i32
    %c0_i32_1 = arith.constant 0 : i32
    return %c0_i32, %c0_i32_0 : i32, i32
  }
  func.func @transform_9(%arg0: i32) -> (i32, i32, i32) {
    %c0_i32 = arith.constant 0 : i32
    %c0_i32_0 = arith.constant 0 : i32
    %c0_i32_1 = arith.constant 0 : i32
    return %arg0, %c0_i32, %c0_i32_0 : i32, i32, i32
  }
  func.func @transform_10(%arg0: i32) -> (i32, i32, i32) {
    %c0_i32 = arith.constant 0 : i32
    %c0_i32_0 = arith.constant 0 : i32
    %c0_i32_1 = arith.constant 0 : i32
    return %arg0, %c0_i32, %c0_i32_0 : i32, i32, i32
  }
  func.func @transform_11(%arg0: i32) -> (i32, i32) {
    %c0_i32 = arith.constant 0 : i32
    %c0_i32_0 = arith.constant 0 : i32
    %c0_i32_1 = arith.constant 0 : i32
    return %c0_i32, %c0_i32_0 : i32, i32
  }
  func.func @transform_12(%arg0: i32) -> (i32, i32, i32) {
    %c0_i32 = arith.constant 0 : i32
    %c0_i32_0 = arith.constant 0 : i32
    %c0_i32_1 = arith.constant 0 : i32
    return %arg0, %c0_i32, %c0_i32_0 : i32, i32, i32
  }
}

</mosaic_0001>

<llo_original>
// kernel: tpu_custom_call.1
$region0: #{tpu_custom_call.1}
  #allocation0 [shape = 'u32[]', space=smem, size = 0x4, offset = 0x4, fixed_abs, tag = 'smem constant byte address 0x4 - core index']
  #allocation1 [shape = 'u32[144,128]{1,0:T(1,128)}', space=vmem, size = 0x12000, scoped, tag = 'internal scratch']
  %s0 = inlined_call_operand.vmem [shape: f32[2,8,32], index: 0, kind: input, shape index: {}]
  %s1 = inlined_call_operand.hbm [shape: f32[2,8,32], index: 1, kind: input, shape index: {}]
  %s2 = inlined_call_operand.hbm [shape: f32[2,8,32], index: 2, kind: input, shape index: {}]
  %s3 = inlined_call_operand.hbm [shape: f32[32,32], index: 3, kind: input, shape index: {}]
  %s4 = inlined_call_operand.hbm [shape: f32[32,32], index: 4, kind: input, shape index: {}]
  %s5 = inlined_call_operand.hbm [shape: f32[32,32], index: 5, kind: input, shape index: {}]
  %s6 = inlined_call_operand.hbm [shape: f32[1,32], index: 6, kind: input, shape index: {}]
  %s7 = inlined_call_operand.hbm [shape: f32[1,32], index: 7, kind: input, shape index: {}]
  %s8 = inlined_call_operand.vmem [shape: f32[1,32], index: 8, kind: input, shape index: {}]
  %s9 = inlined_call_operand.vmem [shape: f32[2,8,2], index: 9, kind: input, shape index: {}]
  %s10 = inlined_call_operand.vmem [shape: f32[2,2,8], index: 10, kind: input, shape index: {}]
  %s11 = inlined_call_operand.vmem [shape: f32[8,10], index: 11, kind: input, shape index: {}]
  %s12 = inlined_call_operand.hbm [shape: f32[2,8,32], index: 12, kind: output, shape index: {}]
  %s13 = sld [smem:[#allocation0]]
  $region86: #{tpu_custom_call.1} parent=0
    _
  %s15 = ssub.s32 1, %s13
  %s16 = scalar_select 0, %s15, %s13
  $region1: #{tpu_custom_call.1} parent=0
    #allocation2 [shape = 'u8[8192]{0}', space=vmem, size = 0x2000, scoped, tag = 'input window, operand 1, single buffered']
    #allocation3 [shape = 's32[1]{0}', space=sflag, size = 0x4, scoped, tag = 'scoped memory for tpu_custom_call.1']
    #allocation4 [shape = 's32[1]{0}', space=sflag, size = 0x4, scoped, tag = 'scoped memory for tpu_custom_call.1']
    #allocation5 [shape = 'u8[8192]{0}', space=vmem, size = 0x2000, scoped, tag = 'input window, operand 2, single buffered']
    #allocation6 [shape = 's32[1]{0}', space=sflag, size = 0x4, scoped, tag = 'scoped memory for tpu_custom_call.1']
    #allocation7 [shape = 'u8[16384]{0}', space=vmem, size = 0x4000, scoped, tag = 'input window, operand 3, single buffered']
    #allocation8 [shape = 'u8[16384]{0}', space=vmem, size = 0x4000, scoped, tag = 'input window, operand 4, single buffered']
    #allocation9 [shape = 's32[1]{0}', space=sflag, size = 0x4, scoped, tag = 'scoped memory for tpu_custom_call.1']
    #allocation10 [shape = 'u8[16384]{0}', space=vmem, size = 0x4000, scoped, tag = 'input window, operand 5, single buffered']
    #allocation11 [shape = 'u8[512]{0}', space=vmem, size = 0x400, scoped, tag = 'input window, operand 6, single buffered']
    #allocation12 [shape = 's32[1]{0}', space=sflag, size = 0x4, scoped, tag = 'scoped memory for tpu_custom_call.1']
    #allocation13 [shape = 'u8[512]{0}', space=vmem, size = 0x400, scoped, tag = 'input window, operand 7, single buffered']
    #allocation14 [shape = 'u8[8192]{0}', space=vmem, size = 0x2000, scoped, tag = 'output window, operand 0, single buffered']
    %17 = vsyncpa [#allocation3], 0
    %18 = vsyncpa [#allocation6], 0
    %19 = vsyncpa [#allocation9], 0
    %20 = vsyncpa [#allocation12], 0
    %21 = vsyncpa [#allocation4], 0
    // Predicated region
    $region2: #{tpu_custom_call.1} parent=1 // pred_check
      _
    $region3: #{tpu_custom_call.1} parent=1 // pred_check_branch
      %23 = sbr.rel (0) target = $region5
    $region4: #{tpu_custom_call.1} parent=1 // pred_region
      _
    $region5: #{tpu_custom_call.1} parent=1 // pred_fallthru
      _
    // Predicated region
    $region6: #{tpu_custom_call.1} parent=1 // pred_check
      _
    $region7: #{tpu_custom_call.1} parent=1 // pred_check_branch
      %25 = sbr.rel (0) target = $region9
    $region8: #{tpu_custom_call.1} parent=1 // pred_region
      %s27 = ssub.s32 256, 256
      %28 = vsyncadd [#allocation3], %s27
      %s29 = sshll.u32 [#allocation2], 4
      %s30 = int_to_ptr.vmem [resolvable:$true] %s29
      %35 = dma.hbm_to_vmem [thread:$0]  %s1, 256, %s30, [#allocation3], 128, 128, 8
    $region9: #{tpu_custom_call.1} parent=1 // pred_fallthru
      _
    // Predicated region
    $region10: #{tpu_custom_call.1} parent=1 // pred_check
      _
    $region11: #{tpu_custom_call.1} parent=1 // pred_check_branch
      %37 = sbr.rel (0) target = $region13
    $region12: #{tpu_custom_call.1} parent=1 // pred_region
      %s39 = ssub.s32 256, 256
      %40 = vsyncadd [#allocation6], %s39
      %s41 = sshll.u32 [#allocation5], 4
      %s42 = int_to_ptr.vmem [resolvable:$true] %s41
      %47 = dma.hbm_to_vmem [thread:$0]  %s2, 256, %s42, [#allocation6], 128, 128, 8
    $region13: #{tpu_custom_call.1} parent=1 // pred_fallthru
      _
    // Predicated region
    $region14: #{tpu_custom_call.1} parent=1 // pred_check
      _
    $region15: #{tpu_custom_call.1} parent=1 // pred_check_branch
      %49 = sbr.rel (0) target = $region17
    $region16: #{tpu_custom_call.1} parent=1 // pred_region
      %s51 = ssub.s32 512, 512
      %52 = vsyncadd [#allocation6], %s51
      %s53 = sshll.u32 [#allocation7], 4
      %s54 = int_to_ptr.vmem [resolvable:$true] %s53
      %59 = dma.hbm_to_vmem [thread:$0]  %s3, 512, %s54, [#allocation6], 128, 128, 8
    $region17: #{tpu_custom_call.1} parent=1 // pred_fallthru
      _
    // Predicated region
    $region18: #{tpu_custom_call.1} parent=1 // pred_check
      _
    $region19: #{tpu_custom_call.1} parent=1 // pred_check_branch
      %61 = sbr.rel (0) target = $region21
    $region20: #{tpu_custom_call.1} parent=1 // pred_region
      %s63 = ssub.s32 512, 512
      %64 = vsyncadd [#allocation9], %s63
      %s65 = sshll.u32 [#allocation8], 4
      %s66 = int_to_ptr.vmem [resolvable:$true] %s65
      %71 = dma.hbm_to_vmem [thread:$0]  %s4, 512, %s66, [#allocation9], 128, 128, 8
    $region21: #{tpu_custom_call.1} parent=1 // pred_fallthru
      _
    // Predicated region
    $region22: #{tpu_custom_call.1} parent=1 // pred_check
      _
    $region23: #{tpu_custom_call.1} parent=1 // pred_check_branch
      %73 = sbr.rel (0) target = $region25
    $region24: #{tpu_custom_call.1} parent=1 // pred_region
      %s75 = ssub.s32 512, 512
      %76 = vsyncadd [#allocation9], %s75
      %s77 = sshll.u32 [#allocation10], 4
      %s78 = int_to_ptr.vmem [resolvable:$true] %s77
      %83 = dma.hbm_to_vmem [thread:$0]  %s5, 512, %s78, [#allocation9], 128, 128, 8
    $region25: #{tpu_custom_call.1} parent=1 // pred_fallthru
      _
    // Predicated region
    $region26: #{tpu_custom_call.1} parent=1 // pred_check
      _
    $region27: #{tpu_custom_call.1} parent=1 // pred_check_branch
      %85 = sbr.rel (0) target = $region29
    $region28: #{tpu_custom_call.1} parent=1 // pred_region
      %s87 = ssub.s32 16, 16
      %88 = vsyncadd [#allocation12], %s87
      %s90 = sshll.u32 [#allocation11], 4
      %s91 = int_to_ptr.vmem [resolvable:$true] %s90
      %93 = dma.hbm_to_vmem [thread:$0]  %s6, 16, %s91, [#allocation12]
    $region29: #{tpu_custom_call.1} parent=1 // pred_fallthru
      _
    // Predicated region
    $region30: #{tpu_custom_call.1} parent=1 // pred_check
      _
    $region31: #{tpu_custom_call.1} parent=1 // pred_check_branch
      %95 = sbr.rel (0) target = $region33
    $region32: #{tpu_custom_call.1} parent=1 // pred_region
      %s97 = ssub.s32 16, 16
      %98 = vsyncadd [#allocation12], %s97
      %s100 = sshll.u32 [#allocation13], 4
      %s101 = int_to_ptr.vmem [resolvable:$true] %s100
      %103 = dma.hbm_to_vmem [thread:$0]  %s7, 16, %s101, [#allocation12]
    $region33: #{tpu_custom_call.1} parent=1 // pred_fallthru
      _
    // Predicated region
    $region34: #{tpu_custom_call.1} parent=1 // pred_check
      _
    $region35: #{tpu_custom_call.1} parent=1 // pred_check_branch
      %105 = sbr.rel (0) target = $region37
    $region36: #{tpu_custom_call.1} parent=1 // pred_region
      _
    $region37: #{tpu_custom_call.1} parent=1 // pred_fallthru
      _
    // Predicated region
    $region38: #{tpu_custom_call.1} parent=1 // pred_check
      _
    $region39: #{tpu_custom_call.1} parent=1 // pred_check_branch
      %107 = sbr.rel (0) target = $region41
    $region40: #{tpu_custom_call.1} parent=1 // pred_region
      _
    $region41: #{tpu_custom_call.1} parent=1 // pred_fallthru
      _
    // Predicated region
    $region42: #{tpu_custom_call.1} parent=1 // pred_check
      _
    $region43: #{tpu_custom_call.1} parent=1 // pred_check_branch
      %109 = sbr.rel (0) target = $region45
    $region44: #{tpu_custom_call.1} parent=1 // pred_region
      _
    $region45: #{tpu_custom_call.1} parent=1 // pred_fallthru
      _
    // Predicated region
    $region46: #{tpu_custom_call.1} parent=1 // pred_check
      _
    $region47: #{tpu_custom_call.1} parent=1 // pred_check_branch
      %111 = sbr.rel (0) target = $region49
    $region48: #{tpu_custom_call.1} parent=1 // pred_region
      _
    $region49: #{tpu_custom_call.1} parent=1 // pred_fallthru
      _
    // Predicated region
    $region50: #{tpu_custom_call.1} parent=1 // pred_check
      _
    $region51: #{tpu_custom_call.1} parent=1 // pred_check_branch
      %113 = sbr.rel (0) target = $region53
    $region52: #{tpu_custom_call.1} parent=1 // pred_region
      %114 = dma.done [#allocation3], 256
    $region53: #{tpu_custom_call.1} parent=1 // pred_fallthru
      _
    // Predicated region
    $region54: #{tpu_custom_call.1} parent=1 // pred_check
      _
    $region55: #{tpu_custom_call.1} parent=1 // pred_check_branch
      %116 = sbr.rel (0) target = $region57
    $region56: #{tpu_custom_call.1} parent=1 // pred_region
      %117 = dma.done [#allocation6], 256
    $region57: #{tpu_custom_call.1} parent=1 // pred_fallthru
      _
    // Predicated region
    $region58: #{tpu_custom_call.1} parent=1 // pred_check
      _
    $region59: #{tpu_custom_call.1} parent=1 // pred_check_branch
      %119 = sbr.rel (0) target = $region61
    $region60: #{tpu_custom_call.1} parent=1 // pred_region
      %120 = dma.done [#allocation6], 512
    $region61: #{tpu_custom_call.1} parent=1 // pred_fallthru
      _
    // Predicated region
    $region62: #{tpu_custom_call.1} parent=1 // pred_check
      _
    $region63: #{tpu_custom_call.1} parent=1 // pred_check_branch
      %122 = sbr.rel (0) target = $region65
    $region64: #{tpu_custom_call.1} parent=1 // pred_region
      %123 = dma.done [#allocation9], 512
    $region65: #{tpu_custom_call.1} parent=1 // pred_fallthru
      _
    // Predicated region
    $region66: #{tpu_custom_call.1} parent=1 // pred_check
      _
    $region67: #{tpu_custom_call.1} parent=1 // pred_check_branch
      %125 = sbr.rel (0) target = $region69
    $region68: #{tpu_custom_call.1} parent=1 // pred_region
      %126 = dma.done [#allocation9], 512
    $region69: #{tpu_custom_call.1} parent=1 // pred_fallthru
      _
    // Predicated region
    $region70: #{tpu_custom_call.1} parent=1 // pred_check
      _
    $region71: #{tpu_custom_call.1} parent=1 // pred_check_branch
      %128 = sbr.rel (0) target = $region73
    $region72: #{tpu_custom_call.1} parent=1 // pred_region
      %129 = dma.done [#allocation12], 16
    $region73: #{tpu_custom_call.1} parent=1 // pred_fallthru
      _
    // Predicated region
    $region74: #{tpu_custom_call.1} parent=1 // pred_check
      _
    $region75: #{tpu_custom_call.1} parent=1 // pred_check_branch
      %131 = sbr.rel (0) target = $region77
    $region76: #{tpu_custom_call.1} parent=1 // pred_region
      %132 = dma.done [#allocation12], 16
    $region77: #{tpu_custom_call.1} parent=1 // pred_fallthru
      _
    %v134 = vld [vmem:[%s0] sm:$0xff]
    %v135 = vld [vmem:[%s0 + $0x8] sm:$0xff]
    %v136 = vpack.c.bf16 %v135, %v134
    %v137 = vld [vmem:[#allocation2] sm:$0xff]
    %v138 = vld [vmem:[#allocation2 + $0x8] sm:$0xff]
    %v139 = vpack.c.bf16 %v138, %v137
    %v140 = vld [vmem:[#allocation5] sm:$0xff]
    %v141 = vld [vmem:[#allocation5 + $0x8] sm:$0xff]
    %v142 = vpack.c.bf16 %v141, %v140
    %v143 = vld [vmem:[#allocation7] sm:$0xff]
    %v144 = vld [vmem:[#allocation7 + $0x8] sm:$0xff]
    %v145 = vld [vmem:[#allocation7 + $0x10] sm:$0xff]
    %v146 = vld [vmem:[#allocation7 + $0x18] sm:$0xff]
    %v147 = vpack.c.bf16 %v144, %v143
    %v148 = vpack.c.bf16 %v146, %v145
    %v149 = vld [vmem:[#allocation8] sm:$0xff]
    %v150 = vld [vmem:[#allocation8 + $0x8] sm:$0xff]
    %v151 = vld [vmem:[#allocation8 + $0x10] sm:$0xff]
    %v152 = vld [vmem:[#allocation8 + $0x18] sm:$0xff]
    %v153 = vpack.c.bf16 %v150, %v149
    %v154 = vpack.c.bf16 %v152, %v151
    %v155 = vld [vmem:[#allocation10] sm:$0xff]
    %v156 = vld [vmem:[#allocation10 + $0x8] sm:$0xff]
    %v157 = vld [vmem:[#allocation10 + $0x10] sm:$0xff]
    %v158 = vld [vmem:[#allocation10 + $0x18] sm:$0xff]
    %v159 = vpack.c.bf16 %v156, %v155
    %v160 = vpack.c.bf16 %v158, %v157
    %v161 = vld [vmem:[#allocation11] sm:$0x1]
    %v163 = vlaneseq
    %v164 = vshrl.u32 %v163, 7
    %v165 = vsub.s32 0, %v164
    %v166 = vrot.slane %v161, %v165
    %vm168 = vcmask 261120
    %v170 = vsel %vm168, %v136, 0
    %172 = vmatprep.subr.bf16.mxu0 0
    %173 = vmatpush1.bf16.msra.mxu0 0
    %174 = vmatprep.subr.bf16.mxu0 0
    %175 = vmatpush1.bf16.msra.mxu0 0
    %176 = vmatprep.subr.bf16.mxu0 0
    %177 = vmatpush1.bf16.msra.mxu0 0
    %178 = vmatprep.subr.bf16.mxu0 0
    %179 = vmatpush1.bf16.msra.mxu0 0
    %180 = vmatprep.subr.bf16.mxu0 0
    %181 = vmatpush1.bf16.msra.mxu0 0
    %182 = vmatprep.subr.bf16.mxu0 0
    %183 = vmatpush1.bf16.msra.mxu0 0
    %184 = vmatprep.subr.bf16.mxu0 0
    %185 = vmatpush1.bf16.msra.mxu0 %v148
    %186 = vmatprep.subr.bf16.mxu0 0
    %187 = vmatpush1.bf16.msra.mxu0 %v147
    %188 = vmatprep.subr.bf16.mxu0 0
    %189 = vmatpush2.bf16.msra.mxu0 0
    %190 = vmatprep.subr.bf16.mxu0 0
    %191 = vmatpush2.bf16.msra.mxu0 0
    %192 = vmatprep.subr.bf16.mxu0 0
    %193 = vmatpush2.bf16.msra.mxu0 0
    %194 = vmatprep.subr.bf16.mxu0 0
    %195 = vmatpush2.bf16.msra.mxu0 0
    %196 = vmatprep.subr.bf16.mxu0 0
    %197 = vmatpush2.bf16.msra.mxu0 0
    %198 = vmatprep.subr.bf16.mxu0 0
    %199 = vmatpush2.bf16.msra.mxu0 0
    %200 = vmatprep.subr.bf16.mxu0 0
    %201 = vmatpush2.bf16.msra.mxu0 0
    %202 = vmatprep.subr.bf16.mxu0 0
    %203 = vmatpush2.bf16.msra.mxu0 0
    %204 = vmatprep.mubr.bf16.mxu0 0
    %205 = vmatmul.mubr.bf16.gmra.mxu0 %v170
    %v206 = vpop.f32.mrf.mxu0
    %v207 = vadd.f32 %v166, %v206
    %v208 = vpop.f32.mrf.mxu0
    %v209 = vpop.f32.mrf.mxu0
    %v210 = vadd.f32 %v166, %v209
    %v211 = vpop.f32.mrf.mxu0
    %212 = vdwg.mxu0
    %v213 = vmul.f32 %v207, 0.35355338
    %v214 = vmul.f32 %v210, 0.35355338
    %v215 = vld [vmem:[#allocation13] sm:$0x1]
    %v217 = vlaneseq
    %v218 = vshrl.u32 %v217, 7
    %v219 = vsub.s32 0, %v218
    %v220 = vrot.slane %v215, %v219
    %v223 = vsel %vm168, %v139, 0
    %225 = vmatprep.subr.bf16.mxu0 0
    %226 = vmatpush1.bf16.msra.mxu0 0
    %227 = vmatprep.subr.bf16.mxu0 0
    %228 = vmatpush1.bf16.msra.mxu0 0
    %229 = vmatprep.subr.bf16.mxu0 0
    %230 = vmatpush1.bf16.msra.mxu0 0
    %231 = vmatprep.subr.bf16.mxu0 0
    %232 = vmatpush1.bf16.msra.mxu0 0
    %233 = vmatprep.subr.bf16.mxu0 0
    %234 = vmatpush1.bf16.msra.mxu0 0
    %235 = vmatprep.subr.bf16.mxu0 0
    %236 = vmatpush1.bf16.msra.mxu0 0
    %237 = vmatprep.subr.bf16.mxu0 0
    %238 = vmatpush1.bf16.msra.mxu0 %v154
    %239 = vmatprep.subr.bf16.mxu0 0
    %240 = vmatpush1.bf16.msra.mxu0 %v153
    %241 = vmatprep.subr.bf16.mxu0 0
    %242 = vmatpush2.bf16.msra.mxu0 0
    %243 = vmatprep.subr.bf16.mxu0 0
    %244 = vmatpush2.bf16.msra.mxu0 0
    %245 = vmatprep.subr.bf16.mxu0 0
    %246 = vmatpush2.bf16.msra.mxu0 0
    %247 = vmatprep.subr.bf16.mxu0 0
    %248 = vmatpush2.bf16.msra.mxu0 0
    %249 = vmatprep.subr.bf16.mxu0 0
    %250 = vmatpush2.bf16.msra.mxu0 0
    %251 = vmatprep.subr.bf16.mxu0 0
    %252 = vmatpush2.bf16.msra.mxu0 0
    %253 = vmatprep.subr.bf16.mxu0 0
    %254 = vmatpush2.bf16.msra.mxu0 0
    %255 = vmatprep.subr.bf16.mxu0 0
    %256 = vmatpush2.bf16.msra.mxu0 0
    %257 = vmatprep.mubr.bf16.mxu0 0
    %258 = vmatmul.mubr.bf16.gmra.mxu0 %v223
    %v259 = vpop.f32.mrf.mxu0
    %v260 = vadd.f32 %v220, %v259
    %v261 = vpop.f32.mrf.mxu0
    %v262 = vpop.f32.mrf.mxu0
    %v263 = vadd.f32 %v220, %v262
    %v264 = vpop.f32.mrf.mxu0
    %265 = vdwg.mxu0
    %v266 = vld [vmem:[%s8] sm:$0x1]
    %v268 = vlaneseq
    %v269 = vshrl.u32 %v268, 7
    %v270 = vsub.s32 0, %v269
    %v271 = vrot.slane %v266, %v270
    %v274 = vsel %vm168, %v142, 0
    %276 = vmatprep.subr.bf16.mxu0 0
    %277 = vmatpush1.bf16.msra.mxu0 0
    %278 = vmatprep.subr.bf16.mxu0 0
    %279 = vmatpush1.bf16.msra.mxu0 0
    %280 = vmatprep.subr.bf16.mxu0 0
    %281 = vmatpush1.bf16.msra.mxu0 0
    %282 = vmatprep.subr.bf16.mxu0 0
    %283 = vmatpush1.bf16.msra.mxu0 0
    %284 = vmatprep.subr.bf16.mxu0 0
    %285 = vmatpush1.bf16.msra.mxu0 0
    %286 = vmatprep.subr.bf16.mxu0 0
    %287 = vmatpush1.bf16.msra.mxu0 0
    %288 = vmatprep.subr.bf16.mxu0 0
    %289 = vmatpush1.bf16.msra.mxu0 %v160
    %290 = vmatprep.subr.bf16.mxu0 0
    %291 = vmatpush1.bf16.msra.mxu0 %v159
    %292 = vmatprep.subr.bf16.mxu0 0
    %293 = vmatpush2.bf16.msra.mxu0 0
    %294 = vmatprep.subr.bf16.mxu0 0
    %295 = vmatpush2.bf16.msra.mxu0 0
    %296 = vmatprep.subr.bf16.mxu0 0
    %297 = vmatpush2.bf16.msra.mxu0 0
    %298 = vmatprep.subr.bf16.mxu0 0
    %299 = vmatpush2.bf16.msra.mxu0 0
    %300 = vmatprep.subr.bf16.mxu0 0
    %301 = vmatpush2.bf16.msra.mxu0 0
    %302 = vmatprep.subr.bf16.mxu0 0
    %303 = vmatpush2.bf16.msra.mxu0 0
    %304 = vmatprep.subr.bf16.mxu0 0
    %305 = vmatpush2.bf16.msra.mxu0 0
    %306 = vmatprep.subr.bf16.mxu0 0
    %307 = vmatpush2.bf16.msra.mxu0 0
    %308 = vmatprep.mubr.bf16.mxu0 0
    %309 = vmatmul.mubr.bf16.gmra.mxu0 %v274
    %v310 = vpop.f32.mrf.mxu0
    %v311 = vadd.f32 %v271, %v310
    %v312 = vpop.f32.mrf.mxu0
    %v313 = vpop.f32.mrf.mxu0
    %v314 = vadd.f32 %v271, %v313
    %v315 = vpop.f32.mrf.mxu0
    %316 = vdwg.mxu0
    %v317 = vld [vmem:[%s11] sm:$0xff]
    %v318 = vpack.c.bf16 %v317, %v317
    %v319 = vld [vmem:[%s9] sm:$0xff]
    %v320 = vld [vmem:[%s10] sm:$0x3]
    %322 = vset.pattern.permute.xlu0 0
    %323 = vperm.xlu0 %322, %v319
    %v324 = vpop.permute.xlu0 %323
    %v326 = vlaneseq
    %v327 = vshrl.u32 %v326, 7
    %v328 = vsub.s32 0, %v327
    %v329 = vrot.slane %v320, %v328
    %v330 = vsub.f32 %v324, %v329
    %331 = vset.pattern.permute.xlu0 1
    %332 = vperm.xlu0 %331, %v319
    %v333 = vpop.permute.xlu0 %332
    %v335 = vlaneseq
    %v336 = vshrl.u32 %v335, 7
    %v337 = vsub.s32 1, %v336
    %v338 = vrot.slane %v320, %v337
    %v339 = vsub.f32 %v333, %v338
    %v340 = vmul.f32 %v330, %v330
    %v341 = vmul.f32 %v339, %v339
    %v342 = vadd.f32 %v340, %v341
    %v343 = vrsqrt.pop %v342
    %v344 = vmul.f32 %v342, %v343
    %vm345 = vcmp.eq.f32.partialorder %v342, inf
    %v346 = vsel %vm345, %v342, %v344
    %vm347 = vcmp.eq.f32.partialorder %v342, 0.0
    %v348 = vand.u32 %v342, 2147483648
    %v349 = vsel %vm347, %v348, %v346
    %v350 = vrcp.pop 141421.36
    %v351 = vmul.f32 %v349, %v350
    %v352 = vmul.f32 %v351, 9.0
    %v353 = vround.ne.pseudo %v352
    %v354 = vmax.f32 %v353, 0.0
    %v355 = vmin.f32 %v354, 9.0
    %v356 = vcvt.f32.s32.to.zero.pseudo %v355
    %vm357 = vcmp.eq.s32.totalorder %v356, 0
    %vm358 = vcmp.eq.s32.totalorder %v356, 1
    %vm359 = vcmp.eq.s32.totalorder %v356, 2
    %vm360 = vcmp.eq.s32.totalorder %v356, 3
    %vm361 = vcmp.eq.s32.totalorder %v356, 4
    %vm362 = vcmp.eq.s32.totalorder %v356, 5
    %vm363 = vcmp.eq.s32.totalorder %v356, 6
    %vm364 = vcmp.eq.s32.totalorder %v356, 7
    %vm365 = vcmp.eq.s32.totalorder %v356, 8
    %vm366 = vcmp.eq.s32.totalorder %v356, 9
    %v367 = vpack.c.bf16 %v213, %v213
    %v368 = vpack.c.bf16 %v260, %v260
    %v369 = vpack.c.bf16 %v311, %v311
    %vm370 = vcmask 64512
    %v372 = vsel %vm370, %v367, 0
    %vm374 = vcmask 1043456
    %v376 = vsel %vm374, %v318, 0
    %378 = vmatprep.subr.bf16.mxu0 0
    %379 = vmatpush1.bf16.msra.mxu0 0
    %380 = vmatprep.subr.bf16.mxu0 0
    %381 = vmatpush1.bf16.msra.mxu0 0
    %382 = vmatprep.subr.bf16.mxu0 0
    %383 = vmatpush1.bf16.msra.mxu0 0
    %384 = vmatprep.subr.bf16.mxu0 0
    %385 = vmatpush1.bf16.msra.mxu0 0
    %386 = vmatprep.subr.bf16.mxu0 0
    %387 = vmatpush1.bf16.msra.mxu0 0
    %388 = vmatprep.subr.bf16.mxu0 0
    %389 = vmatpush1.bf16.msra.mxu0 0
    %390 = vmatprep.subr.bf16.mxu0 0
    %391 = vmatpush1.bf16.msra.mxu0 0
    %392 = vmatprep.subr.bf16.mxu0 0
    %393 = vmatpush1.bf16.msra.mxu0 %v376
    %394 = vmatprep.subr.bf16.mxu0 0
    %395 = vmatpush2.bf16.msra.mxu0 0
    %396 = vmatprep.subr.bf16.mxu0 0
    %397 = vmatpush2.bf16.msra.mxu0 0
    %398 = vmatprep.subr.bf16.mxu0 0
    %399 = vmatpush2.bf16.msra.mxu0 0
    %400 = vmatprep.subr.bf16.mxu0 0
    %401 = vmatpush2.bf16.msra.mxu0 0
    %402 = vmatprep.subr.bf16.mxu0 0
    %403 = vmatpush2.bf16.msra.mxu0 0
    %404 = vmatprep.subr.bf16.mxu0 0
    %405 = vmatpush2.bf16.msra.mxu0 0
    %406 = vmatprep.subr.bf16.mxu0 0
    %407 = vmatpush2.bf16.msra.mxu0 0
    %408 = vmatprep.subr.bf16.mxu0 0
    %409 = vmatpush2.bf16.msra.mxu0 0
    %410 = vmatprep.mubr.bf16.mxu0 0
    %411 = vmatmul.mubr.bf16.gmra.mxu0 %v372
    %v412 = vpop.f32.mrf.mxu0
    %v413 = vadd.f32 0.0, %v412
    %v414 = vpop.f32.mrf.mxu0
    %v415 = vpop.f32.mrf.mxu0
    %v416 = vpop.f32.mrf.mxu0
    %417 = vdwg.mxu0
    %419 = vset.pattern.permute.xlu0 0
    %420 = vperm.xlu0 %419, %v413
    %v421 = vpop.permute.xlu0 %420
    %v423 = vsel %vm357, %v421, 0.0
    %424 = vset.pattern.permute.xlu0 1
    %425 = vperm.xlu0 %424, %v413
    %v426 = vpop.permute.xlu0 %425
    %v428 = vsel %vm358, %v426, 0.0
    %v429 = vadd.f32 %v423, %v428
    %430 = vset.pattern.permute.xlu0 2
    %431 = vperm.xlu0 %430, %v413
    %v432 = vpop.permute.xlu0 %431
    %v434 = vsel %vm359, %v432, 0.0
    %v435 = vadd.f32 %v429, %v434
    %436 = vset.pattern.permute.xlu0 3
    %437 = vperm.xlu0 %436, %v413
    %v438 = vpop.permute.xlu0 %437
    %v440 = vsel %vm360, %v438, 0.0
    %v441 = vadd.f32 %v435, %v440
    %442 = vset.pattern.permute.xlu0 4
    %443 = vperm.xlu0 %442, %v413
    %v444 = vpop.permute.xlu0 %443
    %v446 = vsel %vm361, %v444, 0.0
    %v447 = vadd.f32 %v441, %v446
    %448 = vset.pattern.permute.xlu0 5
    %449 = vperm.xlu0 %448, %v413
    %v450 = vpop.permute.xlu0 %449
    %v452 = vsel %vm362, %v450, 0.0
    %v453 = vadd.f32 %v447, %v452
    %454 = vset.pattern.permute.xlu0 6
    %455 = vperm.xlu0 %454, %v413
    %v456 = vpop.permute.xlu0 %455
    %v458 = vsel %vm363, %v456, 0.0
    %v459 = vadd.f32 %v453, %v458
    %460 = vset.pattern.permute.xlu0 7
    %461 = vperm.xlu0 %460, %v413
    %v462 = vpop.permute.xlu0 %461
    %v464 = vsel %vm364, %v462, 0.0
    %v465 = vadd.f32 %v459, %v464
    %466 = vset.pattern.permute.xlu0 8
    %467 = vperm.xlu0 %466, %v413
    %v468 = vpop.permute.xlu0 %467
    %v470 = vsel %vm365, %v468, 0.0
    %v471 = vadd.f32 %v465, %v470
    %472 = vset.pattern.permute.xlu0 9
    %473 = vperm.xlu0 %472, %v413
    %v474 = vpop.permute.xlu0 %473
    %v476 = vsel %vm366, %v474, 0.0
    %v477 = vadd.f32 %v471, %v476
    %v479 = vsel %vm370, %v368, 0
    %481 = vmatprep.subr.bf16.mxu0 0
    %482 = vmatpush1.bf16.xpose.msra.mxu0 0
    %483 = vmatprep.subr.bf16.mxu0 0
    %484 = vmatpush1.bf16.xpose.msra.mxu0 0
    %485 = vmatprep.subr.bf16.mxu0 0
    %486 = vmatpush1.bf16.xpose.msra.mxu0 0
    %487 = vmatprep.subr.bf16.mxu0 0
    %488 = vmatpush1.bf16.xpose.msra.mxu0 0
    %489 = vmatprep.subr.bf16.mxu0 0
    %490 = vmatpush1.bf16.xpose.msra.mxu0 0
    %491 = vmatprep.subr.bf16.mxu0 0
    %492 = vmatpush1.bf16.xpose.msra.mxu0 0
    %493 = vmatprep.subr.bf16.mxu0 0
    %494 = vmatpush1.bf16.xpose.msra.mxu0 0
    %495 = vmatprep.subr.bf16.mxu0 0
    %496 = vmatpush1.bf16.xpose.msra.mxu0 %v479
    %497 = vmatprep.subr.bf16.mxu0 0
    %498 = vmatpush2.bf16.xpose.msra.mxu0 0
    %499 = vmatprep.subr.bf16.mxu0 0
    %500 = vmatpush2.bf16.xpose.msra.mxu0 0
    %501 = vmatprep.subr.bf16.mxu0 0
    %502 = vmatpush2.bf16.xpose.msra.mxu0 0
    %503 = vmatprep.subr.bf16.mxu0 0
    %504 = vmatpush2.bf16.xpose.msra.mxu0 0
    %505 = vmatprep.subr.bf16.mxu0 0
    %506 = vmatpush2.bf16.xpose.msra.mxu0 0
    %507 = vmatprep.subr.bf16.mxu0 0
    %508 = vmatpush2.bf16.xpose.msra.mxu0 0
    %509 = vmatprep.subr.bf16.mxu0 0
    %510 = vmatpush2.bf16.xpose.msra.mxu0 0
    %511 = vmatprep.subr.bf16.mxu0 0
    %512 = vmatpush2.bf16.xpose.msra.mxu0 0
    %513 = vmatprep.mubr.bf16.mxu0 0
    %514 = vmatmul.mubr.bf16.gmra.mxu0 %v372
    %v515 = vpop.f32.mrf.mxu0
    %v516 = vadd.f32 %v477, %v515
    %v517 = vpop.f32.mrf.mxu0
    %v518 = vpop.f32.mrf.mxu0
    %v519 = vpop.f32.mrf.mxu0
    %520 = vdwg.mxu0
    %v521 = vsel %vm370, %v516, -inf
    %522 = vmax.xlane.f32.xlu0 %v521
    %v523 = vpop.xlane.xlu0 %522
    %v524 = vsub.f32 %v516, %v523
    %v525 = vmul.f32 %v524, 1.442695
    %v526 = vpow.pop %v525
    %v527 = vsel %vm370, %v526, 0.0
    %528 = vadd.xlane.f32.xlu0 %v527
    %v529 = vpop.xlane.xlu0 %528
    %v530 = vrcp.pop %v529
    %v531 = vmul.f32 %v526, %v530
    %v532 = vpack.c.bf16 %v531, %v531
    %v534 = vsel %vm370, %v532, 0
    %v537 = vsel %vm374, %v369, 0
    %539 = vmatprep.subr.bf16.mxu0 0
    %540 = vmatpush1.bf16.msra.mxu0 0
    %541 = vmatprep.subr.bf16.mxu0 0
    %542 = vmatpush1.bf16.msra.mxu0 0
    %543 = vmatprep.subr.bf16.mxu0 0
    %544 = vmatpush1.bf16.msra.mxu0 0
    %545 = vmatprep.subr.bf16.mxu0 0
    %546 = vmatpush1.bf16.msra.mxu0 0
    %547 = vmatprep.subr.bf16.mxu0 0
    %548 = vmatpush1.bf16.msra.mxu0 0
    %549 = vmatprep.subr.bf16.mxu0 0
    %550 = vmatpush1.bf16.msra.mxu0 0
    %551 = vmatprep.subr.bf16.mxu0 0
    %552 = vmatpush1.bf16.msra.mxu0 0
    %553 = vmatprep.subr.bf16.mxu0 0
    %554 = vmatpush1.bf16.msra.mxu0 %v537
    %555 = vmatprep.subr.bf16.mxu0 0
    %556 = vmatpush2.bf16.msra.mxu0 0
    %557 = vmatprep.subr.bf16.mxu0 0
    %558 = vmatpush2.bf16.msra.mxu0 0
    %559 = vmatprep.subr.bf16.mxu0 0
    %560 = vmatpush2.bf16.msra.mxu0 0
    %561 = vmatprep.subr.bf16.mxu0 0
    %562 = vmatpush2.bf16.msra.mxu0 0
    %563 = vmatprep.subr.bf16.mxu0 0
    %564 = vmatpush2.bf16.msra.mxu0 0
    %565 = vmatprep.subr.bf16.mxu0 0
    %566 = vmatpush2.bf16.msra.mxu0 0
    %567 = vmatprep.subr.bf16.mxu0 0
    %568 = vmatpush2.bf16.msra.mxu0 0
    %569 = vmatprep.subr.bf16.mxu0 0
    %570 = vmatpush2.bf16.msra.mxu0 0
    %571 = vmatprep.mubr.bf16.mxu0 0
    %572 = vmatmul.mubr.bf16.gmra.mxu0 %v534
    %v573 = vpop.f32.mrf.mxu0
    %v574 = vadd.f32 0.0, %v573
    %v575 = vpop.f32.mrf.mxu0
    %v576 = vpop.f32.mrf.mxu0
    %v577 = vpop.f32.mrf.mxu0
    %578 = vdwg.mxu0
    %579 = vst.msk [vmem:[#allocation14] sm:$0xff] %vm370, %v574
    %581 = vrot.lane.b32.xlu0 %v367, 120
    %v582 = vpop.permute.xlu0 %581
    %v584 = vsel %vm370, %v582, 0
    %586 = vmatprep.subr.bf16.mxu0 0
    %587 = vmatpush1.bf16.msra.mxu0 0
    %588 = vmatprep.subr.bf16.mxu0 0
    %589 = vmatpush1.bf16.msra.mxu0 0
    %590 = vmatprep.subr.bf16.mxu0 0
    %591 = vmatpush1.bf16.msra.mxu0 0
    %592 = vmatprep.subr.bf16.mxu0 0
    %593 = vmatpush1.bf16.msra.mxu0 0
    %594 = vmatprep.subr.bf16.mxu0 0
    %595 = vmatpush1.bf16.msra.mxu0 0
    %596 = vmatprep.subr.bf16.mxu0 0
    %597 = vmatpush1.bf16.msra.mxu0 0
    %598 = vmatprep.subr.bf16.mxu0 0
    %599 = vmatpush1.bf16.msra.mxu0 0
    %600 = vmatprep.subr.bf16.mxu0 0
    %601 = vmatpush1.bf16.msra.mxu0 %v376
    %602 = vmatprep.subr.bf16.mxu0 0
    %603 = vmatpush2.bf16.msra.mxu0 0
    %604 = vmatprep.subr.bf16.mxu0 0
    %605 = vmatpush2.bf16.msra.mxu0 0
    %606 = vmatprep.subr.bf16.mxu0 0
    %607 = vmatpush2.bf16.msra.mxu0 0
    %608 = vmatprep.subr.bf16.mxu0 0
    %609 = vmatpush2.bf16.msra.mxu0 0
    %610 = vmatprep.subr.bf16.mxu0 0
    %611 = vmatpush2.bf16.msra.mxu0 0
    %612 = vmatprep.subr.bf16.mxu0 0
    %613 = vmatpush2.bf16.msra.mxu0 0
    %614 = vmatprep.subr.bf16.mxu0 0
    %615 = vmatpush2.bf16.msra.mxu0 0
    %616 = vmatprep.subr.bf16.mxu0 0
    %617 = vmatpush2.bf16.msra.mxu0 0
    %618 = vmatprep.mubr.bf16.mxu0 0
    %619 = vmatmul.mubr.bf16.gmra.mxu0 %v584
    %v620 = vpop.f32.mrf.mxu0
    %v621 = vadd.f32 0.0, %v620
    %v622 = vpop.f32.mrf.mxu0
    %v623 = vpop.f32.mrf.mxu0
    %v624 = vpop.f32.mrf.mxu0
    %625 = vdwg.mxu0
    %627 = vset.pattern.permute.xlu0 0
    %628 = vperm.xlu0 %627, %v621
    %v629 = vpop.permute.xlu0 %628
    %v631 = vsel %vm357, %v629, 0.0
    %632 = vset.pattern.permute.xlu0 1
    %633 = vperm.xlu0 %632, %v621
    %v634 = vpop.permute.xlu0 %633
    %v636 = vsel %vm358, %v634, 0.0
    %v637 = vadd.f32 %v631, %v636
    %638 = vset.pattern.permute.xlu0 2
    %639 = vperm.xlu0 %638, %v621
    %v640 = vpop.permute.xlu0 %639
    %v642 = vsel %vm359, %v640, 0.0
    %v643 = vadd.f32 %v637, %v642
    %644 = vset.pattern.permute.xlu0 3
    %645 = vperm.xlu0 %644, %v621
    %v646 = vpop.permute.xlu0 %645
    %v648 = vsel %vm360, %v646, 0.0
    %v649 = vadd.f32 %v643, %v648
    %650 = vset.pattern.permute.xlu0 4
    %651 = vperm.xlu0 %650, %v621
    %v652 = vpop.permute.xlu0 %651
    %v654 = vsel %vm361, %v652, 0.0
    %v655 = vadd.f32 %v649, %v654
    %656 = vset.pattern.permute.xlu0 5
    %657 = vperm.xlu0 %656, %v621
    %v658 = vpop.permute.xlu0 %657
    %v660 = vsel %vm362, %v658, 0.0
    %v661 = vadd.f32 %v655, %v660
    %662 = vset.pattern.permute.xlu0 6
    %663 = vperm.xlu0 %662, %v621
    %v664 = vpop.permute.xlu0 %663
    %v666 = vsel %vm363, %v664, 0.0
    %v667 = vadd.f32 %v661, %v666
    %668 = vset.pattern.permute.xlu0 7
    %669 = vperm.xlu0 %668, %v621
    %v670 = vpop.permute.xlu0 %669
    %v672 = vsel %vm364, %v670, 0.0
    %v673 = vadd.f32 %v667, %v672
    %674 = vset.pattern.permute.xlu0 8
    %675 = vperm.xlu0 %674, %v621
    %v676 = vpop.permute.xlu0 %675
    %v678 = vsel %vm365, %v676, 0.0
    %v679 = vadd.f32 %v673, %v678
    %680 = vset.pattern.permute.xlu0 9
    %681 = vperm.xlu0 %680, %v621
    %v682 = vpop.permute.xlu0 %681
    %v684 = vsel %vm366, %v682, 0.0
    %v685 = vadd.f32 %v679, %v684
    %687 = vrot.lane.b32.xlu0 %v368, 120
    %v688 = vpop.permute.xlu0 %687
    %v690 = vsel %vm370, %v688, 0
    %692 = vmatprep.subr.bf16.mxu0 0
    %693 = vmatpush1.bf16.xpose.msra.mxu0 0
    %694 = vmatprep.subr.bf16.mxu0 0
    %695 = vmatpush1.bf16.xpose.msra.mxu0 0
    %696 = vmatprep.subr.bf16.mxu0 0
    %697 = vmatpush1.bf16.xpose.msra.mxu0 0
    %698 = vmatprep.subr.bf16.mxu0 0
    %699 = vmatpush1.bf16.xpose.msra.mxu0 0
    %700 = vmatprep.subr.bf16.mxu0 0
    %701 = vmatpush1.bf16.xpose.msra.mxu0 0
    %702 = vmatprep.subr.bf16.mxu0 0
    %703 = vmatpush1.bf16.xpose.msra.mxu0 0
    %704 = vmatprep.subr.bf16.mxu0 0
    %705 = vmatpush1.bf16.xpose.msra.mxu0 0
    %706 = vmatprep.subr.bf16.mxu0 0
    %707 = vmatpush1.bf16.xpose.msra.mxu0 %v690
    %708 = vmatprep.subr.bf16.mxu0 0
    %709 = vmatpush2.bf16.xpose.msra.mxu0 0
    %710 = vmatprep.subr.bf16.mxu0 0
    %711 = vmatpush2.bf16.xpose.msra.mxu0 0
    %712 = vmatprep.subr.bf16.mxu0 0
    %713 = vmatpush2.bf16.xpose.msra.mxu0 0
    %714 = vmatprep.subr.bf16.mxu0 0
    %715 = vmatpush2.bf16.xpose.msra.mxu0 0
    %716 = vmatprep.subr.bf16.mxu0 0
    %717 = vmatpush2.bf16.xpose.msra.mxu0 0
    %718 = vmatprep.subr.bf16.mxu0 0
    %719 = vmatpush2.bf16.xpose.msra.mxu0 0
    %720 = vmatprep.subr.bf16.mxu0 0
    %721 = vmatpush2.bf16.xpose.msra.mxu0 0
    %722 = vmatprep.subr.bf16.mxu0 0
    %723 = vmatpush2.bf16.xpose.msra.mxu0 0
    %724 = vmatprep.mubr.bf16.mxu0 0
    %725 = vmatmul.mubr.bf16.gmra.mxu0 %v584
    %v726 = vpop.f32.mrf.mxu0
    %v727 = vadd.f32 %v685, %v726
    %v728 = vpop.f32.mrf.mxu0
    %v729 = vpop.f32.mrf.mxu0
    %v730 = vpop.f32.mrf.mxu0
    %731 = vdwg.mxu0
    %v732 = vsel %vm370, %v727, -inf
    %733 = vmax.xlane.f32.xlu0 %v732
    %v734 = vpop.xlane.xlu0 %733
    %v735 = vsub.f32 %v727, %v734
    %v736 = vmul.f32 %v735, 1.442695
    %v737 = vpow.pop %v736
    %v738 = vsel %vm370, %v737, 0.0
    %739 = vadd.xlane.f32.xlu0 %v738
    %v740 = vpop.xlane.xlu0 %739
    %v741 = vrcp.pop %v740
    %v742 = vmul.f32 %v737, %v741
    %v743 = vpack.c.bf16 %v742, %v742
    %745 = vrot.lane.b32.xlu0 %v369, 120
    %v746 = vpop.permute.xlu0 %745
    %v748 = vsel %vm370, %v743, 0
    %v751 = vsel %vm374, %v746, 0
    %753 = vmatprep.subr.bf16.mxu0 0
    %754 = vmatpush1.bf16.msra.mxu0 0
    %755 = vmatprep.subr.bf16.mxu0 0
    %756 = vmatpush1.bf16.msra.mxu0 0
    %757 = vmatprep.subr.bf16.mxu0 0
    %758 = vmatpush1.bf16.msra.mxu0 0
    %759 = vmatprep.subr.bf16.mxu0 0
    %760 = vmatpush1.bf16.msra.mxu0 0
    %761 = vmatprep.subr.bf16.mxu0 0
    %762 = vmatpush1.bf16.msra.mxu0 0
    %763 = vmatprep.subr.bf16.mxu0 0
    %764 = vmatpush1.bf16.msra.mxu0 0
    %765 = vmatprep.subr.bf16.mxu0 0
    %766 = vmatpush1.bf16.msra.mxu0 0
    %767 = vmatprep.subr.bf16.mxu0 0
    %768 = vmatpush1.bf16.msra.mxu0 %v751
    %769 = vmatprep.subr.bf16.mxu0 0
    %770 = vmatpush2.bf16.msra.mxu0 0
    %771 = vmatprep.subr.bf16.mxu0 0
    %772 = vmatpush2.bf16.msra.mxu0 0
    %773 = vmatprep.subr.bf16.mxu0 0
    %774 = vmatpush2.bf16.msra.mxu0 0
    %775 = vmatprep.subr.bf16.mxu0 0
    %776 = vmatpush2.bf16.msra.mxu0 0
    %777 = vmatprep.subr.bf16.mxu0 0
    %778 = vmatpush2.bf16.msra.mxu0 0
    %779 = vmatprep.subr.bf16.mxu0 0
    %780 = vmatpush2.bf16.msra.mxu0 0
    %781 = vmatprep.subr.bf16.mxu0 0
    %782 = vmatpush2.bf16.msra.mxu0 0
    %783 = vmatprep.subr.bf16.mxu0 0
    %784 = vmatpush2.bf16.msra.mxu0 0
    %785 = vmatprep.mubr.bf16.mxu0 0
    %786 = vmatmul.mubr.bf16.gmra.mxu0 %v748
    %v787 = vpop.f32.mrf.mxu0
    %v788 = vadd.f32 0.0, %v787
    %v789 = vpop.f32.mrf.mxu0
    %v790 = vpop.f32.mrf.mxu0
    %v791 = vpop.f32.mrf.mxu0
    %792 = vdwg.mxu0
    %794 = vrot.lane.b32.xlu0 %v788, 8
    %v795 = vpop.permute.xlu0 %794
    %vm797 = vcmask 130112
    %798 = vst.msk [vmem:[#allocation14] sm:$0xff] %vm797, %v795
    %799 = vrot.lane.b32.xlu0 %v367, 112
    %v800 = vpop.permute.xlu0 %799
    %v802 = vsel %vm370, %v800, 0
    %804 = vmatprep.subr.bf16.mxu0 0
    %805 = vmatpush1.bf16.msra.mxu0 0
    %806 = vmatprep.subr.bf16.mxu0 0
    %807 = vmatpush1.bf16.msra.mxu0 0
    %808 = vmatprep.subr.bf16.mxu0 0
    %809 = vmatpush1.bf16.msra.mxu0 0
    %810 = vmatprep.subr.bf16.mxu0 0
    %811 = vmatpush1.bf16.msra.mxu0 0
    %812 = vmatprep.subr.bf16.mxu0 0
    %813 = vmatpush1.bf16.msra.mxu0 0
    %814 = vmatprep.subr.bf16.mxu0 0
    %815 = vmatpush1.bf16.msra.mxu0 0
    %816 = vmatprep.subr.bf16.mxu0 0
    %817 = vmatpush1.bf16.msra.mxu0 0
    %818 = vmatprep.subr.bf16.mxu0 0
    %819 = vmatpush1.bf16.msra.mxu0 %v376
    %820 = vmatprep.subr.bf16.mxu0 0
    %821 = vmatpush2.bf16.msra.mxu0 0
    %822 = vmatprep.subr.bf16.mxu0 0
    %823 = vmatpush2.bf16.msra.mxu0 0
    %824 = vmatprep.subr.bf16.mxu0 0
    %825 = vmatpush2.bf16.msra.mxu0 0
    %826 = vmatprep.subr.bf16.mxu0 0
    %827 = vmatpush2.bf16.msra.mxu0 0
    %828 = vmatprep.subr.bf16.mxu0 0
    %829 = vmatpush2.bf16.msra.mxu0 0
    %830 = vmatprep.subr.bf16.mxu0 0
    %831 = vmatpush2.bf16.msra.mxu0 0
    %832 = vmatprep.subr.bf16.mxu0 0
    %833 = vmatpush2.bf16.msra.mxu0 0
    %834 = vmatprep.subr.bf16.mxu0 0
    %835 = vmatpush2.bf16.msra.mxu0 0
    %836 = vmatprep.mubr.bf16.mxu0 0
    %837 = vmatmul.mubr.bf16.gmra.mxu0 %v802
    %v838 = vpop.f32.mrf.mxu0
    %v839 = vadd.f32 0.0, %v838
    %v840 = vpop.f32.mrf.mxu0
    %v841 = vpop.f32.mrf.mxu0
    %v842 = vpop.f32.mrf.mxu0
    %843 = vdwg.mxu0
    %845 = vset.pattern.permute.xlu0 0
    %846 = vperm.xlu0 %845, %v839
    %v847 = vpop.permute.xlu0 %846
    %v849 = vsel %vm357, %v847, 0.0
    %850 = vset.pattern.permute.xlu0 1
    %851 = vperm.xlu0 %850, %v839
    %v852 = vpop.permute.xlu0 %851
    %v854 = vsel %vm358, %v852, 0.0
    %v855 = vadd.f32 %v849, %v854
    %856 = vset.pattern.permute.xlu0 2
    %857 = vperm.xlu0 %856, %v839
    %v858 = vpop.permute.xlu0 %857
    %v860 = vsel %vm359, %v858, 0.0
    %v861 = vadd.f32 %v855, %v860
    %862 = vset.pattern.permute.xlu0 3
    %863 = vperm.xlu0 %862, %v839
    %v864 = vpop.permute.xlu0 %863
    %v866 = vsel %vm360, %v864, 0.0
    %v867 = vadd.f32 %v861, %v866
    %868 = vset.pattern.permute.xlu0 4
    %869 = vperm.xlu0 %868, %v839
    %v870 = vpop.permute.xlu0 %869
    %v872 = vsel %vm361, %v870, 0.0
    %v873 = vadd.f32 %v867, %v872
    %874 = vset.pattern.permute.xlu0 5
    %875 = vperm.xlu0 %874, %v839
    %v876 = vpop.permute.xlu0 %875
    %v878 = vsel %vm362, %v876, 0.0
    %v879 = vadd.f32 %v873, %v878
    %880 = vset.pattern.permute.xlu0 6
    %881 = vperm.xlu0 %880, %v839
    %v882 = vpop.permute.xlu0 %881
    %v884 = vsel %vm363, %v882, 0.0
    %v885 = vadd.f32 %v879, %v884
    %886 = vset.pattern.permute.xlu0 7
    %887 = vperm.xlu0 %886, %v839
    %v888 = vpop.permute.xlu0 %887
    %v890 = vsel %vm364, %v888, 0.0
    %v891 = vadd.f32 %v885, %v890
    %892 = vset.pattern.permute.xlu0 8
    %893 = vperm.xlu0 %892, %v839
    %v894 = vpop.permute.xlu0 %893
    %v896 = vsel %vm365, %v894, 0.0
    %v897 = vadd.f32 %v891, %v896
    %898 = vset.pattern.permute.xlu0 9
    %899 = vperm.xlu0 %898, %v839
    %v900 = vpop.permute.xlu0 %899
    %v902 = vsel %vm366, %v900, 0.0
    %v903 = vadd.f32 %v897, %v902
    %904 = vrot.lane.b32.xlu0 %v368, 112
    %v905 = vpop.permute.xlu0 %904
    %v907 = vsel %vm370, %v905, 0
    %909 = vmatprep.subr.bf16.mxu0 0
    %910 = vmatpush1.bf16.xpose.msra.mxu0 0
    %911 = vmatprep.subr.bf16.mxu0 0
    %912 = vmatpush1.bf16.xpose.msra.mxu0 0
    %913 = vmatprep.subr.bf16.mxu0 0
    %914 = vmatpush1.bf16.xpose.msra.mxu0 0
    %915 = vmatprep.subr.bf16.mxu0 0
    %916 = vmatpush1.bf16.xpose.msra.mxu0 0
    %917 = vmatprep.subr.bf16.mxu0 0
    %918 = vmatpush1.bf16.xpose.msra.mxu0 0
    %919 = vmatprep.subr.bf16.mxu0 0
    %920 = vmatpush1.bf16.xpose.msra.mxu0 0
    %921 = vmatprep.subr.bf16.mxu0 0
    %922 = vmatpush1.bf16.xpose.msra.mxu0 0
    %923 = vmatprep.subr.bf16.mxu0 0
    %924 = vmatpush1.bf16.xpose.msra.mxu0 %v907
    %925 = vmatprep.subr.bf16.mxu0 0
    %926 = vmatpush2.bf16.xpose.msra.mxu0 0
    %927 = vmatprep.subr.bf16.mxu0 0
    %928 = vmatpush2.bf16.xpose.msra.mxu0 0
    %929 = vmatprep.subr.bf16.mxu0 0
    %930 = vmatpush2.bf16.xpose.msra.mxu0 0
    %931 = vmatprep.subr.bf16.mxu0 0
    %932 = vmatpush2.bf16.xpose.msra.mxu0 0
    %933 = vmatprep.subr.bf16.mxu0 0
    %934 = vmatpush2.bf16.xpose.msra.mxu0 0
    %935 = vmatprep.subr.bf16.mxu0 0
    %936 = vmatpush2.bf16.xpose.msra.mxu0 0
    %937 = vmatprep.subr.bf16.mxu0 0
    %938 = vmatpush2.bf16.xpose.msra.mxu0 0
    %939 = vmatprep.subr.bf16.mxu0 0
    %940 = vmatpush2.bf16.xpose.msra.mxu0 0
    %941 = vmatprep.mubr.bf16.mxu0 0
    %942 = vmatmul.mubr.bf16.gmra.mxu0 %v802
    %v943 = vpop.f32.mrf.mxu0
    %v944 = vadd.f32 %v903, %v943
    %v945 = vpop.f32.mrf.mxu0
    %v946 = vpop.f32.mrf.mxu0
    %v947 = vpop.f32.mrf.mxu0
    %948 = vdwg.mxu0
    %v949 = vsel %vm370, %v944, -inf
    %950 = vmax.xlane.f32.xlu0 %v949
    %v951 = vpop.xlane.xlu0 %950
    %v952 = vsub.f32 %v944, %v951
    %v953 = vmul.f32 %v952, 1.442695
    %v954 = vpow.pop %v953
    %v955 = vsel %vm370, %v954, 0.0
    %956 = vadd.xlane.f32.xlu0 %v955
    %v957 = vpop.xlane.xlu0 %956
    %v958 = vrcp.pop %v957
    %v959 = vmul.f32 %v954, %v958
    %v960 = vpack.c.bf16 %v959, %v959
    %961 = vrot.lane.b32.xlu0 %v369, 112
    %v962 = vpop.permute.xlu0 %961
    %v964 = vsel %vm370, %v960, 0
    %v967 = vsel %vm374, %v962, 0
    %969 = vmatprep.subr.bf16.mxu0 0
    %970 = vmatpush1.bf16.msra.mxu0 0
    %971 = vmatprep.subr.bf16.mxu0 0
    %972 = vmatpush1.bf16.msra.mxu0 0
    %973 = vmatprep.subr.bf16.mxu0 0
    %974 = vmatpush1.bf16.msra.mxu0 0
    %975 = vmatprep.subr.bf16.mxu0 0
    %976 = vmatpush1.bf16.msra.mxu0 0
    %977 = vmatprep.subr.bf16.mxu0 0
    %978 = vmatpush1.bf16.msra.mxu0 0
    %979 = vmatprep.subr.bf16.mxu0 0
    %980 = vmatpush1.bf16.msra.mxu0 0
    %981 = vmatprep.subr.bf16.mxu0 0
    %982 = vmatpush1.bf16.msra.mxu0 0
    %983 = vmatprep.subr.bf16.mxu0 0
    %984 = vmatpush1.bf16.msra.mxu0 %v967
    %985 = vmatprep.subr.bf16.mxu0 0
    %986 = vmatpush2.bf16.msra.mxu0 0
    %987 = vmatprep.subr.bf16.mxu0 0
    %988 = vmatpush2.bf16.msra.mxu0 0
    %989 = vmatprep.subr.bf16.mxu0 0
    %990 = vmatpush2.bf16.msra.mxu0 0
    %991 = vmatprep.subr.bf16.mxu0 0
    %992 = vmatpush2.bf16.msra.mxu0 0
    %993 = vmatprep.subr.bf16.mxu0 0
    %994 = vmatpush2.bf16.msra.mxu0 0
    %995 = vmatprep.subr.bf16.mxu0 0
    %996 = vmatpush2.bf16.msra.mxu0 0
    %997 = vmatprep.subr.bf16.mxu0 0
    %998 = vmatpush2.bf16.msra.mxu0 0
    %999 = vmatprep.subr.bf16.mxu0 0
    %1000 = vmatpush2.bf16.msra.mxu0 0
    %1001 = vmatprep.mubr.bf16.mxu0 0
    %1002 = vmatmul.mubr.bf16.gmra.mxu0 %v964
    %v1003 = vpop.f32.mrf.mxu0
    %v1004 = vadd.f32 0.0, %v1003
    %v1005 = vpop.f32.mrf.mxu0
    %v1006 = vpop.f32.mrf.mxu0
    %v1007 = vpop.f32.mrf.mxu0
    %1008 = vdwg.mxu0
    %1010 = vrot.lane.b32.xlu0 %v1004, 16
    %v1011 = vpop.permute.xlu0 %1010
    %vm1013 = vcmask 195712
    %1014 = vst.msk [vmem:[#allocation14] sm:$0xff] %vm1013, %v1011
    %1015 = vrot.lane.b32.xlu0 %v367, 104
    %v1016 = vpop.permute.xlu0 %1015
    %v1018 = vsel %vm370, %v1016, 0
    %1020 = vmatprep.subr.bf16.mxu0 0
    %1021 = vmatpush1.bf16.msra.mxu0 0
    %1022 = vmatprep.subr.bf16.mxu0 0
    %1023 = vmatpush1.bf16.msra.mxu0 0
    %1024 = vmatprep.subr.bf16.mxu0 0
    %1025 = vmatpush1.bf16.msra.mxu0 0
    %1026 = vmatprep.subr.bf16.mxu0 0
    %1027 = vmatpush1.bf16.msra.mxu0 0
    %1028 = vmatprep.subr.bf16.mxu0 0
    %1029 = vmatpush1.bf16.msra.mxu0 0
    %1030 = vmatprep.subr.bf16.mxu0 0
    %1031 = vmatpush1.bf16.msra.mxu0 0
    %1032 = vmatprep.subr.bf16.mxu0 0
    %1033 = vmatpush1.bf16.msra.mxu0 0
    %1034 = vmatprep.subr.bf16.mxu0 0
    %1035 = vmatpush1.bf16.msra.mxu0 %v376
    %1036 = vmatprep.subr.bf16.mxu0 0
    %1037 = vmatpush2.bf16.msra.mxu0 0
    %1038 = vmatprep.subr.bf16.mxu0 0
    %1039 = vmatpush2.bf16.msra.mxu0 0
    %1040 = vmatprep.subr.bf16.mxu0 0
    %1041 = vmatpush2.bf16.msra.mxu0 0
    %1042 = vmatprep.subr.bf16.mxu0 0
    %1043 = vmatpush2.bf16.msra.mxu0 0
    %1044 = vmatprep.subr.bf16.mxu0 0
    %1045 = vmatpush2.bf16.msra.mxu0 0
    %1046 = vmatprep.subr.bf16.mxu0 0
    %1047 = vmatpush2.bf16.msra.mxu0 0
    %1048 = vmatprep.subr.bf16.mxu0 0
    %1049 = vmatpush2.bf16.msra.mxu0 0
    %1050 = vmatprep.subr.bf16.mxu0 0
    %1051 = vmatpush2.bf16.msra.mxu0 0
    %1052 = vmatprep.mubr.bf16.mxu0 0
    %1053 = vmatmul.mubr.bf16.gmra.mxu0 %v1018
    %v1054 = vpop.f32.mrf.mxu0
    %v1055 = vadd.f32 0.0, %v1054
    %v1056 = vpop.f32.mrf.mxu0
    %v1057 = vpop.f32.mrf.mxu0
    %v1058 = vpop.f32.mrf.mxu0
    %1059 = vdwg.mxu0
    %1061 = vset.pattern.permute.xlu0 0
    %1062 = vperm.xlu0 %1061, %v1055
    %v1063 = vpop.permute.xlu0 %1062
    %v1065 = vsel %vm357, %v1063, 0.0
    %1066 = vset.pattern.permute.xlu0 1
    %1067 = vperm.xlu0 %1066, %v1055
    %v1068 = vpop.permute.xlu0 %1067
    %v1070 = vsel %vm358, %v1068, 0.0
    %v1071 = vadd.f32 %v1065, %v1070
    %1072 = vset.pattern.permute.xlu0 2
    %1073 = vperm.xlu0 %1072, %v1055
    %v1074 = vpop.permute.xlu0 %1073
    %v1076 = vsel %vm359, %v1074, 0.0
    %v1077 = vadd.f32 %v1071, %v1076
    %1078 = vset.pattern.permute.xlu0 3
    %1079 = vperm.xlu0 %1078, %v1055
    %v1080 = vpop.permute.xlu0 %1079
    %v1082 = vsel %vm360, %v1080, 0.0
    %v1083 = vadd.f32 %v1077, %v1082
    %1084 = vset.pattern.permute.xlu0 4
    %1085 = vperm.xlu0 %1084, %v1055
    %v1086 = vpop.permute.xlu0 %1085
    %v1088 = vsel %vm361, %v1086, 0.0
    %v1089 = vadd.f32 %v1083, %v1088
    %1090 = vset.pattern.permute.xlu0 5
    %1091 = vperm.xlu0 %1090, %v1055
    %v1092 = vpop.permute.xlu0 %1091
    %v1094 = vsel %vm362, %v1092, 0.0
    %v1095 = vadd.f32 %v1089, %v1094
    %1096 = vset.pattern.permute.xlu0 6
    %1097 = vperm.xlu0 %1096, %v1055
    %v1098 = vpop.permute.xlu0 %1097
    %v1100 = vsel %vm363, %v1098, 0.0
    %v1101 = vadd.f32 %v1095, %v1100
    %1102 = vset.pattern.permute.xlu0 7
    %1103 = vperm.xlu0 %1102, %v1055
    %v1104 = vpop.permute.xlu0 %1103
    %v1106 = vsel %vm364, %v1104, 0.0
    %v1107 = vadd.f32 %v1101, %v1106
    %1108 = vset.pattern.permute.xlu0 8
    %1109 = vperm.xlu0 %1108, %v1055
    %v1110 = vpop.permute.xlu0 %1109
    %v1112 = vsel %vm365, %v1110, 0.0
    %v1113 = vadd.f32 %v1107, %v1112
    %1114 = vset.pattern.permute.xlu0 9
    %1115 = vperm.xlu0 %1114, %v1055
    %v1116 = vpop.permute.xlu0 %1115
    %v1118 = vsel %vm366, %v1116, 0.0
    %v1119 = vadd.f32 %v1113, %v1118
    %1120 = vrot.lane.b32.xlu0 %v368, 104
    %v1121 = vpop.permute.xlu0 %1120
    %v1123 = vsel %vm370, %v1121, 0
    %1125 = vmatprep.subr.bf16.mxu0 0
    %1126 = vmatpush1.bf16.xpose.msra.mxu0 0
    %1127 = vmatprep.subr.bf16.mxu0 0
    %1128 = vmatpush1.bf16.xpose.msra.mxu0 0
    %1129 = vmatprep.subr.bf16.mxu0 0
    %1130 = vmatpush1.bf16.xpose.msra.mxu0 0
    %1131 = vmatprep.subr.bf16.mxu0 0
    %1132 = vmatpush1.bf16.xpose.msra.mxu0 0
    %1133 = vmatprep.subr.bf16.mxu0 0
    %1134 = vmatpush1.bf16.xpose.msra.mxu0 0
    %1135 = vmatprep.subr.bf16.mxu0 0
    %1136 = vmatpush1.bf16.xpose.msra.mxu0 0
    %1137 = vmatprep.subr.bf16.mxu0 0
    %1138 = vmatpush1.bf16.xpose.msra.mxu0 0
    %1139 = vmatprep.subr.bf16.mxu0 0
    %1140 = vmatpush1.bf16.xpose.msra.mxu0 %v1123
    %1141 = vmatprep.subr.bf16.mxu0 0
    %1142 = vmatpush2.bf16.xpose.msra.mxu0 0
    %1143 = vmatprep.subr.bf16.mxu0 0
    %1144 = vmatpush2.bf16.xpose.msra.mxu0 0
    %1145 = vmatprep.subr.bf16.mxu0 0
    %1146 = vmatpush2.bf16.xpose.msra.mxu0 0
    %1147 = vmatprep.subr.bf16.mxu0 0
    %1148 = vmatpush2.bf16.xpose.msra.mxu0 0
    %1149 = vmatprep.subr.bf16.mxu0 0
    %1150 = vmatpush2.bf16.xpose.msra.mxu0 0
    %1151 = vmatprep.subr.bf16.mxu0 0
    %1152 = vmatpush2.bf16.xpose.msra.mxu0 0
    %1153 = vmatprep.subr.bf16.mxu0 0
    %1154 = vmatpush2.bf16.xpose.msra.mxu0 0
    %1155 = vmatprep.subr.bf16.mxu0 0
    %1156 = vmatpush2.bf16.xpose.msra.mxu0 0
    %1157 = vmatprep.mubr.bf16.mxu0 0
    %1158 = vmatmul.mubr.bf16.gmra.mxu0 %v1018
    %v1159 = vpop.f32.mrf.mxu0
    %v1160 = vadd.f32 %v1119, %v1159
    %v1161 = vpop.f32.mrf.mxu0
    %v1162 = vpop.f32.mrf.mxu0
    %v1163 = vpop.f32.mrf.mxu0
    %1164 = vdwg.mxu0
    %v1165 = vsel %vm370, %v1160, -inf
    %1166 = vmax.xlane.f32.xlu0 %v1165
    %v1167 = vpop.xlane.xlu0 %1166
    %v1168 = vsub.f32 %v1160, %v1167
    %v1169 = vmul.f32 %v1168, 1.442695
    %v1170 = vpow.pop %v1169
    %v1171 = vsel %vm370, %v1170, 0.0
    %1172 = vadd.xlane.f32.xlu0 %v1171
    %v1173 = vpop.xlane.xlu0 %1172
    %v1174 = vrcp.pop %v1173
    %v1175 = vmul.f32 %v1170, %v1174
    %v1176 = vpack.c.bf16 %v1175, %v1175
    %1177 = vrot.lane.b32.xlu0 %v369, 104
    %v1178 = vpop.permute.xlu0 %1177
    %v1180 = vsel %vm370, %v1176, 0
    %v1183 = vsel %vm374, %v1178, 0
    %1185 = vmatprep.subr.bf16.mxu0 0
    %1186 = vmatpush1.bf16.msra.mxu0 0
    %1187 = vmatprep.subr.bf16.mxu0 0
    %1188 = vmatpush1.bf16.msra.mxu0 0
    %1189 = vmatprep.subr.bf16.mxu0 0
    %1190 = vmatpush1.bf16.msra.mxu0 0
    %1191 = vmatprep.subr.bf16.mxu0 0
    %1192 = vmatpush1.bf16.msra.mxu0 0
    %1193 = vmatprep.subr.bf16.mxu0 0
    %1194 = vmatpush1.bf16.msra.mxu0 0
    %1195 = vmatprep.subr.bf16.mxu0 0
    %1196 = vmatpush1.bf16.msra.mxu0 0
    %1197 = vmatprep.subr.bf16.mxu0 0
    %1198 = vmatpush1.bf16.msra.mxu0 0
    %1199 = vmatprep.subr.bf16.mxu0 0
    %1200 = vmatpush1.bf16.msra.mxu0 %v1183
    %1201 = vmatprep.subr.bf16.mxu0 0
    %1202 = vmatpush2.bf16.msra.mxu0 0
    %1203 = vmatprep.subr.bf16.mxu0 0
    %1204 = vmatpush2.bf16.msra.mxu0 0
    %1205 = vmatprep.subr.bf16.mxu0 0
    %1206 = vmatpush2.bf16.msra.mxu0 0
    %1207 = vmatprep.subr.bf16.mxu0 0
    %1208 = vmatpush2.bf16.msra.mxu0 0
    %1209 = vmatprep.subr.bf16.mxu0 0
    %1210 = vmatpush2.bf16.msra.mxu0 0
    %1211 = vmatprep.subr.bf16.mxu0 0
    %1212 = vmatpush2.bf16.msra.mxu0 0
    %1213 = vmatprep.subr.bf16.mxu0 0
    %1214 = vmatpush2.bf16.msra.mxu0 0
    %1215 = vmatprep.subr.bf16.mxu0 0
    %1216 = vmatpush2.bf16.msra.mxu0 0
    %1217 = vmatprep.mubr.bf16.mxu0 0
    %1218 = vmatmul.mubr.bf16.gmra.mxu0 %v1180
    %v1219 = vpop.f32.mrf.mxu0
    %v1220 = vadd.f32 0.0, %v1219
    %v1221 = vpop.f32.mrf.mxu0
    %v1222 = vpop.f32.mrf.mxu0
    %v1223 = vpop.f32.mrf.mxu0
    %1224 = vdwg.mxu0
    %1226 = vrot.lane.b32.xlu0 %v1220, 24
    %v1227 = vpop.permute.xlu0 %1226
    %vm1229 = vcmask 261312
    %1230 = vst.msk [vmem:[#allocation14] sm:$0xff] %vm1229, %v1227
    %s1231 = scalar_lea.vmem %s9, 8
    %v1232 = vld [vmem:[%s1231] sm:$0xff]
    %s1233 = scalar_lea.vmem %s10, 2
    %v1234 = vld [vmem:[%s1233] sm:$0x3]
    %1236 = vset.pattern.permute.xlu0 0
    %1237 = vperm.xlu0 %1236, %v1232
    %v1238 = vpop.permute.xlu0 %1237
    %v1240 = vlaneseq
    %v1241 = vshrl.u32 %v1240, 7
    %v1242 = vsub.s32 0, %v1241
    %v1243 = vrot.slane %v1234, %v1242
    %v1244 = vsub.f32 %v1238, %v1243
    %1245 = vset.pattern.permute.xlu0 1
    %1246 = vperm.xlu0 %1245, %v1232
    %v1247 = vpop.permute.xlu0 %1246
    %v1249 = vlaneseq
    %v1250 = vshrl.u32 %v1249, 7
    %v1251 = vsub.s32 1, %v1250
    %v1252 = vrot.slane %v1234, %v1251
    %v1253 = vsub.f32 %v1247, %v1252
    %v1254 = vmul.f32 %v1244, %v1244
    %v1255 = vmul.f32 %v1253, %v1253
    %v1256 = vadd.f32 %v1254, %v1255
    %v1257 = vrsqrt.pop %v1256
    %v1258 = vmul.f32 %v1256, %v1257
    %vm1259 = vcmp.eq.f32.partialorder %v1256, inf
    %v1260 = vsel %vm1259, %v1256, %v1258
    %vm1261 = vcmp.eq.f32.partialorder %v1256, 0.0
    %v1262 = vand.u32 %v1256, 2147483648
    %v1263 = vsel %vm1261, %v1262, %v1260
    %v1264 = vmul.f32 %v1263, %v350
    %v1265 = vmul.f32 %v1264, 9.0
    %v1266 = vround.ne.pseudo %v1265
    %v1267 = vmax.f32 %v1266, 0.0
    %v1268 = vmin.f32 %v1267, 9.0
    %v1269 = vcvt.f32.s32.to.zero.pseudo %v1268
    %vm1270 = vcmp.eq.s32.totalorder %v1269, 0
    %vm1271 = vcmp.eq.s32.totalorder %v1269, 1
    %vm1272 = vcmp.eq.s32.totalorder %v1269, 2
    %vm1273 = vcmp.eq.s32.totalorder %v1269, 3
    %vm1274 = vcmp.eq.s32.totalorder %v1269, 4
    %vm1275 = vcmp.eq.s32.totalorder %v1269, 5
    %vm1276 = vcmp.eq.s32.totalorder %v1269, 6
    %vm1277 = vcmp.eq.s32.totalorder %v1269, 7
    %vm1278 = vcmp.eq.s32.totalorder %v1269, 8
    %vm1279 = vcmp.eq.s32.totalorder %v1269, 9
    %v1280 = vpack.c.bf16 %v214, %v214
    %v1281 = vpack.c.bf16 %v263, %v263
    %v1282 = vpack.c.bf16 %v314, %v314
    %v1284 = vsel %vm370, %v1280, 0
    %1286 = vmatprep.subr.bf16.mxu0 0
    %1287 = vmatpush1.bf16.msra.mxu0 0
    %1288 = vmatprep.subr.bf16.mxu0 0
    %1289 = vmatpush1.bf16.msra.mxu0 0
    %1290 = vmatprep.subr.bf16.mxu0 0
    %1291 = vmatpush1.bf16.msra.mxu0 0
    %1292 = vmatprep.subr.bf16.mxu0 0
    %1293 = vmatpush1.bf16.msra.mxu0 0
    %1294 = vmatprep.subr.bf16.mxu0 0
    %1295 = vmatpush1.bf16.msra.mxu0 0
    %1296 = vmatprep.subr.bf16.mxu0 0
    %1297 = vmatpush1.bf16.msra.mxu0 0
    %1298 = vmatprep.subr.bf16.mxu0 0
    %1299 = vmatpush1.bf16.msra.mxu0 0
    %1300 = vmatprep.subr.bf16.mxu0 0
    %1301 = vmatpush1.bf16.msra.mxu0 %v376
    %1302 = vmatprep.subr.bf16.mxu0 0
    %1303 = vmatpush2.bf16.msra.mxu0 0
    %1304 = vmatprep.subr.bf16.mxu0 0
    %1305 = vmatpush2.bf16.msra.mxu0 0
    %1306 = vmatprep.subr.bf16.mxu0 0
    %1307 = vmatpush2.bf16.msra.mxu0 0
    %1308 = vmatprep.subr.bf16.mxu0 0
    %1309 = vmatpush2.bf16.msra.mxu0 0
    %1310 = vmatprep.subr.bf16.mxu0 0
    %1311 = vmatpush2.bf16.msra.mxu0 0
    %1312 = vmatprep.subr.bf16.mxu0 0
    %1313 = vmatpush2.bf16.msra.mxu0 0
    %1314 = vmatprep.subr.bf16.mxu0 0
    %1315 = vmatpush2.bf16.msra.mxu0 0
    %1316 = vmatprep.subr.bf16.mxu0 0
    %1317 = vmatpush2.bf16.msra.mxu0 0
    %1318 = vmatprep.mubr.bf16.mxu0 0
    %1319 = vmatmul.mubr.bf16.gmra.mxu0 %v1284
    %v1320 = vpop.f32.mrf.mxu0
    %v1321 = vadd.f32 0.0, %v1320
    %v1322 = vpop.f32.mrf.mxu0
    %v1323 = vpop.f32.mrf.mxu0
    %v1324 = vpop.f32.mrf.mxu0
    %1325 = vdwg.mxu0
    %1327 = vset.pattern.permute.xlu0 0
    %1328 = vperm.xlu0 %1327, %v1321
    %v1329 = vpop.permute.xlu0 %1328
    %v1331 = vsel %vm1270, %v1329, 0.0
    %1332 = vset.pattern.permute.xlu0 1
    %1333 = vperm.xlu0 %1332, %v1321
    %v1334 = vpop.permute.xlu0 %1333
    %v1336 = vsel %vm1271, %v1334, 0.0
    %v1337 = vadd.f32 %v1331, %v1336
    %1338 = vset.pattern.permute.xlu0 2
    %1339 = vperm.xlu0 %1338, %v1321
    %v1340 = vpop.permute.xlu0 %1339
    %v1342 = vsel %vm1272, %v1340, 0.0
    %v1343 = vadd.f32 %v1337, %v1342
    %1344 = vset.pattern.permute.xlu0 3
    %1345 = vperm.xlu0 %1344, %v1321
    %v1346 = vpop.permute.xlu0 %1345
    %v1348 = vsel %vm1273, %v1346, 0.0
    %v1349 = vadd.f32 %v1343, %v1348
    %1350 = vset.pattern.permute.xlu0 4
    %1351 = vperm.xlu0 %1350, %v1321
    %v1352 = vpop.permute.xlu0 %1351
    %v1354 = vsel %vm1274, %v1352, 0.0
    %v1355 = vadd.f32 %v1349, %v1354
    %1356 = vset.pattern.permute.xlu0 5
    %1357 = vperm.xlu0 %1356, %v1321
    %v1358 = vpop.permute.xlu0 %1357
    %v1360 = vsel %vm1275, %v1358, 0.0
    %v1361 = vadd.f32 %v1355, %v1360
    %1362 = vset.pattern.permute.xlu0 6
    %1363 = vperm.xlu0 %1362, %v1321
    %v1364 = vpop.permute.xlu0 %1363
    %v1366 = vsel %vm1276, %v1364, 0.0
    %v1367 = vadd.f32 %v1361, %v1366
    %1368 = vset.pattern.permute.xlu0 7
    %1369 = vperm.xlu0 %1368, %v1321
    %v1370 = vpop.permute.xlu0 %1369
    %v1372 = vsel %vm1277, %v1370, 0.0
    %v1373 = vadd.f32 %v1367, %v1372
    %1374 = vset.pattern.permute.xlu0 8
    %1375 = vperm.xlu0 %1374, %v1321
    %v1376 = vpop.permute.xlu0 %1375
    %v1378 = vsel %vm1278, %v1376, 0.0
    %v1379 = vadd.f32 %v1373, %v1378
    %1380 = vset.pattern.permute.xlu0 9
    %1381 = vperm.xlu0 %1380, %v1321
    %v1382 = vpop.permute.xlu0 %1381
    %v1384 = vsel %vm1279, %v1382, 0.0
    %v1385 = vadd.f32 %v1379, %v1384
    %v1387 = vsel %vm370, %v1281, 0
    %1389 = vmatprep.subr.bf16.mxu0 0
    %1390 = vmatpush1.bf16.xpose.msra.mxu0 0
    %1391 = vmatprep.subr.bf16.mxu0 0
    %1392 = vmatpush1.bf16.xpose.msra.mxu0 0
    %1393 = vmatprep.subr.bf16.mxu0 0
    %1394 = vmatpush1.bf16.xpose.msra.mxu0 0
    %1395 = vmatprep.subr.bf16.mxu0 0
    %1396 = vmatpush1.bf16.xpose.msra.mxu0 0
    %1397 = vmatprep.subr.bf16.mxu0 0
    %1398 = vmatpush1.bf16.xpose.msra.mxu0 0
    %1399 = vmatprep.subr.bf16.mxu0 0
    %1400 = vmatpush1.bf16.xpose.msra.mxu0 0
    %1401 = vmatprep.subr.bf16.mxu0 0
    %1402 = vmatpush1.bf16.xpose.msra.mxu0 0
    %1403 = vmatprep.subr.bf16.mxu0 0
    %1404 = vmatpush1.bf16.xpose.msra.mxu0 %v1387
    %1405 = vmatprep.subr.bf16.mxu0 0
    %1406 = vmatpush2.bf16.xpose.msra.mxu0 0
    %1407 = vmatprep.subr.bf16.mxu0 0
    %1408 = vmatpush2.bf16.xpose.msra.mxu0 0
    %1409 = vmatprep.subr.bf16.mxu0 0
    %1410 = vmatpush2.bf16.xpose.msra.mxu0 0
    %1411 = vmatprep.subr.bf16.mxu0 0
    %1412 = vmatpush2.bf16.xpose.msra.mxu0 0
    %1413 = vmatprep.subr.bf16.mxu0 0
    %1414 = vmatpush2.bf16.xpose.msra.mxu0 0
    %1415 = vmatprep.subr.bf16.mxu0 0
    %1416 = vmatpush2.bf16.xpose.msra.mxu0 0
    %1417 = vmatprep.subr.bf16.mxu0 0
    %1418 = vmatpush2.bf16.xpose.msra.mxu0 0
    %1419 = vmatprep.subr.bf16.mxu0 0
    %1420 = vmatpush2.bf16.xpose.msra.mxu0 0
    %1421 = vmatprep.mubr.bf16.mxu0 0
    %1422 = vmatmul.mubr.bf16.gmra.mxu0 %v1284
    %v1423 = vpop.f32.mrf.mxu0
    %v1424 = vadd.f32 %v1385, %v1423
    %v1425 = vpop.f32.mrf.mxu0
    %v1426 = vpop.f32.mrf.mxu0
    %v1427 = vpop.f32.mrf.mxu0
    %1428 = vdwg.mxu0
    %v1429 = vsel %vm370, %v1424, -inf
    %1430 = vmax.xlane.f32.xlu0 %v1429
    %v1431 = vpop.xlane.xlu0 %1430
    %v1432 = vsub.f32 %v1424, %v1431
    %v1433 = vmul.f32 %v1432, 1.442695
    %v1434 = vpow.pop %v1433
    %v1435 = vsel %vm370, %v1434, 0.0
    %1436 = vadd.xlane.f32.xlu0 %v1435
    %v1437 = vpop.xlane.xlu0 %1436
    %v1438 = vrcp.pop %v1437
    %v1439 = vmul.f32 %v1434, %v1438
    %v1440 = vpack.c.bf16 %v1439, %v1439
    %v1442 = vsel %vm370, %v1440, 0
    %v1445 = vsel %vm374, %v1282, 0
    %1447 = vmatprep.subr.bf16.mxu0 0
    %1448 = vmatpush1.bf16.msra.mxu0 0
    %1449 = vmatprep.subr.bf16.mxu0 0
    %1450 = vmatpush1.bf16.msra.mxu0 0
    %1451 = vmatprep.subr.bf16.mxu0 0
    %1452 = vmatpush1.bf16.msra.mxu0 0
    %1453 = vmatprep.subr.bf16.mxu0 0
    %1454 = vmatpush1.bf16.msra.mxu0 0
    %1455 = vmatprep.subr.bf16.mxu0 0
    %1456 = vmatpush1.bf16.msra.mxu0 0
    %1457 = vmatprep.subr.bf16.mxu0 0
    %1458 = vmatpush1.bf16.msra.mxu0 0
    %1459 = vmatprep.subr.bf16.mxu0 0
    %1460 = vmatpush1.bf16.msra.mxu0 0
    %1461 = vmatprep.subr.bf16.mxu0 0
    %1462 = vmatpush1.bf16.msra.mxu0 %v1445
    %1463 = vmatprep.subr.bf16.mxu0 0
    %1464 = vmatpush2.bf16.msra.mxu0 0
    %1465 = vmatprep.subr.bf16.mxu0 0
    %1466 = vmatpush2.bf16.msra.mxu0 0
    %1467 = vmatprep.subr.bf16.mxu0 0
    %1468 = vmatpush2.bf16.msra.mxu0 0
    %1469 = vmatprep.subr.bf16.mxu0 0
    %1470 = vmatpush2.bf16.msra.mxu0 0
    %1471 = vmatprep.subr.bf16.mxu0 0
    %1472 = vmatpush2.bf16.msra.mxu0 0
    %1473 = vmatprep.subr.bf16.mxu0 0
    %1474 = vmatpush2.bf16.msra.mxu0 0
    %1475 = vmatprep.subr.bf16.mxu0 0
    %1476 = vmatpush2.bf16.msra.mxu0 0
    %1477 = vmatprep.subr.bf16.mxu0 0
    %1478 = vmatpush2.bf16.msra.mxu0 0
    %1479 = vmatprep.mubr.bf16.mxu0 0
    %1480 = vmatmul.mubr.bf16.gmra.mxu0 %v1442
    %v1481 = vpop.f32.mrf.mxu0
    %v1482 = vadd.f32 0.0, %v1481
    %v1483 = vpop.f32.mrf.mxu0
    %v1484 = vpop.f32.mrf.mxu0
    %v1485 = vpop.f32.mrf.mxu0
    %1486 = vdwg.mxu0
    %s1487 = scalar_lea.vmem [#allocation14], 8
    %1488 = vst.msk [vmem:[%s1487] sm:$0xff] %vm370, %v1482
    %1490 = vrot.lane.b32.xlu0 %v1280, 120
    %v1491 = vpop.permute.xlu0 %1490
    %v1493 = vsel %vm370, %v1491, 0
    %1495 = vmatprep.subr.bf16.mxu0 0
    %1496 = vmatpush1.bf16.msra.mxu0 0
    %1497 = vmatprep.subr.bf16.mxu0 0
    %1498 = vmatpush1.bf16.msra.mxu0 0
    %1499 = vmatprep.subr.bf16.mxu0 0
    %1500 = vmatpush1.bf16.msra.mxu0 0
    %1501 = vmatprep.subr.bf16.mxu0 0
    %1502 = vmatpush1.bf16.msra.mxu0 0
    %1503 = vmatprep.subr.bf16.mxu0 0
    %1504 = vmatpush1.bf16.msra.mxu0 0
    %1505 = vmatprep.subr.bf16.mxu0 0
    %1506 = vmatpush1.bf16.msra.mxu0 0
    %1507 = vmatprep.subr.bf16.mxu0 0
    %1508 = vmatpush1.bf16.msra.mxu0 0
    %1509 = vmatprep.subr.bf16.mxu0 0
    %1510 = vmatpush1.bf16.msra.mxu0 %v376
    %1511 = vmatprep.subr.bf16.mxu0 0
    %1512 = vmatpush2.bf16.msra.mxu0 0
    %1513 = vmatprep.subr.bf16.mxu0 0
    %1514 = vmatpush2.bf16.msra.mxu0 0
    %1515 = vmatprep.subr.bf16.mxu0 0
    %1516 = vmatpush2.bf16.msra.mxu0 0
    %1517 = vmatprep.subr.bf16.mxu0 0
    %1518 = vmatpush2.bf16.msra.mxu0 0
    %1519 = vmatprep.subr.bf16.mxu0 0
    %1520 = vmatpush2.bf16.msra.mxu0 0
    %1521 = vmatprep.subr.bf16.mxu0 0
    %1522 = vmatpush2.bf16.msra.mxu0 0
    %1523 = vmatprep.subr.bf16.mxu0 0
    %1524 = vmatpush2.bf16.msra.mxu0 0
    %1525 = vmatprep.subr.bf16.mxu0 0
    %1526 = vmatpush2.bf16.msra.mxu0 0
    %1527 = vmatprep.mubr.bf16.mxu0 0
    %1528 = vmatmul.mubr.bf16.gmra.mxu0 %v1493
    %v1529 = vpop.f32.mrf.mxu0
    %v1530 = vadd.f32 0.0, %v1529
    %v1531 = vpop.f32.mrf.mxu0
    %v1532 = vpop.f32.mrf.mxu0
    %v1533 = vpop.f32.mrf.mxu0
    %1534 = vdwg.mxu0
    %1536 = vset.pattern.permute.xlu0 0
    %1537 = vperm.xlu0 %1536, %v1530
    %v1538 = vpop.permute.xlu0 %1537
    %v1540 = vsel %vm1270, %v1538, 0.0
    %1541 = vset.pattern.permute.xlu0 1
    %1542 = vperm.xlu0 %1541, %v1530
    %v1543 = vpop.permute.xlu0 %1542
    %v1545 = vsel %vm1271, %v1543, 0.0
    %v1546 = vadd.f32 %v1540, %v1545
    %1547 = vset.pattern.permute.xlu0 2
    %1548 = vperm.xlu0 %1547, %v1530
    %v1549 = vpop.permute.xlu0 %1548
    %v1551 = vsel %vm1272, %v1549, 0.0
    %v1552 = vadd.f32 %v1546, %v1551
    %1553 = vset.pattern.permute.xlu0 3
    %1554 = vperm.xlu0 %1553, %v1530
    %v1555 = vpop.permute.xlu0 %1554
    %v1557 = vsel %vm1273, %v1555, 0.0
    %v1558 = vadd.f32 %v1552, %v1557
    %1559 = vset.pattern.permute.xlu0 4
    %1560 = vperm.xlu0 %1559, %v1530
    %v1561 = vpop.permute.xlu0 %1560
    %v1563 = vsel %vm1274, %v1561, 0.0
    %v1564 = vadd.f32 %v1558, %v1563
    %1565 = vset.pattern.permute.xlu0 5
    %1566 = vperm.xlu0 %1565, %v1530
    %v1567 = vpop.permute.xlu0 %1566
    %v1569 = vsel %vm1275, %v1567, 0.0
    %v1570 = vadd.f32 %v1564, %v1569
    %1571 = vset.pattern.permute.xlu0 6
    %1572 = vperm.xlu0 %1571, %v1530
    %v1573 = vpop.permute.xlu0 %1572
    %v1575 = vsel %vm1276, %v1573, 0.0
    %v1576 = vadd.f32 %v1570, %v1575
    %1577 = vset.pattern.permute.xlu0 7
    %1578 = vperm.xlu0 %1577, %v1530
    %v1579 = vpop.permute.xlu0 %1578
    %v1581 = vsel %vm1277, %v1579, 0.0
    %v1582 = vadd.f32 %v1576, %v1581
    %1583 = vset.pattern.permute.xlu0 8
    %1584 = vperm.xlu0 %1583, %v1530
    %v1585 = vpop.permute.xlu0 %1584
    %v1587 = vsel %vm1278, %v1585, 0.0
    %v1588 = vadd.f32 %v1582, %v1587
    %1589 = vset.pattern.permute.xlu0 9
    %1590 = vperm.xlu0 %1589, %v1530
    %v1591 = vpop.permute.xlu0 %1590
    %v1593 = vsel %vm1279, %v1591, 0.0
    %v1594 = vadd.f32 %v1588, %v1593
    %1596 = vrot.lane.b32.xlu0 %v1281, 120
    %v1597 = vpop.permute.xlu0 %1596
    %v1599 = vsel %vm370, %v1597, 0
    %1601 = vmatprep.subr.bf16.mxu0 0
    %1602 = vmatpush1.bf16.xpose.msra.mxu0 0
    %1603 = vmatprep.subr.bf16.mxu0 0
    %1604 = vmatpush1.bf16.xpose.msra.mxu0 0
    %1605 = vmatprep.subr.bf16.mxu0 0
    %1606 = vmatpush1.bf16.xpose.msra.mxu0 0
    %1607 = vmatprep.subr.bf16.mxu0 0
    %1608 = vmatpush1.bf16.xpose.msra.mxu0 0
    %1609 = vmatprep.subr.bf16.mxu0 0
    %1610 = vmatpush1.bf16.xpose.msra.mxu0 0
    %1611 = vmatprep.subr.bf16.mxu0 0
    %1612 = vmatpush1.bf16.xpose.msra.mxu0 0
    %1613 = vmatprep.subr.bf16.mxu0 0
    %1614 = vmatpush1.bf16.xpose.msra.mxu0 0
    %1615 = vmatprep.subr.bf16.mxu0 0
    %1616 = vmatpush1.bf16.xpose.msra.mxu0 %v1599
    %1617 = vmatprep.subr.bf16.mxu0 0
    %1618 = vmatpush2.bf16.xpose.msra.mxu0 0
    %1619 = vmatprep.subr.bf16.mxu0 0
    %1620 = vmatpush2.bf16.xpose.msra.mxu0 0
    %1621 = vmatprep.subr.bf16.mxu0 0
    %1622 = vmatpush2.bf16.xpose.msra.mxu0 0
    %1623 = vmatprep.subr.bf16.mxu0 0
    %1624 = vmatpush2.bf16.xpose.msra.mxu0 0
    %1625 = vmatprep.subr.bf16.mxu0 0
    %1626 = vmatpush2.bf16.xpose.msra.mxu0 0
    %1627 = vmatprep.subr.bf16.mxu0 0
    %1628 = vmatpush2.bf16.xpose.msra.mxu0 0
    %1629 = vmatprep.subr.bf16.mxu0 0
    %1630 = vmatpush2.bf16.xpose.msra.mxu0 0
    %1631 = vmatprep.subr.bf16.mxu0 0
    %1632 = vmatpush2.bf16.xpose.msra.mxu0 0
    %1633 = vmatprep.mubr.bf16.mxu0 0
    %1634 = vmatmul.mubr.bf16.gmra.mxu0 %v1493
    %v1635 = vpop.f32.mrf.mxu0
    %v1636 = vadd.f32 %v1594, %v1635
    %v1637 = vpop.f32.mrf.mxu0
    %v1638 = vpop.f32.mrf.mxu0
    %v1639 = vpop.f32.mrf.mxu0
    %1640 = vdwg.mxu0
    %v1641 = vsel %vm370, %v1636, -inf
    %1642 = vmax.xlane.f32.xlu0 %v1641
    %v1643 = vpop.xlane.xlu0 %1642
    %v1644 = vsub.f32 %v1636, %v1643
    %v1645 = vmul.f32 %v1644, 1.442695
    %v1646 = vpow.pop %v1645
    %v1647 = vsel %vm370, %v1646, 0.0
    %1648 = vadd.xlane.f32.xlu0 %v1647
    %v1649 = vpop.xlane.xlu0 %1648
    %v1650 = vrcp.pop %v1649
    %v1651 = vmul.f32 %v1646, %v1650
    %v1652 = vpack.c.bf16 %v1651, %v1651
    %1654 = vrot.lane.b32.xlu0 %v1282, 120
    %v1655 = vpop.permute.xlu0 %1654
    %v1657 = vsel %vm370, %v1652, 0
    %v1660 = vsel %vm374, %v1655, 0
    %1662 = vmatprep.subr.bf16.mxu0 0
    %1663 = vmatpush1.bf16.msra.mxu0 0
    %1664 = vmatprep.subr.bf16.mxu0 0
    %1665 = vmatpush1.bf16.msra.mxu0 0
    %1666 = vmatprep.subr.bf16.mxu0 0
    %1667 = vmatpush1.bf16.msra.mxu0 0
    %1668 = vmatprep.subr.bf16.mxu0 0
    %1669 = vmatpush1.bf16.msra.mxu0 0
    %1670 = vmatprep.subr.bf16.mxu0 0
    %1671 = vmatpush1.bf16.msra.mxu0 0
    %1672 = vmatprep.subr.bf16.mxu0 0
    %1673 = vmatpush1.bf16.msra.mxu0 0
    %1674 = vmatprep.subr.bf16.mxu0 0
    %1675 = vmatpush1.bf16.msra.mxu0 0
    %1676 = vmatprep.subr.bf16.mxu0 0
    %1677 = vmatpush1.bf16.msra.mxu0 %v1660
    %1678 = vmatprep.subr.bf16.mxu0 0
    %1679 = vmatpush2.bf16.msra.mxu0 0
    %1680 = vmatprep.subr.bf16.mxu0 0
    %1681 = vmatpush2.bf16.msra.mxu0 0
    %1682 = vmatprep.subr.bf16.mxu0 0
    %1683 = vmatpush2.bf16.msra.mxu0 0
    %1684 = vmatprep.subr.bf16.mxu0 0
    %1685 = vmatpush2.bf16.msra.mxu0 0
    %1686 = vmatprep.subr.bf16.mxu0 0
    %1687 = vmatpush2.bf16.msra.mxu0 0
    %1688 = vmatprep.subr.bf16.mxu0 0
    %1689 = vmatpush2.bf16.msra.mxu0 0
    %1690 = vmatprep.subr.bf16.mxu0 0
    %1691 = vmatpush2.bf16.msra.mxu0 0
    %1692 = vmatprep.subr.bf16.mxu0 0
    %1693 = vmatpush2.bf16.msra.mxu0 0
    %1694 = vmatprep.mubr.bf16.mxu0 0
    %1695 = vmatmul.mubr.bf16.gmra.mxu0 %v1657
    %v1696 = vpop.f32.mrf.mxu0
    %v1697 = vadd.f32 0.0, %v1696
    %v1698 = vpop.f32.mrf.mxu0
    %v1699 = vpop.f32.mrf.mxu0
    %v1700 = vpop.f32.mrf.mxu0
    %1701 = vdwg.mxu0
    %1703 = vrot.lane.b32.xlu0 %v1697, 8
    %v1704 = vpop.permute.xlu0 %1703
    %1706 = vst.msk [vmem:[%s1487] sm:$0xff] %vm797, %v1704
    %1707 = vrot.lane.b32.xlu0 %v1280, 112
    %v1708 = vpop.permute.xlu0 %1707
    %v1710 = vsel %vm370, %v1708, 0
    %1712 = vmatprep.subr.bf16.mxu0 0
    %1713 = vmatpush1.bf16.msra.mxu0 0
    %1714 = vmatprep.subr.bf16.mxu0 0
    %1715 = vmatpush1.bf16.msra.mxu0 0
    %1716 = vmatprep.subr.bf16.mxu0 0
    %1717 = vmatpush1.bf16.msra.mxu0 0
    %1718 = vmatprep.subr.bf16.mxu0 0
    %1719 = vmatpush1.bf16.msra.mxu0 0
    %1720 = vmatprep.subr.bf16.mxu0 0
    %1721 = vmatpush1.bf16.msra.mxu0 0
    %1722 = vmatprep.subr.bf16.mxu0 0
    %1723 = vmatpush1.bf16.msra.mxu0 0
    %1724 = vmatprep.subr.bf16.mxu0 0
    %1725 = vmatpush1.bf16.msra.mxu0 0
    %1726 = vmatprep.subr.bf16.mxu0 0
    %1727 = vmatpush1.bf16.msra.mxu0 %v376
    %1728 = vmatprep.subr.bf16.mxu0 0
    %1729 = vmatpush2.bf16.msra.mxu0 0
    %1730 = vmatprep.subr.bf16.mxu0 0
    %1731 = vmatpush2.bf16.msra.mxu0 0
    %1732 = vmatprep.subr.bf16.mxu0 0
    %1733 = vmatpush2.bf16.msra.mxu0 0
    %1734 = vmatprep.subr.bf16.mxu0 0
    %1735 = vmatpush2.bf16.msra.mxu0 0
    %1736 = vmatprep.subr.bf16.mxu0 0
    %1737 = vmatpush2.bf16.msra.mxu0 0
    %1738 = vmatprep.subr.bf16.mxu0 0
    %1739 = vmatpush2.bf16.msra.mxu0 0
    %1740 = vmatprep.subr.bf16.mxu0 0
    %1741 = vmatpush2.bf16.msra.mxu0 0
    %1742 = vmatprep.subr.bf16.mxu0 0
    %1743 = vmatpush2.bf16.msra.mxu0 0
    %1744 = vmatprep.mubr.bf16.mxu0 0
    %1745 = vmatmul.mubr.bf16.gmra.mxu0 %v1710
    %v1746 = vpop.f32.mrf.mxu0
    %v1747 = vadd.f32 0.0, %v1746
    %v1748 = vpop.f32.mrf.mxu0
    %v1749 = vpop.f32.mrf.mxu0
    %v1750 = vpop.f32.mrf.mxu0
    %1751 = vdwg.mxu0
    %1753 = vset.pattern.permute.xlu0 0
    %1754 = vperm.xlu0 %1753, %v1747
    %v1755 = vpop.permute.xlu0 %1754
    %v1757 = vsel %vm1270, %v1755, 0.0
    %1758 = vset.pattern.permute.xlu0 1
    %1759 = vperm.xlu0 %1758, %v1747
    %v1760 = vpop.permute.xlu0 %1759
    %v1762 = vsel %vm1271, %v1760, 0.0
    %v1763 = vadd.f32 %v1757, %v1762
    %1764 = vset.pattern.permute.xlu0 2
    %1765 = vperm.xlu0 %1764, %v1747
    %v1766 = vpop.permute.xlu0 %1765
    %v1768 = vsel %vm1272, %v1766, 0.0
    %v1769 = vadd.f32 %v1763, %v1768
    %1770 = vset.pattern.permute.xlu0 3
    %1771 = vperm.xlu0 %1770, %v1747
    %v1772 = vpop.permute.xlu0 %1771
    %v1774 = vsel %vm1273, %v1772, 0.0
    %v1775 = vadd.f32 %v1769, %v1774
    %1776 = vset.pattern.permute.xlu0 4
    %1777 = vperm.xlu0 %1776, %v1747
    %v1778 = vpop.permute.xlu0 %1777
    %v1780 = vsel %vm1274, %v1778, 0.0
    %v1781 = vadd.f32 %v1775, %v1780
    %1782 = vset.pattern.permute.xlu0 5
    %1783 = vperm.xlu0 %1782, %v1747
    %v1784 = vpop.permute.xlu0 %1783
    %v1786 = vsel %vm1275, %v1784, 0.0
    %v1787 = vadd.f32 %v1781, %v1786
    %1788 = vset.pattern.permute.xlu0 6
    %1789 = vperm.xlu0 %1788, %v1747
    %v1790 = vpop.permute.xlu0 %1789
    %v1792 = vsel %vm1276, %v1790, 0.0
    %v1793 = vadd.f32 %v1787, %v1792
    %1794 = vset.pattern.permute.xlu0 7
    %1795 = vperm.xlu0 %1794, %v1747
    %v1796 = vpop.permute.xlu0 %1795
    %v1798 = vsel %vm1277, %v1796, 0.0
    %v1799 = vadd.f32 %v1793, %v1798
    %1800 = vset.pattern.permute.xlu0 8
    %1801 = vperm.xlu0 %1800, %v1747
    %v1802 = vpop.permute.xlu0 %1801
    %v1804 = vsel %vm1278, %v1802, 0.0
    %v1805 = vadd.f32 %v1799, %v1804
    %1806 = vset.pattern.permute.xlu0 9
    %1807 = vperm.xlu0 %1806, %v1747
    %v1808 = vpop.permute.xlu0 %1807
    %v1810 = vsel %vm1279, %v1808, 0.0
    %v1811 = vadd.f32 %v1805, %v1810
    %1812 = vrot.lane.b32.xlu0 %v1281, 112
    %v1813 = vpop.permute.xlu0 %1812
    %v1815 = vsel %vm370, %v1813, 0
    %1817 = vmatprep.subr.bf16.mxu0 0
    %1818 = vmatpush1.bf16.xpose.msra.mxu0 0
    %1819 = vmatprep.subr.bf16.mxu0 0
    %1820 = vmatpush1.bf16.xpose.msra.mxu0 0
    %1821 = vmatprep.subr.bf16.mxu0 0
    %1822 = vmatpush1.bf16.xpose.msra.mxu0 0
    %1823 = vmatprep.subr.bf16.mxu0 0
    %1824 = vmatpush1.bf16.xpose.msra.mxu0 0
    %1825 = vmatprep.subr.bf16.mxu0 0
    %1826 = vmatpush1.bf16.xpose.msra.mxu0 0
    %1827 = vmatprep.subr.bf16.mxu0 0
    %1828 = vmatpush1.bf16.xpose.msra.mxu0 0
    %1829 = vmatprep.subr.bf16.mxu0 0
    %1830 = vmatpush1.bf16.xpose.msra.mxu0 0
    %1831 = vmatprep.subr.bf16.mxu0 0
    %1832 = vmatpush1.bf16.xpose.msra.mxu0 %v1815
    %1833 = vmatprep.subr.bf16.mxu0 0
    %1834 = vmatpush2.bf16.xpose.msra.mxu0 0
    %1835 = vmatprep.subr.bf16.mxu0 0
    %1836 = vmatpush2.bf16.xpose.msra.mxu0 0
    %1837 = vmatprep.subr.bf16.mxu0 0
    %1838 = vmatpush2.bf16.xpose.msra.mxu0 0
    %1839 = vmatprep.subr.bf16.mxu0 0
    %1840 = vmatpush2.bf16.xpose.msra.mxu0 0
    %1841 = vmatprep.subr.bf16.mxu0 0
    %1842 = vmatpush2.bf16.xpose.msra.mxu0 0
    %1843 = vmatprep.subr.bf16.mxu0 0
    %1844 = vmatpush2.bf16.xpose.msra.mxu0 0
    %1845 = vmatprep.subr.bf16.mxu0 0
    %1846 = vmatpush2.bf16.xpose.msra.mxu0 0
    %1847 = vmatprep.subr.bf16.mxu0 0
    %1848 = vmatpush2.bf16.xpose.msra.mxu0 0
    %1849 = vmatprep.mubr.bf16.mxu0 0
    %1850 = vmatmul.mubr.bf16.gmra.mxu0 %v1710
    %v1851 = vpop.f32.mrf.mxu0
    %v1852 = vadd.f32 %v1811, %v1851
    %v1853 = vpop.f32.mrf.mxu0
    %v1854 = vpop.f32.mrf.mxu0
    %v1855 = vpop.f32.mrf.mxu0
    %1856 = vdwg.mxu0
    %v1857 = vsel %vm370, %v1852, -inf
    %1858 = vmax.xlane.f32.xlu0 %v1857
    %v1859 = vpop.xlane.xlu0 %1858
    %v1860 = vsub.f32 %v1852, %v1859
    %v1861 = vmul.f32 %v1860, 1.442695
    %v1862 = vpow.pop %v1861
    %v1863 = vsel %vm370, %v1862, 0.0
    %1864 = vadd.xlane.f32.xlu0 %v1863
    %v1865 = vpop.xlane.xlu0 %1864
    %v1866 = vrcp.pop %v1865
    %v1867 = vmul.f32 %v1862, %v1866
    %v1868 = vpack.c.bf16 %v1867, %v1867
    %1869 = vrot.lane.b32.xlu0 %v1282, 112
    %v1870 = vpop.permute.xlu0 %1869
    %v1872 = vsel %vm370, %v1868, 0
    %v1875 = vsel %vm374, %v1870, 0
    %1877 = vmatprep.subr.bf16.mxu0 0
    %1878 = vmatpush1.bf16.msra.mxu0 0
    %1879 = vmatprep.subr.bf16.mxu0 0
    %1880 = vmatpush1.bf16.msra.mxu0 0
    %1881 = vmatprep.subr.bf16.mxu0 0
    %1882 = vmatpush1.bf16.msra.mxu0 0
    %1883 = vmatprep.subr.bf16.mxu0 0
    %1884 = vmatpush1.bf16.msra.mxu0 0
    %1885 = vmatprep.subr.bf16.mxu0 0
    %1886 = vmatpush1.bf16.msra.mxu0 0
    %1887 = vmatprep.subr.bf16.mxu0 0
    %1888 = vmatpush1.bf16.msra.mxu0 0
    %1889 = vmatprep.subr.bf16.mxu0 0
    %1890 = vmatpush1.bf16.msra.mxu0 0
    %1891 = vmatprep.subr.bf16.mxu0 0
    %1892 = vmatpush1.bf16.msra.mxu0 %v1875
    %1893 = vmatprep.subr.bf16.mxu0 0
    %1894 = vmatpush2.bf16.msra.mxu0 0
    %1895 = vmatprep.subr.bf16.mxu0 0
    %1896 = vmatpush2.bf16.msra.mxu0 0
    %1897 = vmatprep.subr.bf16.mxu0 0
    %1898 = vmatpush2.bf16.msra.mxu0 0
    %1899 = vmatprep.subr.bf16.mxu0 0
    %1900 = vmatpush2.bf16.msra.mxu0 0
    %1901 = vmatprep.subr.bf16.mxu0 0
    %1902 = vmatpush2.bf16.msra.mxu0 0
    %1903 = vmatprep.subr.bf16.mxu0 0
    %1904 = vmatpush2.bf16.msra.mxu0 0
    %1905 = vmatprep.subr.bf16.mxu0 0
    %1906 = vmatpush2.bf16.msra.mxu0 0
    %1907 = vmatprep.subr.bf16.mxu0 0
    %1908 = vmatpush2.bf16.msra.mxu0 0
    %1909 = vmatprep.mubr.bf16.mxu0 0
    %1910 = vmatmul.mubr.bf16.gmra.mxu0 %v1872
    %v1911 = vpop.f32.mrf.mxu0
    %v1912 = vadd.f32 0.0, %v1911
    %v1913 = vpop.f32.mrf.mxu0
    %v1914 = vpop.f32.mrf.mxu0
    %v1915 = vpop.f32.mrf.mxu0
    %1916 = vdwg.mxu0
    %1918 = vrot.lane.b32.xlu0 %v1912, 16
    %v1919 = vpop.permute.xlu0 %1918
    %1921 = vst.msk [vmem:[%s1487] sm:$0xff] %vm1013, %v1919
    %1922 = vrot.lane.b32.xlu0 %v1280, 104
    %v1923 = vpop.permute.xlu0 %1922
    %v1925 = vsel %vm370, %v1923, 0
    %1927 = vmatprep.subr.bf16.mxu0 0
    %1928 = vmatpush1.bf16.msra.mxu0 0
    %1929 = vmatprep.subr.bf16.mxu0 0
    %1930 = vmatpush1.bf16.msra.mxu0 0
    %1931 = vmatprep.subr.bf16.mxu0 0
    %1932 = vmatpush1.bf16.msra.mxu0 0
    %1933 = vmatprep.subr.bf16.mxu0 0
    %1934 = vmatpush1.bf16.msra.mxu0 0
    %1935 = vmatprep.subr.bf16.mxu0 0
    %1936 = vmatpush1.bf16.msra.mxu0 0
    %1937 = vmatprep.subr.bf16.mxu0 0
    %1938 = vmatpush1.bf16.msra.mxu0 0
    %1939 = vmatprep.subr.bf16.mxu0 0
    %1940 = vmatpush1.bf16.msra.mxu0 0
    %1941 = vmatprep.subr.bf16.mxu0 0
    %1942 = vmatpush1.bf16.msra.mxu0 %v376
    %1943 = vmatprep.subr.bf16.mxu0 0
    %1944 = vmatpush2.bf16.msra.mxu0 0
    %1945 = vmatprep.subr.bf16.mxu0 0
    %1946 = vmatpush2.bf16.msra.mxu0 0
    %1947 = vmatprep.subr.bf16.mxu0 0
    %1948 = vmatpush2.bf16.msra.mxu0 0
    %1949 = vmatprep.subr.bf16.mxu0 0
    %1950 = vmatpush2.bf16.msra.mxu0 0
    %1951 = vmatprep.subr.bf16.mxu0 0
    %1952 = vmatpush2.bf16.msra.mxu0 0
    %1953 = vmatprep.subr.bf16.mxu0 0
    %1954 = vmatpush2.bf16.msra.mxu0 0
    %1955 = vmatprep.subr.bf16.mxu0 0
    %1956 = vmatpush2.bf16.msra.mxu0 0
    %1957 = vmatprep.subr.bf16.mxu0 0
    %1958 = vmatpush2.bf16.msra.mxu0 0
    %1959 = vmatprep.mubr.bf16.mxu0 0
    %1960 = vmatmul.mubr.bf16.gmra.mxu0 %v1925
    %v1961 = vpop.f32.mrf.mxu0
    %v1962 = vadd.f32 0.0, %v1961
    %v1963 = vpop.f32.mrf.mxu0
    %v1964 = vpop.f32.mrf.mxu0
    %v1965 = vpop.f32.mrf.mxu0
    %1966 = vdwg.mxu0
    %1968 = vset.pattern.permute.xlu0 0
    %1969 = vperm.xlu0 %1968, %v1962
    %v1970 = vpop.permute.xlu0 %1969
    %v1972 = vsel %vm1270, %v1970, 0.0
    %1973 = vset.pattern.permute.xlu0 1
    %1974 = vperm.xlu0 %1973, %v1962
    %v1975 = vpop.permute.xlu0 %1974
    %v1977 = vsel %vm1271, %v1975, 0.0
    %v1978 = vadd.f32 %v1972, %v1977
    %1979 = vset.pattern.permute.xlu0 2
    %1980 = vperm.xlu0 %1979, %v1962
    %v1981 = vpop.permute.xlu0 %1980
    %v1983 = vsel %vm1272, %v1981, 0.0
    %v1984 = vadd.f32 %v1978, %v1983
    %1985 = vset.pattern.permute.xlu0 3
    %1986 = vperm.xlu0 %1985, %v1962
    %v1987 = vpop.permute.xlu0 %1986
    %v1989 = vsel %vm1273, %v1987, 0.0
    %v1990 = vadd.f32 %v1984, %v1989
    %1991 = vset.pattern.permute.xlu0 4
    %1992 = vperm.xlu0 %1991, %v1962
    %v1993 = vpop.permute.xlu0 %1992
    %v1995 = vsel %vm1274, %v1993, 0.0
    %v1996 = vadd.f32 %v1990, %v1995
    %1997 = vset.pattern.permute.xlu0 5
    %1998 = vperm.xlu0 %1997, %v1962
    %v1999 = vpop.permute.xlu0 %1998
    %v2001 = vsel %vm1275, %v1999, 0.0
    %v2002 = vadd.f32 %v1996, %v2001
    %2003 = vset.pattern.permute.xlu0 6
    %2004 = vperm.xlu0 %2003, %v1962
    %v2005 = vpop.permute.xlu0 %2004
    %v2007 = vsel %vm1276, %v2005, 0.0
    %v2008 = vadd.f32 %v2002, %v2007
    %2009 = vset.pattern.permute.xlu0 7
    %2010 = vperm.xlu0 %2009, %v1962
    %v2011 = vpop.permute.xlu0 %2010
    %v2013 = vsel %vm1277, %v2011, 0.0
    %v2014 = vadd.f32 %v2008, %v2013
    %2015 = vset.pattern.permute.xlu0 8
    %2016 = vperm.xlu0 %2015, %v1962
    %v2017 = vpop.permute.xlu0 %2016
    %v2019 = vsel %vm1278, %v2017, 0.0
    %v2020 = vadd.f32 %v2014, %v2019
    %2021 = vset.pattern.permute.xlu0 9
    %2022 = vperm.xlu0 %2021, %v1962
    %v2023 = vpop.permute.xlu0 %2022
    %v2025 = vsel %vm1279, %v2023, 0.0
    %v2026 = vadd.f32 %v2020, %v2025
    %2027 = vrot.lane.b32.xlu0 %v1281, 104
    %v2028 = vpop.permute.xlu0 %2027
    %v2030 = vsel %vm370, %v2028, 0
    %2032 = vmatprep.subr.bf16.mxu0 0
    %2033 = vmatpush1.bf16.xpose.msra.mxu0 0
    %2034 = vmatprep.subr.bf16.mxu0 0
    %2035 = vmatpush1.bf16.xpose.msra.mxu0 0
    %2036 = vmatprep.subr.bf16.mxu0 0
    %2037 = vmatpush1.bf16.xpose.msra.mxu0 0
    %2038 = vmatprep.subr.bf16.mxu0 0
    %2039 = vmatpush1.bf16.xpose.msra.mxu0 0
    %2040 = vmatprep.subr.bf16.mxu0 0
    %2041 = vmatpush1.bf16.xpose.msra.mxu0 0
    %2042 = vmatprep.subr.bf16.mxu0 0
    %2043 = vmatpush1.bf16.xpose.msra.mxu0 0
    %2044 = vmatprep.subr.bf16.mxu0 0
    %2045 = vmatpush1.bf16.xpose.msra.mxu0 0
    %2046 = vmatprep.subr.bf16.mxu0 0
    %2047 = vmatpush1.bf16.xpose.msra.mxu0 %v2030
    %2048 = vmatprep.subr.bf16.mxu0 0
    %2049 = vmatpush2.bf16.xpose.msra.mxu0 0
    %2050 = vmatprep.subr.bf16.mxu0 0
    %2051 = vmatpush2.bf16.xpose.msra.mxu0 0
    %2052 = vmatprep.subr.bf16.mxu0 0
    %2053 = vmatpush2.bf16.xpose.msra.mxu0 0
    %2054 = vmatprep.subr.bf16.mxu0 0
    %2055 = vmatpush2.bf16.xpose.msra.mxu0 0
    %2056 = vmatprep.subr.bf16.mxu0 0
    %2057 = vmatpush2.bf16.xpose.msra.mxu0 0
    %2058 = vmatprep.subr.bf16.mxu0 0
    %2059 = vmatpush2.bf16.xpose.msra.mxu0 0
    %2060 = vmatprep.subr.bf16.mxu0 0
    %2061 = vmatpush2.bf16.xpose.msra.mxu0 0
    %2062 = vmatprep.subr.bf16.mxu0 0
    %2063 = vmatpush2.bf16.xpose.msra.mxu0 0
    %2064 = vmatprep.mubr.bf16.mxu0 0
    %2065 = vmatmul.mubr.bf16.gmra.mxu0 %v1925
    %v2066 = vpop.f32.mrf.mxu0
    %v2067 = vadd.f32 %v2026, %v2066
    %v2068 = vpop.f32.mrf.mxu0
    %v2069 = vpop.f32.mrf.mxu0
    %v2070 = vpop.f32.mrf.mxu0
    %2071 = vdwg.mxu0
    %v2072 = vsel %vm370, %v2067, -inf
    %2073 = vmax.xlane.f32.xlu0 %v2072
    %v2074 = vpop.xlane.xlu0 %2073
    %v2075 = vsub.f32 %v2067, %v2074
    %v2076 = vmul.f32 %v2075, 1.442695
    %v2077 = vpow.pop %v2076
    %v2078 = vsel %vm370, %v2077, 0.0
    %2079 = vadd.xlane.f32.xlu0 %v2078
    %v2080 = vpop.xlane.xlu0 %2079
    %v2081 = vrcp.pop %v2080
    %v2082 = vmul.f32 %v2077, %v2081
    %v2083 = vpack.c.bf16 %v2082, %v2082
    %2084 = vrot.lane.b32.xlu0 %v1282, 104
    %v2085 = vpop.permute.xlu0 %2084
    %v2087 = vsel %vm370, %v2083, 0
    %v2090 = vsel %vm374, %v2085, 0
    %2092 = vmatprep.subr.bf16.mxu0 0
    %2093 = vmatpush1.bf16.msra.mxu0 0
    %2094 = vmatprep.subr.bf16.mxu0 0
    %2095 = vmatpush1.bf16.msra.mxu0 0
    %2096 = vmatprep.subr.bf16.mxu0 0
    %2097 = vmatpush1.bf16.msra.mxu0 0
    %2098 = vmatprep.subr.bf16.mxu0 0
    %2099 = vmatpush1.bf16.msra.mxu0 0
    %2100 = vmatprep.subr.bf16.mxu0 0
    %2101 = vmatpush1.bf16.msra.mxu0 0
    %2102 = vmatprep.subr.bf16.mxu0 0
    %2103 = vmatpush1.bf16.msra.mxu0 0
    %2104 = vmatprep.subr.bf16.mxu0 0
    %2105 = vmatpush1.bf16.msra.mxu0 0
    %2106 = vmatprep.subr.bf16.mxu0 0
    %2107 = vmatpush1.bf16.msra.mxu0 %v2090
    %2108 = vmatprep.subr.bf16.mxu0 0
    %2109 = vmatpush2.bf16.msra.mxu0 0
    %2110 = vmatprep.subr.bf16.mxu0 0
    %2111 = vmatpush2.bf16.msra.mxu0 0
    %2112 = vmatprep.subr.bf16.mxu0 0
    %2113 = vmatpush2.bf16.msra.mxu0 0
    %2114 = vmatprep.subr.bf16.mxu0 0
    %2115 = vmatpush2.bf16.msra.mxu0 0
    %2116 = vmatprep.subr.bf16.mxu0 0
    %2117 = vmatpush2.bf16.msra.mxu0 0
    %2118 = vmatprep.subr.bf16.mxu0 0
    %2119 = vmatpush2.bf16.msra.mxu0 0
    %2120 = vmatprep.subr.bf16.mxu0 0
    %2121 = vmatpush2.bf16.msra.mxu0 0
    %2122 = vmatprep.subr.bf16.mxu0 0
    %2123 = vmatpush2.bf16.msra.mxu0 0
    %2124 = vmatprep.mubr.bf16.mxu0 0
    %2125 = vmatmul.mubr.bf16.gmra.mxu0 %v2087
    %v2126 = vpop.f32.mrf.mxu0
    %v2127 = vadd.f32 0.0, %v2126
    %v2128 = vpop.f32.mrf.mxu0
    %v2129 = vpop.f32.mrf.mxu0
    %v2130 = vpop.f32.mrf.mxu0
    %2131 = vdwg.mxu0
    %2133 = vrot.lane.b32.xlu0 %v2127, 24
    %v2134 = vpop.permute.xlu0 %2133
    %2136 = vst.msk [vmem:[%s1487] sm:$0xff] %vm1229, %v2134
    // Predicated region
    $region78: #{tpu_custom_call.1} parent=1 // pred_check
      _
    $region79: #{tpu_custom_call.1} parent=1 // pred_check_branch
      %2138 = sbr.rel (0) target = $region81
    $region80: #{tpu_custom_call.1} parent=1 // pred_region
      %s2140 = ssub.s32 256, 256
      %2141 = vsyncadd [#allocation4], %s2140
      %s2142 = sshll.u32 [#allocation14], 4
      %s2143 = int_to_ptr.vmem [resolvable:$true] %s2142
      %2148 = dma.vmem_to_hbm [thread:$0]  %s2143, 256, %s12, [#allocation4], 128, 128, 8
    $region81: #{tpu_custom_call.1} parent=1 // pred_fallthru
      _
    // Predicated region
    $region82: #{tpu_custom_call.1} parent=1 // pred_check
      _
    $region83: #{tpu_custom_call.1} parent=1 // pred_check_branch
      %2150 = sbr.rel (0) target = $region85
    $region84: #{tpu_custom_call.1} parent=1 // pred_region
      %2151 = dma.done [#allocation4], 256
    $region85: #{tpu_custom_call.1} parent=1 // pred_fallthru
      _
    %2152 = vsyncpa [#allocation3], 1
    %2153 = vsyncpa [#allocation6], 1
    %2154 = vsyncpa [#allocation9], 1
    %2155 = vsyncpa [#allocation12], 1
    %2156 = vsyncpa [#allocation4], 1

</llo_original>
